<compile_context>
chip_gen: v7x
topology: tpu7x:2x2x1
jax: 0.10.0
libtpu: 0.0.40
codegen_flags: <defaults>
</compile_context>

<pallas_src>
import jax
import jax.numpy as jnp
from jax.experimental import pallas as pl
from jax.experimental.pallas import tpu as pltpu

# ------------------------- static configuration -----------------------------
B = 2                 # batch
N = 128               # num_points (small, lane aligned)
L = B * N             # batch folded into lanes -> 256 lanes
NUM_CLASSES = 40
UP_RATIO = 4
C_FEAT = 259          # 64 (up_l4) + 64 (up_l3) + 64 (up_l2) + 64 (l1) + 3 (xyz)
C_FEAT_PAD = 264      # pad input channels to a multiple of 8 (sublane tiling)
C_MID1 = 256
C_MID2 = 128
C_NET = UP_RATIO * C_MID2 + NUM_CLASSES   # 552 (= consistent "in_channel1")
C_HID = 64
C_COORD = 3
C_COORD_PAD = 8       # pad coord channels to 8 sublanes, sliced off outside
BN_EPS = 1e-5


# ------------------------------ Pallas kernel --------------------------------
def generator_mlp_kernel(feat_ref, w1_ref, b1_ref, w2_ref, b2_ref,
                         w3_ref, bias3_ref, w4_ref, b4_ref, out_ref):
    """Single grid step over the whole (batch-folded) problem.

    feat_ref  : [C_FEAT_PAD, L] bf16   concat features, batch folded into lanes
    w1_ref    : [UP_RATIO*256, C_FEAT_PAD] bf16   four first-layer convs merged
    b1_ref    : [UP_RATIO*256, 1] f32             (BN folded)
    w2_ref    : [UP_RATIO, 128, 256] bf16 / b2_ref [UP_RATIO, 128, 1] f32
    w3_ref    : [UP_RATIO, 64, 128] bf16          w3 feature block, per branch
    bias3_ref : [64, L] f32            b3 + w3_label @ one-hot (per-lane bias)
    w4_ref    : [C_COORD_PAD, 64] bf16 / b4_ref [C_COORD_PAD, 1] f32
    out_ref   : [C_COORD_PAD, L] f32
    """
    # --- merged first layer: relu(bn(conv 259->256)) for all four branches ---
    h1 = jnp.dot(w1_ref[...], feat_ref[...],
                 preferred_element_type=jnp.float32)            # [1024, L] f32
    h1 = jnp.maximum(h1 + b1_ref[...], 0.0).astype(jnp.bfloat16)

    # --- per-branch second layer fused with its slice of w3 ------------------
    acc = bias3_ref[...]                                        # [64, L] f32
    for i in range(UP_RATIO):                                   # static unroll
        h1_i = h1[i * C_MID1:(i + 1) * C_MID1, :]               # [256, L] bf16
        h2 = jnp.dot(w2_ref[i], h1_i,
                     preferred_element_type=jnp.float32)        # [128, L]
        h2 = jnp.maximum(h2 + b2_ref[i], 0.0).astype(jnp.bfloat16)
        acc = acc + jnp.dot(w3_ref[i], h2,
                            preferred_element_type=jnp.float32)

    # --- head: relu(bn(conv 552->64)) then relu(bn(conv 64->3)) --------------
    c = jnp.maximum(acc, 0.0).astype(jnp.bfloat16)              # [64, L]
    c = jnp.dot(w4_ref[...], c, preferred_element_type=jnp.float32)
    out_ref[...] = jnp.maximum(c + b4_ref[...], 0.0)


def run_generator(concat_feat, labels_onehot, packed):
    """concat_feat: [B, C_FEAT, N] f32, labels_onehot: [B, NUM_CLASSES] f32."""
    (w1m, b1m, w2p, b2p, w3_feat, w3_label, b3, w4p, b4p) = packed

    # Pad input channels and fold batch into the lane axis: [C_FEAT_PAD, B*N].
    feat_pad = jnp.pad(concat_feat,
                       ((0, 0), (0, C_FEAT_PAD - C_FEAT), (0, 0)))
    feat_lanes = jnp.transpose(feat_pad, (1, 0, 2)).reshape(
        C_FEAT_PAD, L).astype(jnp.bfloat16)

    # One-hot label matmul is a column select -> fold into a per-lane f32 bias.
    label_bias = w3_label @ labels_onehot.T + b3[:, None]        # [64, B]
    bias3_lanes = jnp.repeat(label_bias, N, axis=1)              # [64, B*N]

    out = pl.pallas_call(
        generator_mlp_kernel,
        out_shape=jax.ShapeDtypeStruct((C_COORD_PAD, L), jnp.float32),
        grid=(1,),
        in_specs=[
            pl.BlockSpec((C_FEAT_PAD, L), lambda i: (0, 0)),
            pl.BlockSpec((UP_RATIO * C_MID1, C_FEAT_PAD), lambda i: (0, 0)),
            pl.BlockSpec((UP_RATIO * C_MID1, 1), lambda i: (0, 0)),
            pl.BlockSpec((UP_RATIO, C_MID2, C_MID1), lambda i: (0, 0, 0)),
            pl.BlockSpec((UP_RATIO, C_MID2, 1), lambda i: (0, 0, 0)),
            pl.BlockSpec((UP_RATIO, C_HID, C_MID2), lambda i: (0, 0, 0)),
            pl.BlockSpec((C_HID, L), lambda i: (0, 0)),
            pl.BlockSpec((C_COORD_PAD, C_HID), lambda i: (0, 0)),
            pl.BlockSpec((C_COORD_PAD, 1), lambda i: (0, 0)),
        ],
        out_specs=pl.BlockSpec((C_COORD_PAD, L), lambda i: (0, 0)),
        compiler_params=pltpu.CompilerParams(
            dimension_semantics=("arbitrary",)),
    )(feat_lanes, w1m, b1m, w2p, b2p, w3_feat, bias3_lanes, w4p, b4p)

    # Unfold lanes back to [B, C, N] and drop the padded coord rows.
    out = out.reshape(C_COORD_PAD, B, N).transpose(1, 0, 2)
    return out[:, :C_COORD, :]                                  # [B, 3, N]


# --------------------- parameter construction (glue) -------------------------
def _fold_bn(w, b, gamma, beta, mean, var):
    """Fold BatchNorm (inference mode) into the preceding 1x1 conv."""
    s = gamma / jnp.sqrt(var + BN_EPS)
    return s[:, None] * w, s * (b - mean) + beta


def make_params(key):
    """Raw (f32, BN-folded) module parameters."""
    def conv_bn(key, c_out, c_in):
        ks = jax.random.split(key, 6)
        w = 0.1 * jax.random.normal(ks[0], (c_out, c_in), jnp.float32)
        b = 0.1 * jax.random.normal(ks[1], (c_out,), jnp.float32)
        gamma = jax.random.uniform(ks[2], (c_out,), jnp.float32, 0.5, 1.5)
        beta = 0.1 * jax.random.normal(ks[3], (c_out,), jnp.float32)
        mean = 0.1 * jax.random.normal(ks[4], (c_out,), jnp.float32)
        var = jax.random.uniform(ks[5], (c_out,), jnp.float32, 0.5, 1.5)
        return _fold_bn(w, b, gamma, beta, mean, var)

    keys = jax.random.split(key, 2 * UP_RATIO + 2)
    w1s, b1s, w2s, b2s = [], [], [], []
    for i in range(UP_RATIO):
        wf, bf = conv_bn(keys[2 * i], C_MID1, C_FEAT)       # mlp_convs[2i] 259->256
        w1s.append(wf); b1s.append(bf)
        wg, bg = conv_bn(keys[2 * i + 1], C_MID2, C_MID1)   # mlp_convs[2i+1] 256->128
        w2s.append(wg); b2s.append(bg)
    w1 = jnp.stack(w1s); b1 = jnp.stack(b1s)                # [4,256,259], [4,256]
    w2 = jnp.stack(w2s); b2 = jnp.stack(b2s)                # [4,128,256], [4,128]
    w3, b3 = conv_bn(keys[-2], C_HID, C_NET)                # mlp_convs1[0] 552->64
    w4, b4 = conv_bn(keys[-1], C_COORD, C_HID)              # mlp_convs1[1] 64->3
    return w1, b1, w2, b2, w3, b3, w4, b4


def pack_params(raw):
    """Repack raw params into the kernel layout (merge / split / pad / bf16)."""
    w1, b1, w2, b2, w3, b3, w4, b4 = raw
    # Merge the four first-layer convs, pad input channels to 264.
    w1m = jnp.pad(w1, ((0, 0), (0, 0), (0, C_FEAT_PAD - C_FEAT)))
    w1m = w1m.reshape(UP_RATIO * C_MID1, C_FEAT_PAD).astype(jnp.bfloat16)
    b1m = b1.reshape(UP_RATIO * C_MID1, 1)
    w2p = w2.astype(jnp.bfloat16)
    b2p = b2[:, :, None]
    # Split w3 column-wise: per-branch feature blocks + label block.
    w3_feat = w3[:, :UP_RATIO * C_MID2].reshape(C_HID, UP_RATIO, C_MID2)
    w3_feat = jnp.transpose(w3_feat, (1, 0, 2)).astype(jnp.bfloat16)  # [4,64,128]
    w3_label = w3[:, UP_RATIO * C_MID2:]                              # [64,40] f32
    # Pad coord rows to 8 sublanes.
    w4p = jnp.pad(w4, ((0, C_COORD_PAD - C_COORD), (0, 0))).astype(jnp.bfloat16)
    b4p = jnp.pad(b4, ((0, C_COORD_PAD - C_COORD),))[:, None]
    return w1m, b1m, w2p, b2p, w3_feat, w3_label, b3, w4p, b4p


# ----------------------------- pure-JAX reference ----------------------------
def reference(concat_feat, labels_onehot, raw):
    """Original (unfused) forward structure, same bf16/f32 mixed precision."""
    w1, b1, w2, b2, w3, b3, w4, b4 = raw
    w3_feat = w3[:, :UP_RATIO * C_MID2]
    w3_label = w3[:, UP_RATIO * C_MID2:]
    outs = []
    for bi in range(B):
        x = concat_feat[bi].astype(jnp.bfloat16)                 # [259, N]
        branches = []
        for i in range(UP_RATIO):
            h = jnp.dot(w1[i].astype(jnp.bfloat16), x,
                        preferred_element_type=jnp.float32)
            h = jnp.maximum(h + b1[i][:, None], 0.0).astype(jnp.bfloat16)
            h = jnp.dot(w2[i].astype(jnp.bfloat16), h,
                        preferred_element_type=jnp.float32)
            h = jnp.maximum(h + b2[i][:, None], 0.0).astype(jnp.bfloat16)
            branches.append(h)
        net = jnp.concatenate(branches, axis=0)                  # [512, N]
        lab_bias = w3_label @ labels_onehot[bi] + b3             # one-hot select
        c = jnp.dot(w3_feat.astype(jnp.bfloat16), net,
                    preferred_element_type=jnp.float32)
        c = jnp.maximum(c + lab_bias[:, None], 0.0).astype(jnp.bfloat16)
        c = jnp.dot(w4.astype(jnp.bfloat16), c,
                    preferred_element_type=jnp.float32)
        c = jnp.maximum(c + b4[:, None], 0.0)
        outs.append(c)
    return jnp.stack(outs)                                       # [B, 3, N]


# --------------------------------- main --------------------------------------
if __name__ == "__main__":
    key = jax.random.PRNGKey(0)
    k_xyz, k_l4, k_l3, k_l2, k_l1, k_lab, k_par = jax.random.split(key, 7)

    # Generator inputs.
    xyz = jax.random.normal(k_xyz, (B, 3, N), jnp.float32)
    labels_idx = jax.random.randint(k_lab, (B,), 0, NUM_CLASSES)
    labels_onehot = jax.nn.one_hot(labels_idx, NUM_CLASSES, dtype=jnp.float32)

    # Stand-ins for the undefined SA / FP submodule outputs (see TODO above).
    up_l4_points = jax.random.normal(k_l4, (B, 64, N), jnp.float32)
    up_l3_points = jax.random.normal(k_l3, (B, 64, N), jnp.float32)
    up_l2_points = jax.random.normal(k_l2, (B, 64, N), jnp.float32)
    l1_points = jax.random.normal(k_l1, (B, 64, N), jnp.float32)

    # concat_feat = cat([up_l4, up_l3, up_l2, l1, xyz], dim=1) -> [B, 259, N]
    concat_feat = jnp.concatenate(
        [up_l4_points, up_l3_points, up_l2_points, l1_points, xyz], axis=1)

    raw_params = make_params(k_par)
    packed = pack_params(raw_params)

    coord = run_generator(concat_feat, labels_onehot, packed)    # [B, 3, N]
    coord = jax.block_until_ready(coord)

    ref = reference(concat_feat, labels_onehot, raw_params)
    assert coord.shape == (B, C_COORD, N)
    assert jnp.allclose(coord, ref, rtol=1e-2, atol=1e-2), "mismatch vs reference"

    print("KERNEL_OK")
</pallas_src>

<mosaic_0001>
module attributes {stable_mosaic.version = 11 : i64} {
  func.func @generator_mlp_kernel(%arg0: i32, %arg1: memref<264x256xbf16, #tpu.memory_space<vmem>>, %arg2: memref<1024x264xbf16, #tpu.memory_space<vmem>>, %arg3: memref<1024x1xf32, #tpu.memory_space<vmem>>, %arg4: memref<4x128x256xbf16, #tpu.memory_space<vmem>>, %arg5: memref<4x128x1xf32, #tpu.memory_space<vmem>>, %arg6: memref<4x64x128xbf16, #tpu.memory_space<vmem>>, %arg7: memref<64x256xf32, #tpu.memory_space<vmem>>, %arg8: memref<8x64xbf16, #tpu.memory_space<vmem>>, %arg9: memref<8x1xf32, #tpu.memory_space<vmem>>, %arg10: memref<8x256xf32, #tpu.memory_space<vmem>>) attributes {dimension_semantics = [#tpu.dimension_semantics<arbitrary>], iteration_bounds = array<i64: 1>, scalar_prefetch = 0 : i64, scratch_operands = 0 : i64, tpu.core_type = #tpu.core_type<tc>, window_params = [{pipeline_mode = #tpu.pipeline_mode<synchronous>, transform_indices = @transform_0, window_bounds = array<i64: 264, 256>}, {pipeline_mode = #tpu.pipeline_mode<synchronous>, transform_indices = @transform_1, window_bounds = array<i64: 1024, 264>}, {pipeline_mode = #tpu.pipeline_mode<synchronous>, transform_indices = @transform_2, window_bounds = array<i64: 1024, 1>}, {pipeline_mode = #tpu.pipeline_mode<synchronous>, transform_indices = @transform_3, window_bounds = array<i64: 4, 128, 256>}, {pipeline_mode = #tpu.pipeline_mode<synchronous>, transform_indices = @transform_4, window_bounds = array<i64: 4, 128, 1>}, {pipeline_mode = #tpu.pipeline_mode<synchronous>, transform_indices = @transform_5, window_bounds = array<i64: 4, 64, 128>}, {pipeline_mode = #tpu.pipeline_mode<synchronous>, transform_indices = @transform_6, window_bounds = array<i64: 64, 256>}, {pipeline_mode = #tpu.pipeline_mode<synchronous>, transform_indices = @transform_7, window_bounds = array<i64: 8, 64>}, {pipeline_mode = #tpu.pipeline_mode<synchronous>, transform_indices = @transform_8, window_bounds = array<i64: 8, 1>}, {pipeline_mode = #tpu.pipeline_mode<synchronous>, transform_indices = @transform_9, window_bounds = array<i64: 8, 256>}]} {
    %c0 = arith.constant 0 : index
    %c0_0 = arith.constant 0 : index
    %0 = vector.load %arg2[%c0, %c0_0] : memref<1024x264xbf16, #tpu.memory_space<vmem>>, vector<1024x264xbf16>
    %c0_1 = arith.constant 0 : index
    %c0_2 = arith.constant 0 : index
    %1 = vector.load %arg1[%c0_1, %c0_2] : memref<264x256xbf16, #tpu.memory_space<vmem>>, vector<264x256xbf16>
    %cst = arith.constant dense<0.000000e+00> : vector<1024x256xf32>
    %2 = tpu.matmul %0, %1, %cst {dimension_numbers = #tpu.dot_dimension_numbers<[1], [0], [0], [1], [0, 0, 1, 1], [], []>} : vector<1024x264xbf16>, vector<264x256xbf16>, vector<1024x256xf32> -> vector<1024x256xf32>
    %c0_3 = arith.constant 0 : index
    %c0_4 = arith.constant 0 : index
    %3 = vector.load %arg3[%c0_3, %c0_4] : memref<1024x1xf32, #tpu.memory_space<vmem>>, vector<1024x1xf32>
    %4 = vector.broadcast %3 : vector<1024x1xf32> to vector<1024x256xf32>
    %5 = arith.addf %2, %4 : vector<1024x256xf32>
    %cst_5 = arith.constant 0.000000e+00 : f32
    %6 = vector.broadcast %cst_5 : f32 to vector<1024x256xf32>
    %7 = arith.maximumf %5, %6 : vector<1024x256xf32>
    %8 = arith.truncf %7 : vector<1024x256xf32> to vector<1024x256xbf16>
    %c0_6 = arith.constant 0 : index
    %c0_7 = arith.constant 0 : index
    %9 = vector.load %arg7[%c0_6, %c0_7] : memref<64x256xf32, #tpu.memory_space<vmem>>, vector<64x256xf32>
    %10 = vector.extract_strided_slice %8 {offsets = [0, 0], sizes = [256, 256], strides = [1, 1]} : vector<1024x256xbf16> to vector<256x256xbf16>
    %c0_8 = arith.constant 0 : index
    %c0_9 = arith.constant 0 : index
    %c0_10 = arith.constant 0 : index
    %11 = vector.load %arg4[%c0_8, %c0_9, %c0_10] : memref<4x128x256xbf16, #tpu.memory_space<vmem>>, vector<1x128x256xbf16>
    %12 = vector.shape_cast %11 : vector<1x128x256xbf16> to vector<128x256xbf16>
    %cst_11 = arith.constant dense<0.000000e+00> : vector<128x256xf32>
    %13 = tpu.matmul %12, %10, %cst_11 {dimension_numbers = #tpu.dot_dimension_numbers<[1], [0], [0], [1], [0, 0, 1, 1], [], []>} : vector<128x256xbf16>, vector<256x256xbf16>, vector<128x256xf32> -> vector<128x256xf32>
    %c0_12 = arith.constant 0 : index
    %c0_13 = arith.constant 0 : index
    %c0_14 = arith.constant 0 : index
    %14 = vector.load %arg5[%c0_12, %c0_13, %c0_14] : memref<4x128x1xf32, #tpu.memory_space<vmem>>, vector<1x128x1xf32>
    %15 = vector.shape_cast %14 : vector<1x128x1xf32> to vector<128x1xf32>
    %16 = vector.broadcast %15 : vector<128x1xf32> to vector<128x256xf32>
    %17 = arith.addf %13, %16 : vector<128x256xf32>
    %cst_15 = arith.constant 0.000000e+00 : f32
    %18 = vector.broadcast %cst_15 : f32 to vector<128x256xf32>
    %19 = arith.maximumf %17, %18 : vector<128x256xf32>
    %20 = arith.truncf %19 : vector<128x256xf32> to vector<128x256xbf16>
    %c0_16 = arith.constant 0 : index
    %c0_17 = arith.constant 0 : index
    %c0_18 = arith.constant 0 : index
    %21 = vector.load %arg6[%c0_16, %c0_17, %c0_18] : memref<4x64x128xbf16, #tpu.memory_space<vmem>>, vector<1x64x128xbf16>
    %22 = vector.shape_cast %21 : vector<1x64x128xbf16> to vector<64x128xbf16>
    %cst_19 = arith.constant dense<0.000000e+00> : vector<64x256xf32>
    %23 = tpu.matmul %22, %20, %cst_19 {dimension_numbers = #tpu.dot_dimension_numbers<[1], [0], [0], [1], [0, 0, 1, 1], [], []>} : vector<64x128xbf16>, vector<128x256xbf16>, vector<64x256xf32> -> vector<64x256xf32>
    %24 = arith.addf %9, %23 : vector<64x256xf32>
    %25 = vector.extract_strided_slice %8 {offsets = [256, 0], sizes = [256, 256], strides = [1, 1]} : vector<1024x256xbf16> to vector<256x256xbf16>
    %c1 = arith.constant 1 : index
    %c0_20 = arith.constant 0 : index
    %c0_21 = arith.constant 0 : index
    %26 = vector.load %arg4[%c1, %c0_20, %c0_21] : memref<4x128x256xbf16, #tpu.memory_space<vmem>>, vector<1x128x256xbf16>
    %27 = vector.shape_cast %26 : vector<1x128x256xbf16> to vector<128x256xbf16>
    %cst_22 = arith.constant dense<0.000000e+00> : vector<128x256xf32>
    %28 = tpu.matmul %27, %25, %cst_22 {dimension_numbers = #tpu.dot_dimension_numbers<[1], [0], [0], [1], [0, 0, 1, 1], [], []>} : vector<128x256xbf16>, vector<256x256xbf16>, vector<128x256xf32> -> vector<128x256xf32>
    %c1_23 = arith.constant 1 : index
    %c0_24 = arith.constant 0 : index
    %c0_25 = arith.constant 0 : index
    %29 = vector.load %arg5[%c1_23, %c0_24, %c0_25] : memref<4x128x1xf32, #tpu.memory_space<vmem>>, vector<1x128x1xf32>
    %30 = vector.shape_cast %29 : vector<1x128x1xf32> to vector<128x1xf32>
    %31 = vector.broadcast %30 : vector<128x1xf32> to vector<128x256xf32>
    %32 = arith.addf %28, %31 : vector<128x256xf32>
    %cst_26 = arith.constant 0.000000e+00 : f32
    %33 = vector.broadcast %cst_26 : f32 to vector<128x256xf32>
    %34 = arith.maximumf %32, %33 : vector<128x256xf32>
    %35 = arith.truncf %34 : vector<128x256xf32> to vector<128x256xbf16>
    %c1_27 = arith.constant 1 : index
    %c0_28 = arith.constant 0 : index
    %c0_29 = arith.constant 0 : index
    %36 = vector.load %arg6[%c1_27, %c0_28, %c0_29] : memref<4x64x128xbf16, #tpu.memory_space<vmem>>, vector<1x64x128xbf16>
    %37 = vector.shape_cast %36 : vector<1x64x128xbf16> to vector<64x128xbf16>
    %cst_30 = arith.constant dense<0.000000e+00> : vector<64x256xf32>
    %38 = tpu.matmul %37, %35, %cst_30 {dimension_numbers = #tpu.dot_dimension_numbers<[1], [0], [0], [1], [0, 0, 1, 1], [], []>} : vector<64x128xbf16>, vector<128x256xbf16>, vector<64x256xf32> -> vector<64x256xf32>
    %39 = arith.addf %24, %38 : vector<64x256xf32>
    %40 = vector.extract_strided_slice %8 {offsets = [512, 0], sizes = [256, 256], strides = [1, 1]} : vector<1024x256xbf16> to vector<256x256xbf16>
    %c2 = arith.constant 2 : index
    %c0_31 = arith.constant 0 : index
    %c0_32 = arith.constant 0 : index
    %41 = vector.load %arg4[%c2, %c0_31, %c0_32] : memref<4x128x256xbf16, #tpu.memory_space<vmem>>, vector<1x128x256xbf16>
    %42 = vector.shape_cast %41 : vector<1x128x256xbf16> to vector<128x256xbf16>
    %cst_33 = arith.constant dense<0.000000e+00> : vector<128x256xf32>
    %43 = tpu.matmul %42, %40, %cst_33 {dimension_numbers = #tpu.dot_dimension_numbers<[1], [0], [0], [1], [0, 0, 1, 1], [], []>} : vector<128x256xbf16>, vector<256x256xbf16>, vector<128x256xf32> -> vector<128x256xf32>
    %c2_34 = arith.constant 2 : index
    %c0_35 = arith.constant 0 : index
    %c0_36 = arith.constant 0 : index
    %44 = vector.load %arg5[%c2_34, %c0_35, %c0_36] : memref<4x128x1xf32, #tpu.memory_space<vmem>>, vector<1x128x1xf32>
    %45 = vector.shape_cast %44 : vector<1x128x1xf32> to vector<128x1xf32>
    %46 = vector.broadcast %45 : vector<128x1xf32> to vector<128x256xf32>
    %47 = arith.addf %43, %46 : vector<128x256xf32>
    %cst_37 = arith.constant 0.000000e+00 : f32
    %48 = vector.broadcast %cst_37 : f32 to vector<128x256xf32>
    %49 = arith.maximumf %47, %48 : vector<128x256xf32>
    %50 = arith.truncf %49 : vector<128x256xf32> to vector<128x256xbf16>
    %c2_38 = arith.constant 2 : index
    %c0_39 = arith.constant 0 : index
    %c0_40 = arith.constant 0 : index
    %51 = vector.load %arg6[%c2_38, %c0_39, %c0_40] : memref<4x64x128xbf16, #tpu.memory_space<vmem>>, vector<1x64x128xbf16>
    %52 = vector.shape_cast %51 : vector<1x64x128xbf16> to vector<64x128xbf16>
    %cst_41 = arith.constant dense<0.000000e+00> : vector<64x256xf32>
    %53 = tpu.matmul %52, %50, %cst_41 {dimension_numbers = #tpu.dot_dimension_numbers<[1], [0], [0], [1], [0, 0, 1, 1], [], []>} : vector<64x128xbf16>, vector<128x256xbf16>, vector<64x256xf32> -> vector<64x256xf32>
    %54 = arith.addf %39, %53 : vector<64x256xf32>
    %55 = vector.extract_strided_slice %8 {offsets = [768, 0], sizes = [256, 256], strides = [1, 1]} : vector<1024x256xbf16> to vector<256x256xbf16>
    %c3 = arith.constant 3 : index
    %c0_42 = arith.constant 0 : index
    %c0_43 = arith.constant 0 : index
    %56 = vector.load %arg4[%c3, %c0_42, %c0_43] : memref<4x128x256xbf16, #tpu.memory_space<vmem>>, vector<1x128x256xbf16>
    %57 = vector.shape_cast %56 : vector<1x128x256xbf16> to vector<128x256xbf16>
    %cst_44 = arith.constant dense<0.000000e+00> : vector<128x256xf32>
    %58 = tpu.matmul %57, %55, %cst_44 {dimension_numbers = #tpu.dot_dimension_numbers<[1], [0], [0], [1], [0, 0, 1, 1], [], []>} : vector<128x256xbf16>, vector<256x256xbf16>, vector<128x256xf32> -> vector<128x256xf32>
    %c3_45 = arith.constant 3 : index
    %c0_46 = arith.constant 0 : index
    %c0_47 = arith.constant 0 : index
    %59 = vector.load %arg5[%c3_45, %c0_46, %c0_47] : memref<4x128x1xf32, #tpu.memory_space<vmem>>, vector<1x128x1xf32>
    %60 = vector.shape_cast %59 : vector<1x128x1xf32> to vector<128x1xf32>
    %61 = vector.broadcast %60 : vector<128x1xf32> to vector<128x256xf32>
    %62 = arith.addf %58, %61 : vector<128x256xf32>
    %cst_48 = arith.constant 0.000000e+00 : f32
    %63 = vector.broadcast %cst_48 : f32 to vector<128x256xf32>
    %64 = arith.maximumf %62, %63 : vector<128x256xf32>
    %65 = arith.truncf %64 : vector<128x256xf32> to vector<128x256xbf16>
    %c3_49 = arith.constant 3 : index
    %c0_50 = arith.constant 0 : index
    %c0_51 = arith.constant 0 : index
    %66 = vector.load %arg6[%c3_49, %c0_50, %c0_51] : memref<4x64x128xbf16, #tpu.memory_space<vmem>>, vector<1x64x128xbf16>
    %67 = vector.shape_cast %66 : vector<1x64x128xbf16> to vector<64x128xbf16>
    %cst_52 = arith.constant dense<0.000000e+00> : vector<64x256xf32>
    %68 = tpu.matmul %67, %65, %cst_52 {dimension_numbers = #tpu.dot_dimension_numbers<[1], [0], [0], [1], [0, 0, 1, 1], [], []>} : vector<64x128xbf16>, vector<128x256xbf16>, vector<64x256xf32> -> vector<64x256xf32>
    %69 = arith.addf %54, %68 : vector<64x256xf32>
    %cst_53 = arith.constant 0.000000e+00 : f32
    %70 = vector.broadcast %cst_53 : f32 to vector<64x256xf32>
    %71 = arith.maximumf %69, %70 : vector<64x256xf32>
    %72 = arith.truncf %71 : vector<64x256xf32> to vector<64x256xbf16>
    %c0_54 = arith.constant 0 : index
    %c0_55 = arith.constant 0 : index
    %73 = vector.load %arg8[%c0_54, %c0_55] : memref<8x64xbf16, #tpu.memory_space<vmem>>, vector<8x64xbf16>
    %cst_56 = arith.constant dense<0.000000e+00> : vector<8x256xf32>
    %74 = tpu.matmul %73, %72, %cst_56 {dimension_numbers = #tpu.dot_dimension_numbers<[1], [0], [0], [1], [0, 0, 1, 1], [], []>} : vector<8x64xbf16>, vector<64x256xbf16>, vector<8x256xf32> -> vector<8x256xf32>
    %c0_57 = arith.constant 0 : index
    %c0_58 = arith.constant 0 : index
    %75 = vector.load %arg9[%c0_57, %c0_58] : memref<8x1xf32, #tpu.memory_space<vmem>>, vector<8x1xf32>
    %76 = vector.broadcast %75 : vector<8x1xf32> to vector<8x256xf32>
    %77 = arith.addf %74, %76 : vector<8x256xf32>
    %cst_59 = arith.constant 0.000000e+00 : f32
    %78 = vector.broadcast %cst_59 : f32 to vector<8x256xf32>
    %79 = arith.maximumf %77, %78 : vector<8x256xf32>
    %c0_60 = arith.constant 0 : index
    %c0_61 = arith.constant 0 : index
    %80 = vector.load %arg10[%c0_60, %c0_61] : memref<8x256xf32, #tpu.memory_space<vmem>>, vector<8x256xf32>
    tpu.vector_store %arg10[%c0_60, %c0_61], %79 {strides = array<i32>} : memref<8x256xf32, #tpu.memory_space<vmem>>, vector<8x256xf32>,
    return
  }
  func.func @transform_0(%arg0: i32) -> (i32, i32) {
    %c0_i32 = arith.constant 0 : i32
    %c0_i32_0 = arith.constant 0 : i32
    %c0_i32_1 = arith.constant 0 : i32
    return %c0_i32, %c0_i32_0 : i32, i32
  }
  func.func @transform_1(%arg0: i32) -> (i32, i32) {
    %c0_i32 = arith.constant 0 : i32
    %c0_i32_0 = arith.constant 0 : i32
    %c0_i32_1 = arith.constant 0 : i32
    return %c0_i32, %c0_i32_0 : i32, i32
  }
  func.func @transform_2(%arg0: i32) -> (i32, i32) {
    %c0_i32 = arith.constant 0 : i32
    %c0_i32_0 = arith.constant 0 : i32
    %c0_i32_1 = arith.constant 0 : i32
    return %c0_i32, %c0_i32_0 : i32, i32
  }
  func.func @transform_3(%arg0: i32) -> (i32, i32, i32) {
    %c0_i32 = arith.constant 0 : i32
    %c0_i32_0 = arith.constant 0 : i32
    %c0_i32_1 = arith.constant 0 : i32
    %c0_i32_2 = arith.constant 0 : i32
    return %c0_i32, %c0_i32_0, %c0_i32_1 : i32, i32, i32
  }
  func.func @transform_4(%arg0: i32) -> (i32, i32, i32) {
    %c0_i32 = arith.constant 0 : i32
    %c0_i32_0 = arith.constant 0 : i32
    %c0_i32_1 = arith.constant 0 : i32
    %c0_i32_2 = arith.constant 0 : i32
    return %c0_i32, %c0_i32_0, %c0_i32_1 : i32, i32, i32
  }
  func.func @transform_5(%arg0: i32) -> (i32, i32, i32) {
    %c0_i32 = arith.constant 0 : i32
    %c0_i32_0 = arith.constant 0 : i32
    %c0_i32_1 = arith.constant 0 : i32
    %c0_i32_2 = arith.constant 0 : i32
    return %c0_i32, %c0_i32_0, %c0_i32_1 : i32, i32, i32
  }
  func.func @transform_6(%arg0: i32) -> (i32, i32) {
    %c0_i32 = arith.constant 0 : i32
    %c0_i32_0 = arith.constant 0 : i32
    %c0_i32_1 = arith.constant 0 : i32
    return %c0_i32, %c0_i32_0 : i32, i32
  }
  func.func @transform_7(%arg0: i32) -> (i32, i32) {
    %c0_i32 = arith.constant 0 : i32
    %c0_i32_0 = arith.constant 0 : i32
    %c0_i32_1 = arith.constant 0 : i32
    return %c0_i32, %c0_i32_0 : i32, i32
  }
  func.func @transform_8(%arg0: i32) -> (i32, i32) {
    %c0_i32 = arith.constant 0 : i32
    %c0_i32_0 = arith.constant 0 : i32
    %c0_i32_1 = arith.constant 0 : i32
    return %c0_i32, %c0_i32_0 : i32, i32
  }
  func.func @transform_9(%arg0: i32) -> (i32, i32) {
    %c0_i32 = arith.constant 0 : i32
    %c0_i32_0 = arith.constant 0 : i32
    %c0_i32_1 = arith.constant 0 : i32
    return %c0_i32, %c0_i32_0 : i32, i32
  }
}

</mosaic_0001>

<llo_original>
// kernel: tpu_custom_call.1
$region0: #{tpu_custom_call.1}
  #allocation0 [shape = 'u32[]', space=smem, size = 0x4, offset = 0x4, fixed_abs, tag = 'smem constant byte address 0x4 - core index']
  #allocation1 [shape = 'u32[144,128]{1,0:T(1,128)}', space=vmem, size = 0x12000, scoped, tag = 'internal scratch']
  %s0 = inlined_call_operand.vmem [shape: bf16[264,256], index: 0, kind: input, shape index: {}]
  %s1 = inlined_call_operand.vmem [shape: bf16[1024,264], index: 1, kind: input, shape index: {}]
  %s2 = inlined_call_operand.vmem [shape: f32[1024,1], index: 2, kind: input, shape index: {}]
  %s3 = inlined_call_operand.vmem [shape: bf16[4,128,256], index: 3, kind: input, shape index: {}]
  %s4 = inlined_call_operand.vmem [shape: f32[4,128,1], index: 4, kind: input, shape index: {}]
  %s5 = inlined_call_operand.vmem [shape: bf16[4,64,128], index: 5, kind: input, shape index: {}]
  %s6 = inlined_call_operand.vmem [shape: f32[64,256], index: 6, kind: input, shape index: {}]
  %s7 = inlined_call_operand.vmem [shape: bf16[8,64], index: 7, kind: input, shape index: {}]
  %s8 = inlined_call_operand.vmem [shape: f32[8,1], index: 8, kind: input, shape index: {}]
  %s9 = inlined_call_operand.hbm [shape: f32[8,256], index: 9, kind: output, shape index: {}]
  %s10 = sld [smem:[#allocation0]]
  $region46: #{tpu_custom_call.1} parent=0
    _
  %s12 = ssub.s32 1, %s10
  %s13 = scalar_select 0, %s12, %s10
  $region1: #{tpu_custom_call.1} parent=0
    #allocation2 [shape = 'u8[8192]{0}', space=vmem, size = 0x2000, scoped, tag = 'output window, operand 0, single buffered']
    #allocation3 [shape = 's32[1]{0}', space=sflag, size = 0x4, scoped, tag = 'scoped memory for tpu_custom_call.1']
    %14 = vsyncpa [#allocation3], 0
    // Predicated region
    $region2: #{tpu_custom_call.1} parent=1 // pred_check
      _
    $region3: #{tpu_custom_call.1} parent=1 // pred_check_branch
      %16 = sbr.rel (0) target = $region5
    $region4: #{tpu_custom_call.1} parent=1 // pred_region
      _
    $region5: #{tpu_custom_call.1} parent=1 // pred_fallthru
      _
    // Predicated region
    $region6: #{tpu_custom_call.1} parent=1 // pred_check
      _
    $region7: #{tpu_custom_call.1} parent=1 // pred_check_branch
      %18 = sbr.rel (0) target = $region9
    $region8: #{tpu_custom_call.1} parent=1 // pred_region
      _
    $region9: #{tpu_custom_call.1} parent=1 // pred_fallthru
      _
    // Predicated region
    $region10: #{tpu_custom_call.1} parent=1 // pred_check
      _
    $region11: #{tpu_custom_call.1} parent=1 // pred_check_branch
      %20 = sbr.rel (0) target = $region13
    $region12: #{tpu_custom_call.1} parent=1 // pred_region
      _
    $region13: #{tpu_custom_call.1} parent=1 // pred_fallthru
      _
    // Predicated region
    $region14: #{tpu_custom_call.1} parent=1 // pred_check
      _
    $region15: #{tpu_custom_call.1} parent=1 // pred_check_branch
      %22 = sbr.rel (0) target = $region17
    $region16: #{tpu_custom_call.1} parent=1 // pred_region
      _
    $region17: #{tpu_custom_call.1} parent=1 // pred_fallthru
      _
    // Predicated region
    $region18: #{tpu_custom_call.1} parent=1 // pred_check
      _
    $region19: #{tpu_custom_call.1} parent=1 // pred_check_branch
      %24 = sbr.rel (0) target = $region21
    $region20: #{tpu_custom_call.1} parent=1 // pred_region
      _
    $region21: #{tpu_custom_call.1} parent=1 // pred_fallthru
      _
    // Predicated region
    $region22: #{tpu_custom_call.1} parent=1 // pred_check
      _
    $region23: #{tpu_custom_call.1} parent=1 // pred_check_branch
      %26 = sbr.rel (0) target = $region25
    $region24: #{tpu_custom_call.1} parent=1 // pred_region
      _
    $region25: #{tpu_custom_call.1} parent=1 // pred_fallthru
      _
    // Predicated region
    $region26: #{tpu_custom_call.1} parent=1 // pred_check
      _
    $region27: #{tpu_custom_call.1} parent=1 // pred_check_branch
      %28 = sbr.rel (0) target = $region29
    $region28: #{tpu_custom_call.1} parent=1 // pred_region
      _
    $region29: #{tpu_custom_call.1} parent=1 // pred_fallthru
      _
    // Predicated region
    $region30: #{tpu_custom_call.1} parent=1 // pred_check
      _
    $region31: #{tpu_custom_call.1} parent=1 // pred_check_branch
      %30 = sbr.rel (0) target = $region33
    $region32: #{tpu_custom_call.1} parent=1 // pred_region
      _
    $region33: #{tpu_custom_call.1} parent=1 // pred_fallthru
      _
    // Predicated region
    $region34: #{tpu_custom_call.1} parent=1 // pred_check
      _
    $region35: #{tpu_custom_call.1} parent=1 // pred_check_branch
      %32 = sbr.rel (0) target = $region37
    $region36: #{tpu_custom_call.1} parent=1 // pred_region
      _
    $region37: #{tpu_custom_call.1} parent=1 // pred_fallthru
      _
    %v34 = vld [vmem:[%s1] sm:$0xff]
    %v35 = vld [vmem:[%s1 + $0x8] sm:$0xf]
    %v36 = vld [vmem:[%s1 + $0xc] sm:$0xff]
    %v37 = vld [vmem:[%s1 + $0x14] sm:$0xf]
    %v38 = vld [vmem:[%s1 + $0x18] sm:$0xff]
    %v39 = vld [vmem:[%s1 + $0x20] sm:$0xf]
    %v40 = vld [vmem:[%s1 + $0x24] sm:$0xff]
    %v41 = vld [vmem:[%s1 + $0x2c] sm:$0xf]
    %v42 = vld [vmem:[%s1 + $0x30] sm:$0xff]
    %v43 = vld [vmem:[%s1 + $0x38] sm:$0xf]
    %v44 = vld [vmem:[%s1 + $0x3c] sm:$0xff]
    %v45 = vld [vmem:[%s1 + $0x44] sm:$0xf]
    %v46 = vld [vmem:[%s1 + $0x48] sm:$0xff]
    %v47 = vld [vmem:[%s1 + $0x50] sm:$0xf]
    %v48 = vld [vmem:[%s1 + $0x54] sm:$0xff]
    %v49 = vld [vmem:[%s1 + $0x5c] sm:$0xf]
    %v50 = vld [vmem:[%s1 + $0x60] sm:$0xff]
    %v51 = vld [vmem:[%s1 + $0x68] sm:$0xf]
    %v52 = vld [vmem:[%s1 + $0x6c] sm:$0xff]
    %v53 = vld [vmem:[%s1 + $0x74] sm:$0xf]
    %v54 = vld [vmem:[%s1 + $0x78] sm:$0xff]
    %v55 = vld [vmem:[%s1 + $0x80] sm:$0xf]
    %v56 = vld [vmem:[%s1 + $0x84] sm:$0xff]
    %v57 = vld [vmem:[%s1 + $0x8c] sm:$0xf]
    %v58 = vld [vmem:[%s1 + $0x90] sm:$0xff]
    %v59 = vld [vmem:[%s1 + $0x98] sm:$0xf]
    %v60 = vld [vmem:[%s1 + $0x9c] sm:$0xff]
    %v61 = vld [vmem:[%s1 + $0xa4] sm:$0xf]
    %v62 = vld [vmem:[%s1 + $0xa8] sm:$0xff]
    %v63 = vld [vmem:[%s1 + $0xb0] sm:$0xf]
    %v64 = vld [vmem:[%s1 + $0xb4] sm:$0xff]
    %v65 = vld [vmem:[%s1 + $0xbc] sm:$0xf]
    %v66 = vld [vmem:[%s1 + $0xc0] sm:$0xff]
    %v67 = vld [vmem:[%s1 + $0xc8] sm:$0xf]
    %v68 = vld [vmem:[%s1 + $0xcc] sm:$0xff]
    %v69 = vld [vmem:[%s1 + $0xd4] sm:$0xf]
    %v70 = vld [vmem:[%s1 + $0xd8] sm:$0xff]
    %v71 = vld [vmem:[%s1 + $0xe0] sm:$0xf]
    %v72 = vld [vmem:[%s1 + $0xe4] sm:$0xff]
    %v73 = vld [vmem:[%s1 + $0xec] sm:$0xf]
    %v74 = vld [vmem:[%s1 + $0xf0] sm:$0xff]
    %v75 = vld [vmem:[%s1 + $0xf8] sm:$0xf]
    %v76 = vld [vmem:[%s1 + $0xfc] sm:$0xff]
    %v77 = vld [vmem:[%s1 + $0x104] sm:$0xf]
    %v78 = vld [vmem:[%s1 + $0x108] sm:$0xff]
    %v79 = vld [vmem:[%s1 + $0x110] sm:$0xf]
    %v80 = vld [vmem:[%s1 + $0x114] sm:$0xff]
    %v81 = vld [vmem:[%s1 + $0x11c] sm:$0xf]
    %v82 = vld [vmem:[%s1 + $0x120] sm:$0xff]
    %v83 = vld [vmem:[%s1 + $0x128] sm:$0xf]
    %v84 = vld [vmem:[%s1 + $0x12c] sm:$0xff]
    %v85 = vld [vmem:[%s1 + $0x134] sm:$0xf]
    %v86 = vld [vmem:[%s1 + $0x138] sm:$0xff]
    %v87 = vld [vmem:[%s1 + $0x140] sm:$0xf]
    %v88 = vld [vmem:[%s1 + $0x144] sm:$0xff]
    %v89 = vld [vmem:[%s1 + $0x14c] sm:$0xf]
    %v90 = vld [vmem:[%s1 + $0x150] sm:$0xff]
    %v91 = vld [vmem:[%s1 + $0x158] sm:$0xf]
    %v92 = vld [vmem:[%s1 + $0x15c] sm:$0xff]
    %v93 = vld [vmem:[%s1 + $0x164] sm:$0xf]
    %v94 = vld [vmem:[%s1 + $0x168] sm:$0xff]
    %v95 = vld [vmem:[%s1 + $0x170] sm:$0xf]
    %v96 = vld [vmem:[%s1 + $0x174] sm:$0xff]
    %v97 = vld [vmem:[%s1 + $0x17c] sm:$0xf]
    %v98 = vld [vmem:[%s1 + $0x180] sm:$0xff]
    %v99 = vld [vmem:[%s1 + $0x188] sm:$0xf]
    %v100 = vld [vmem:[%s1 + $0x18c] sm:$0xff]
    %v101 = vld [vmem:[%s1 + $0x194] sm:$0xf]
    %v102 = vld [vmem:[%s1 + $0x198] sm:$0xff]
    %v103 = vld [vmem:[%s1 + $0x1a0] sm:$0xf]
    %v104 = vld [vmem:[%s1 + $0x1a4] sm:$0xff]
    %v105 = vld [vmem:[%s1 + $0x1ac] sm:$0xf]
    %v106 = vld [vmem:[%s1 + $0x1b0] sm:$0xff]
    %v107 = vld [vmem:[%s1 + $0x1b8] sm:$0xf]
    %v108 = vld [vmem:[%s1 + $0x1bc] sm:$0xff]
    %v109 = vld [vmem:[%s1 + $0x1c4] sm:$0xf]
    %v110 = vld [vmem:[%s1 + $0x1c8] sm:$0xff]
    %v111 = vld [vmem:[%s1 + $0x1d0] sm:$0xf]
    %v112 = vld [vmem:[%s1 + $0x1d4] sm:$0xff]
    %v113 = vld [vmem:[%s1 + $0x1dc] sm:$0xf]
    %v114 = vld [vmem:[%s1 + $0x1e0] sm:$0xff]
    %v115 = vld [vmem:[%s1 + $0x1e8] sm:$0xf]
    %v116 = vld [vmem:[%s1 + $0x1ec] sm:$0xff]
    %v117 = vld [vmem:[%s1 + $0x1f4] sm:$0xf]
    %v118 = vld [vmem:[%s1 + $0x1f8] sm:$0xff]
    %v119 = vld [vmem:[%s1 + $0x200] sm:$0xf]
    %v120 = vld [vmem:[%s1 + $0x204] sm:$0xff]
    %v121 = vld [vmem:[%s1 + $0x20c] sm:$0xf]
    %v122 = vld [vmem:[%s1 + $0x210] sm:$0xff]
    %v123 = vld [vmem:[%s1 + $0x218] sm:$0xf]
    %v124 = vld [vmem:[%s1 + $0x21c] sm:$0xff]
    %v125 = vld [vmem:[%s1 + $0x224] sm:$0xf]
    %v126 = vld [vmem:[%s1 + $0x228] sm:$0xff]
    %v127 = vld [vmem:[%s1 + $0x230] sm:$0xf]
    %v128 = vld [vmem:[%s1 + $0x234] sm:$0xff]
    %v129 = vld [vmem:[%s1 + $0x23c] sm:$0xf]
    %v130 = vld [vmem:[%s1 + $0x240] sm:$0xff]
    %v131 = vld [vmem:[%s1 + $0x248] sm:$0xf]
    %v132 = vld [vmem:[%s1 + $0x24c] sm:$0xff]
    %v133 = vld [vmem:[%s1 + $0x254] sm:$0xf]
    %v134 = vld [vmem:[%s1 + $0x258] sm:$0xff]
    %v135 = vld [vmem:[%s1 + $0x260] sm:$0xf]
    %v136 = vld [vmem:[%s1 + $0x264] sm:$0xff]
    %v137 = vld [vmem:[%s1 + $0x26c] sm:$0xf]
    %v138 = vld [vmem:[%s1 + $0x270] sm:$0xff]
    %v139 = vld [vmem:[%s1 + $0x278] sm:$0xf]
    %v140 = vld [vmem:[%s1 + $0x27c] sm:$0xff]
    %v141 = vld [vmem:[%s1 + $0x284] sm:$0xf]
    %v142 = vld [vmem:[%s1 + $0x288] sm:$0xff]
    %v143 = vld [vmem:[%s1 + $0x290] sm:$0xf]
    %v144 = vld [vmem:[%s1 + $0x294] sm:$0xff]
    %v145 = vld [vmem:[%s1 + $0x29c] sm:$0xf]
    %v146 = vld [vmem:[%s1 + $0x2a0] sm:$0xff]
    %v147 = vld [vmem:[%s1 + $0x2a8] sm:$0xf]
    %v148 = vld [vmem:[%s1 + $0x2ac] sm:$0xff]
    %v149 = vld [vmem:[%s1 + $0x2b4] sm:$0xf]
    %v150 = vld [vmem:[%s1 + $0x2b8] sm:$0xff]
    %v151 = vld [vmem:[%s1 + $0x2c0] sm:$0xf]
    %v152 = vld [vmem:[%s1 + $0x2c4] sm:$0xff]
    %v153 = vld [vmem:[%s1 + $0x2cc] sm:$0xf]
    %v154 = vld [vmem:[%s1 + $0x2d0] sm:$0xff]
    %v155 = vld [vmem:[%s1 + $0x2d8] sm:$0xf]
    %v156 = vld [vmem:[%s1 + $0x2dc] sm:$0xff]
    %v157 = vld [vmem:[%s1 + $0x2e4] sm:$0xf]
    %v158 = vld [vmem:[%s1 + $0x2e8] sm:$0xff]
    %v159 = vld [vmem:[%s1 + $0x2f0] sm:$0xf]
    %v160 = vld [vmem:[%s1 + $0x2f4] sm:$0xff]
    %v161 = vld [vmem:[%s1 + $0x2fc] sm:$0xf]
    %v162 = vld [vmem:[%s1 + $0x300] sm:$0xff]
    %v163 = vld [vmem:[%s1 + $0x308] sm:$0xf]
    %v164 = vld [vmem:[%s1 + $0x30c] sm:$0xff]
    %v165 = vld [vmem:[%s1 + $0x314] sm:$0xf]
    %v166 = vld [vmem:[%s1 + $0x318] sm:$0xff]
    %v167 = vld [vmem:[%s1 + $0x320] sm:$0xf]
    %v168 = vld [vmem:[%s1 + $0x324] sm:$0xff]
    %v169 = vld [vmem:[%s1 + $0x32c] sm:$0xf]
    %v170 = vld [vmem:[%s1 + $0x330] sm:$0xff]
    %v171 = vld [vmem:[%s1 + $0x338] sm:$0xf]
    %v172 = vld [vmem:[%s1 + $0x33c] sm:$0xff]
    %v173 = vld [vmem:[%s1 + $0x344] sm:$0xf]
    %v174 = vld [vmem:[%s1 + $0x348] sm:$0xff]
    %v175 = vld [vmem:[%s1 + $0x350] sm:$0xf]
    %v176 = vld [vmem:[%s1 + $0x354] sm:$0xff]
    %v177 = vld [vmem:[%s1 + $0x35c] sm:$0xf]
    %v178 = vld [vmem:[%s1 + $0x360] sm:$0xff]
    %v179 = vld [vmem:[%s1 + $0x368] sm:$0xf]
    %v180 = vld [vmem:[%s1 + $0x36c] sm:$0xff]
    %v181 = vld [vmem:[%s1 + $0x374] sm:$0xf]
    %v182 = vld [vmem:[%s1 + $0x378] sm:$0xff]
    %v183 = vld [vmem:[%s1 + $0x380] sm:$0xf]
    %v184 = vld [vmem:[%s1 + $0x384] sm:$0xff]
    %v185 = vld [vmem:[%s1 + $0x38c] sm:$0xf]
    %v186 = vld [vmem:[%s1 + $0x390] sm:$0xff]
    %v187 = vld [vmem:[%s1 + $0x398] sm:$0xf]
    %v188 = vld [vmem:[%s1 + $0x39c] sm:$0xff]
    %v189 = vld [vmem:[%s1 + $0x3a4] sm:$0xf]
    %v190 = vld [vmem:[%s1 + $0x3a8] sm:$0xff]
    %v191 = vld [vmem:[%s1 + $0x3b0] sm:$0xf]
    %v192 = vld [vmem:[%s1 + $0x3b4] sm:$0xff]
    %v193 = vld [vmem:[%s1 + $0x3bc] sm:$0xf]
    %v194 = vld [vmem:[%s1 + $0x3c0] sm:$0xff]
    %v195 = vld [vmem:[%s1 + $0x3c8] sm:$0xf]
    %v196 = vld [vmem:[%s1 + $0x3cc] sm:$0xff]
    %v197 = vld [vmem:[%s1 + $0x3d4] sm:$0xf]
    %v198 = vld [vmem:[%s1 + $0x3d8] sm:$0xff]
    %v199 = vld [vmem:[%s1 + $0x3e0] sm:$0xf]
    %v200 = vld [vmem:[%s1 + $0x3e4] sm:$0xff]
    %v201 = vld [vmem:[%s1 + $0x3ec] sm:$0xf]
    %v202 = vld [vmem:[%s1 + $0x3f0] sm:$0xff]
    %v203 = vld [vmem:[%s1 + $0x3f8] sm:$0xf]
    %v204 = vld [vmem:[%s1 + $0x3fc] sm:$0xff]
    %v205 = vld [vmem:[%s1 + $0x404] sm:$0xf]
    %v206 = vld [vmem:[%s1 + $0x408] sm:$0xff]
    %v207 = vld [vmem:[%s1 + $0x410] sm:$0xf]
    %v208 = vld [vmem:[%s1 + $0x414] sm:$0xff]
    %v209 = vld [vmem:[%s1 + $0x41c] sm:$0xf]
    %v210 = vld [vmem:[%s1 + $0x420] sm:$0xff]
    %v211 = vld [vmem:[%s1 + $0x428] sm:$0xf]
    %v212 = vld [vmem:[%s1 + $0x42c] sm:$0xff]
    %v213 = vld [vmem:[%s1 + $0x434] sm:$0xf]
    %v214 = vld [vmem:[%s1 + $0x438] sm:$0xff]
    %v215 = vld [vmem:[%s1 + $0x440] sm:$0xf]
    %v216 = vld [vmem:[%s1 + $0x444] sm:$0xff]
    %v217 = vld [vmem:[%s1 + $0x44c] sm:$0xf]
    %v218 = vld [vmem:[%s1 + $0x450] sm:$0xff]
    %v219 = vld [vmem:[%s1 + $0x458] sm:$0xf]
    %v220 = vld [vmem:[%s1 + $0x45c] sm:$0xff]
    %v221 = vld [vmem:[%s1 + $0x464] sm:$0xf]
    %v222 = vld [vmem:[%s1 + $0x468] sm:$0xff]
    %v223 = vld [vmem:[%s1 + $0x470] sm:$0xf]
    %v224 = vld [vmem:[%s1 + $0x474] sm:$0xff]
    %v225 = vld [vmem:[%s1 + $0x47c] sm:$0xf]
    %v226 = vld [vmem:[%s1 + $0x480] sm:$0xff]
    %v227 = vld [vmem:[%s1 + $0x488] sm:$0xf]
    %v228 = vld [vmem:[%s1 + $0x48c] sm:$0xff]
    %v229 = vld [vmem:[%s1 + $0x494] sm:$0xf]
    %v230 = vld [vmem:[%s1 + $0x498] sm:$0xff]
    %v231 = vld [vmem:[%s1 + $0x4a0] sm:$0xf]
    %v232 = vld [vmem:[%s1 + $0x4a4] sm:$0xff]
    %v233 = vld [vmem:[%s1 + $0x4ac] sm:$0xf]
    %v234 = vld [vmem:[%s1 + $0x4b0] sm:$0xff]
    %v235 = vld [vmem:[%s1 + $0x4b8] sm:$0xf]
    %v236 = vld [vmem:[%s1 + $0x4bc] sm:$0xff]
    %v237 = vld [vmem:[%s1 + $0x4c4] sm:$0xf]
    %v238 = vld [vmem:[%s1 + $0x4c8] sm:$0xff]
    %v239 = vld [vmem:[%s1 + $0x4d0] sm:$0xf]
    %v240 = vld [vmem:[%s1 + $0x4d4] sm:$0xff]
    %v241 = vld [vmem:[%s1 + $0x4dc] sm:$0xf]
    %v242 = vld [vmem:[%s1 + $0x4e0] sm:$0xff]
    %v243 = vld [vmem:[%s1 + $0x4e8] sm:$0xf]
    %v244 = vld [vmem:[%s1 + $0x4ec] sm:$0xff]
    %v245 = vld [vmem:[%s1 + $0x4f4] sm:$0xf]
    %v246 = vld [vmem:[%s1 + $0x4f8] sm:$0xff]
    %v247 = vld [vmem:[%s1 + $0x500] sm:$0xf]
    %v248 = vld [vmem:[%s1 + $0x504] sm:$0xff]
    %v249 = vld [vmem:[%s1 + $0x50c] sm:$0xf]
    %v250 = vld [vmem:[%s1 + $0x510] sm:$0xff]
    %v251 = vld [vmem:[%s1 + $0x518] sm:$0xf]
    %v252 = vld [vmem:[%s1 + $0x51c] sm:$0xff]
    %v253 = vld [vmem:[%s1 + $0x524] sm:$0xf]
    %v254 = vld [vmem:[%s1 + $0x528] sm:$0xff]
    %v255 = vld [vmem:[%s1 + $0x530] sm:$0xf]
    %v256 = vld [vmem:[%s1 + $0x534] sm:$0xff]
    %v257 = vld [vmem:[%s1 + $0x53c] sm:$0xf]
    %v258 = vld [vmem:[%s1 + $0x540] sm:$0xff]
    %v259 = vld [vmem:[%s1 + $0x548] sm:$0xf]
    %v260 = vld [vmem:[%s1 + $0x54c] sm:$0xff]
    %v261 = vld [vmem:[%s1 + $0x554] sm:$0xf]
    %v262 = vld [vmem:[%s1 + $0x558] sm:$0xff]
    %v263 = vld [vmem:[%s1 + $0x560] sm:$0xf]
    %v264 = vld [vmem:[%s1 + $0x564] sm:$0xff]
    %v265 = vld [vmem:[%s1 + $0x56c] sm:$0xf]
    %v266 = vld [vmem:[%s1 + $0x570] sm:$0xff]
    %v267 = vld [vmem:[%s1 + $0x578] sm:$0xf]
    %v268 = vld [vmem:[%s1 + $0x57c] sm:$0xff]
    %v269 = vld [vmem:[%s1 + $0x584] sm:$0xf]
    %v270 = vld [vmem:[%s1 + $0x588] sm:$0xff]
    %v271 = vld [vmem:[%s1 + $0x590] sm:$0xf]
    %v272 = vld [vmem:[%s1 + $0x594] sm:$0xff]
    %v273 = vld [vmem:[%s1 + $0x59c] sm:$0xf]
    %v274 = vld [vmem:[%s1 + $0x5a0] sm:$0xff]
    %v275 = vld [vmem:[%s1 + $0x5a8] sm:$0xf]
    %v276 = vld [vmem:[%s1 + $0x5ac] sm:$0xff]
    %v277 = vld [vmem:[%s1 + $0x5b4] sm:$0xf]
    %v278 = vld [vmem:[%s1 + $0x5b8] sm:$0xff]
    %v279 = vld [vmem:[%s1 + $0x5c0] sm:$0xf]
    %v280 = vld [vmem:[%s1 + $0x5c4] sm:$0xff]
    %v281 = vld [vmem:[%s1 + $0x5cc] sm:$0xf]
    %v282 = vld [vmem:[%s1 + $0x5d0] sm:$0xff]
    %v283 = vld [vmem:[%s1 + $0x5d8] sm:$0xf]
    %v284 = vld [vmem:[%s1 + $0x5dc] sm:$0xff]
    %v285 = vld [vmem:[%s1 + $0x5e4] sm:$0xf]
    %v286 = vld [vmem:[%s1 + $0x5e8] sm:$0xff]
    %v287 = vld [vmem:[%s1 + $0x5f0] sm:$0xf]
    %v288 = vld [vmem:[%s1 + $0x5f4] sm:$0xff]
    %v289 = vld [vmem:[%s1 + $0x5fc] sm:$0xf]
    %v290 = vld [vmem:[%s0] sm:$0xff]
    %v291 = vld [vmem:[%s0 + $0x8] sm:$0xff]
    %v292 = vld [vmem:[%s0 + $0x10] sm:$0xff]
    %v293 = vld [vmem:[%s0 + $0x18] sm:$0xff]
    %v294 = vld [vmem:[%s0 + $0x20] sm:$0xff]
    %v295 = vld [vmem:[%s0 + $0x28] sm:$0xff]
    %v296 = vld [vmem:[%s0 + $0x30] sm:$0xff]
    %v297 = vld [vmem:[%s0 + $0x38] sm:$0xff]
    %v298 = vld [vmem:[%s0 + $0x40] sm:$0xff]
    %v299 = vld [vmem:[%s0 + $0x48] sm:$0xff]
    %v300 = vld [vmem:[%s0 + $0x50] sm:$0xff]
    %v301 = vld [vmem:[%s0 + $0x58] sm:$0xff]
    %v302 = vld [vmem:[%s0 + $0x60] sm:$0xff]
    %v303 = vld [vmem:[%s0 + $0x68] sm:$0xff]
    %v304 = vld [vmem:[%s0 + $0x70] sm:$0xff]
    %v305 = vld [vmem:[%s0 + $0x78] sm:$0xff]
    %v306 = vld [vmem:[%s0 + $0x80] sm:$0xff]
    %v307 = vld [vmem:[%s0 + $0x88] sm:$0xff]
    %v308 = vld [vmem:[%s0 + $0x90] sm:$0xff]
    %v309 = vld [vmem:[%s0 + $0x98] sm:$0xff]
    %v310 = vld [vmem:[%s0 + $0xa0] sm:$0xff]
    %v311 = vld [vmem:[%s0 + $0xa8] sm:$0xff]
    %v312 = vld [vmem:[%s0 + $0xb0] sm:$0xff]
    %v313 = vld [vmem:[%s0 + $0xb8] sm:$0xff]
    %v314 = vld [vmem:[%s0 + $0xc0] sm:$0xff]
    %v315 = vld [vmem:[%s0 + $0xc8] sm:$0xff]
    %v316 = vld [vmem:[%s0 + $0xd0] sm:$0xff]
    %v317 = vld [vmem:[%s0 + $0xd8] sm:$0xff]
    %v318 = vld [vmem:[%s0 + $0xe0] sm:$0xff]
    %v319 = vld [vmem:[%s0 + $0xe8] sm:$0xff]
    %v320 = vld [vmem:[%s0 + $0xf0] sm:$0xff]
    %v321 = vld [vmem:[%s0 + $0xf8] sm:$0xff]
    %v322 = vld [vmem:[%s0 + $0x100] sm:$0xff]
    %v323 = vld [vmem:[%s2] sm:$0xff]
    %v324 = vld [vmem:[%s2 + $0x8] sm:$0xff]
    %v325 = vld [vmem:[%s2 + $0x10] sm:$0xff]
    %v326 = vld [vmem:[%s2 + $0x18] sm:$0xff]
    %v327 = vld [vmem:[%s2 + $0x20] sm:$0xff]
    %v328 = vld [vmem:[%s2 + $0x28] sm:$0xff]
    %v329 = vld [vmem:[%s2 + $0x30] sm:$0xff]
    %v330 = vld [vmem:[%s2 + $0x38] sm:$0xff]
    %v331 = vld [vmem:[%s2 + $0x40] sm:$0xff]
    %v332 = vld [vmem:[%s2 + $0x48] sm:$0xff]
    %v333 = vld [vmem:[%s2 + $0x50] sm:$0xff]
    %v334 = vld [vmem:[%s2 + $0x58] sm:$0xff]
    %v335 = vld [vmem:[%s2 + $0x60] sm:$0xff]
    %v336 = vld [vmem:[%s2 + $0x68] sm:$0xff]
    %v337 = vld [vmem:[%s2 + $0x70] sm:$0xff]
    %v338 = vld [vmem:[%s2 + $0x78] sm:$0xff]
    %v339 = vld [vmem:[%s2 + $0x80] sm:$0xff]
    %v340 = vld [vmem:[%s2 + $0x88] sm:$0xff]
    %v341 = vld [vmem:[%s2 + $0x90] sm:$0xff]
    %v342 = vld [vmem:[%s2 + $0x98] sm:$0xff]
    %v343 = vld [vmem:[%s2 + $0xa0] sm:$0xff]
    %v344 = vld [vmem:[%s2 + $0xa8] sm:$0xff]
    %v345 = vld [vmem:[%s2 + $0xb0] sm:$0xff]
    %v346 = vld [vmem:[%s2 + $0xb8] sm:$0xff]
    %v347 = vld [vmem:[%s2 + $0xc0] sm:$0xff]
    %v348 = vld [vmem:[%s2 + $0xc8] sm:$0xff]
    %v349 = vld [vmem:[%s2 + $0xd0] sm:$0xff]
    %v350 = vld [vmem:[%s2 + $0xd8] sm:$0xff]
    %v351 = vld [vmem:[%s2 + $0xe0] sm:$0xff]
    %v352 = vld [vmem:[%s2 + $0xe8] sm:$0xff]
    %v353 = vld [vmem:[%s2 + $0xf0] sm:$0xff]
    %v354 = vld [vmem:[%s2 + $0xf8] sm:$0xff]
    %v355 = vld [vmem:[%s2 + $0x100] sm:$0xff]
    %v356 = vld [vmem:[%s2 + $0x108] sm:$0xff]
    %v357 = vld [vmem:[%s2 + $0x110] sm:$0xff]
    %v358 = vld [vmem:[%s2 + $0x118] sm:$0xff]
    %v359 = vld [vmem:[%s2 + $0x120] sm:$0xff]
    %v360 = vld [vmem:[%s2 + $0x128] sm:$0xff]
    %v361 = vld [vmem:[%s2 + $0x130] sm:$0xff]
    %v362 = vld [vmem:[%s2 + $0x138] sm:$0xff]
    %v363 = vld [vmem:[%s2 + $0x140] sm:$0xff]
    %v364 = vld [vmem:[%s2 + $0x148] sm:$0xff]
    %v365 = vld [vmem:[%s2 + $0x150] sm:$0xff]
    %v366 = vld [vmem:[%s2 + $0x158] sm:$0xff]
    %v367 = vld [vmem:[%s2 + $0x160] sm:$0xff]
    %v368 = vld [vmem:[%s2 + $0x168] sm:$0xff]
    %v369 = vld [vmem:[%s2 + $0x170] sm:$0xff]
    %v370 = vld [vmem:[%s2 + $0x178] sm:$0xff]
    %v371 = vld [vmem:[%s2 + $0x180] sm:$0xff]
    %v372 = vld [vmem:[%s2 + $0x188] sm:$0xff]
    %v373 = vld [vmem:[%s2 + $0x190] sm:$0xff]
    %v374 = vld [vmem:[%s2 + $0x198] sm:$0xff]
    %v375 = vld [vmem:[%s2 + $0x1a0] sm:$0xff]
    %v376 = vld [vmem:[%s2 + $0x1a8] sm:$0xff]
    %v377 = vld [vmem:[%s2 + $0x1b0] sm:$0xff]
    %v378 = vld [vmem:[%s2 + $0x1b8] sm:$0xff]
    %v379 = vld [vmem:[%s2 + $0x1c0] sm:$0xff]
    %v380 = vld [vmem:[%s2 + $0x1c8] sm:$0xff]
    %v381 = vld [vmem:[%s2 + $0x1d0] sm:$0xff]
    %v382 = vld [vmem:[%s2 + $0x1d8] sm:$0xff]
    %v383 = vld [vmem:[%s2 + $0x1e0] sm:$0xff]
    %v384 = vld [vmem:[%s2 + $0x1e8] sm:$0xff]
    %v385 = vld [vmem:[%s2 + $0x1f0] sm:$0xff]
    %v386 = vld [vmem:[%s2 + $0x1f8] sm:$0xff]
    %v387 = vld [vmem:[%s2 + $0x200] sm:$0xff]
    %v388 = vld [vmem:[%s2 + $0x208] sm:$0xff]
    %v389 = vld [vmem:[%s2 + $0x210] sm:$0xff]
    %v390 = vld [vmem:[%s2 + $0x218] sm:$0xff]
    %v391 = vld [vmem:[%s2 + $0x220] sm:$0xff]
    %v392 = vld [vmem:[%s2 + $0x228] sm:$0xff]
    %v393 = vld [vmem:[%s2 + $0x230] sm:$0xff]
    %v394 = vld [vmem:[%s2 + $0x238] sm:$0xff]
    %v395 = vld [vmem:[%s2 + $0x240] sm:$0xff]
    %v396 = vld [vmem:[%s2 + $0x248] sm:$0xff]
    %v397 = vld [vmem:[%s2 + $0x250] sm:$0xff]
    %v398 = vld [vmem:[%s2 + $0x258] sm:$0xff]
    %v399 = vld [vmem:[%s2 + $0x260] sm:$0xff]
    %v400 = vld [vmem:[%s2 + $0x268] sm:$0xff]
    %v401 = vld [vmem:[%s2 + $0x270] sm:$0xff]
    %v402 = vld [vmem:[%s2 + $0x278] sm:$0xff]
    %v403 = vld [vmem:[%s2 + $0x280] sm:$0xff]
    %v404 = vld [vmem:[%s2 + $0x288] sm:$0xff]
    %v405 = vld [vmem:[%s2 + $0x290] sm:$0xff]
    %v406 = vld [vmem:[%s2 + $0x298] sm:$0xff]
    %v407 = vld [vmem:[%s2 + $0x2a0] sm:$0xff]
    %v408 = vld [vmem:[%s2 + $0x2a8] sm:$0xff]
    %v409 = vld [vmem:[%s2 + $0x2b0] sm:$0xff]
    %v410 = vld [vmem:[%s2 + $0x2b8] sm:$0xff]
    %v411 = vld [vmem:[%s2 + $0x2c0] sm:$0xff]
    %v412 = vld [vmem:[%s2 + $0x2c8] sm:$0xff]
    %v413 = vld [vmem:[%s2 + $0x2d0] sm:$0xff]
    %v414 = vld [vmem:[%s2 + $0x2d8] sm:$0xff]
    %v415 = vld [vmem:[%s2 + $0x2e0] sm:$0xff]
    %v416 = vld [vmem:[%s2 + $0x2e8] sm:$0xff]
    %v417 = vld [vmem:[%s2 + $0x2f0] sm:$0xff]
    %v418 = vld [vmem:[%s2 + $0x2f8] sm:$0xff]
    %v419 = vld [vmem:[%s2 + $0x300] sm:$0xff]
    %v420 = vld [vmem:[%s2 + $0x308] sm:$0xff]
    %v421 = vld [vmem:[%s2 + $0x310] sm:$0xff]
    %v422 = vld [vmem:[%s2 + $0x318] sm:$0xff]
    %v423 = vld [vmem:[%s2 + $0x320] sm:$0xff]
    %v424 = vld [vmem:[%s2 + $0x328] sm:$0xff]
    %v425 = vld [vmem:[%s2 + $0x330] sm:$0xff]
    %v426 = vld [vmem:[%s2 + $0x338] sm:$0xff]
    %v427 = vld [vmem:[%s2 + $0x340] sm:$0xff]
    %v428 = vld [vmem:[%s2 + $0x348] sm:$0xff]
    %v429 = vld [vmem:[%s2 + $0x350] sm:$0xff]
    %v430 = vld [vmem:[%s2 + $0x358] sm:$0xff]
    %v431 = vld [vmem:[%s2 + $0x360] sm:$0xff]
    %v432 = vld [vmem:[%s2 + $0x368] sm:$0xff]
    %v433 = vld [vmem:[%s2 + $0x370] sm:$0xff]
    %v434 = vld [vmem:[%s2 + $0x378] sm:$0xff]
    %v435 = vld [vmem:[%s2 + $0x380] sm:$0xff]
    %v436 = vld [vmem:[%s2 + $0x388] sm:$0xff]
    %v437 = vld [vmem:[%s2 + $0x390] sm:$0xff]
    %v438 = vld [vmem:[%s2 + $0x398] sm:$0xff]
    %v439 = vld [vmem:[%s2 + $0x3a0] sm:$0xff]
    %v440 = vld [vmem:[%s2 + $0x3a8] sm:$0xff]
    %v441 = vld [vmem:[%s2 + $0x3b0] sm:$0xff]
    %v442 = vld [vmem:[%s2 + $0x3b8] sm:$0xff]
    %v443 = vld [vmem:[%s2 + $0x3c0] sm:$0xff]
    %v444 = vld [vmem:[%s2 + $0x3c8] sm:$0xff]
    %v445 = vld [vmem:[%s2 + $0x3d0] sm:$0xff]
    %v446 = vld [vmem:[%s2 + $0x3d8] sm:$0xff]
    %v447 = vld [vmem:[%s2 + $0x3e0] sm:$0xff]
    %v448 = vld [vmem:[%s2 + $0x3e8] sm:$0xff]
    %v449 = vld [vmem:[%s2 + $0x3f0] sm:$0xff]
    %v450 = vld [vmem:[%s2 + $0x3f8] sm:$0xff]
    %452 = vset.pattern.permute.xlu0 0
    %453 = vperm.xlu0 %452, %v323
    %v454 = vpop.permute.xlu0 %453
    %457 = vset.pattern.permute.xlu0 0
    %458 = vperm.xlu0 %457, %v324
    %v459 = vpop.permute.xlu0 %458
    %462 = vset.pattern.permute.xlu0 0
    %463 = vperm.xlu0 %462, %v325
    %v464 = vpop.permute.xlu0 %463
    %467 = vset.pattern.permute.xlu0 0
    %468 = vperm.xlu0 %467, %v326
    %v469 = vpop.permute.xlu0 %468
    %472 = vset.pattern.permute.xlu0 0
    %473 = vperm.xlu0 %472, %v327
    %v474 = vpop.permute.xlu0 %473
    %477 = vset.pattern.permute.xlu0 0
    %478 = vperm.xlu0 %477, %v328
    %v479 = vpop.permute.xlu0 %478
    %482 = vset.pattern.permute.xlu0 0
    %483 = vperm.xlu0 %482, %v329
    %v484 = vpop.permute.xlu0 %483
    %487 = vset.pattern.permute.xlu0 0
    %488 = vperm.xlu0 %487, %v330
    %v489 = vpop.permute.xlu0 %488
    %492 = vset.pattern.permute.xlu0 0
    %493 = vperm.xlu0 %492, %v331
    %v494 = vpop.permute.xlu0 %493
    %497 = vset.pattern.permute.xlu0 0
    %498 = vperm.xlu0 %497, %v332
    %v499 = vpop.permute.xlu0 %498
    %502 = vset.pattern.permute.xlu0 0
    %503 = vperm.xlu0 %502, %v333
    %v504 = vpop.permute.xlu0 %503
    %507 = vset.pattern.permute.xlu0 0
    %508 = vperm.xlu0 %507, %v334
    %v509 = vpop.permute.xlu0 %508
    %512 = vset.pattern.permute.xlu0 0
    %513 = vperm.xlu0 %512, %v335
    %v514 = vpop.permute.xlu0 %513
    %517 = vset.pattern.permute.xlu0 0
    %518 = vperm.xlu0 %517, %v336
    %v519 = vpop.permute.xlu0 %518
    %522 = vset.pattern.permute.xlu0 0
    %523 = vperm.xlu0 %522, %v337
    %v524 = vpop.permute.xlu0 %523
    %527 = vset.pattern.permute.xlu0 0
    %528 = vperm.xlu0 %527, %v338
    %v529 = vpop.permute.xlu0 %528
    %532 = vset.pattern.permute.xlu0 0
    %533 = vperm.xlu0 %532, %v339
    %v534 = vpop.permute.xlu0 %533
    %537 = vset.pattern.permute.xlu0 0
    %538 = vperm.xlu0 %537, %v340
    %v539 = vpop.permute.xlu0 %538
    %542 = vset.pattern.permute.xlu0 0
    %543 = vperm.xlu0 %542, %v341
    %v544 = vpop.permute.xlu0 %543
    %547 = vset.pattern.permute.xlu0 0
    %548 = vperm.xlu0 %547, %v342
    %v549 = vpop.permute.xlu0 %548
    %552 = vset.pattern.permute.xlu0 0
    %553 = vperm.xlu0 %552, %v343
    %v554 = vpop.permute.xlu0 %553
    %557 = vset.pattern.permute.xlu0 0
    %558 = vperm.xlu0 %557, %v344
    %v559 = vpop.permute.xlu0 %558
    %562 = vset.pattern.permute.xlu0 0
    %563 = vperm.xlu0 %562, %v345
    %v564 = vpop.permute.xlu0 %563
    %567 = vset.pattern.permute.xlu0 0
    %568 = vperm.xlu0 %567, %v346
    %v569 = vpop.permute.xlu0 %568
    %572 = vset.pattern.permute.xlu0 0
    %573 = vperm.xlu0 %572, %v347
    %v574 = vpop.permute.xlu0 %573
    %577 = vset.pattern.permute.xlu0 0
    %578 = vperm.xlu0 %577, %v348
    %v579 = vpop.permute.xlu0 %578
    %582 = vset.pattern.permute.xlu0 0
    %583 = vperm.xlu0 %582, %v349
    %v584 = vpop.permute.xlu0 %583
    %587 = vset.pattern.permute.xlu0 0
    %588 = vperm.xlu0 %587, %v350
    %v589 = vpop.permute.xlu0 %588
    %592 = vset.pattern.permute.xlu0 0
    %593 = vperm.xlu0 %592, %v351
    %v594 = vpop.permute.xlu0 %593
    %597 = vset.pattern.permute.xlu0 0
    %598 = vperm.xlu0 %597, %v352
    %v599 = vpop.permute.xlu0 %598
    %602 = vset.pattern.permute.xlu0 0
    %603 = vperm.xlu0 %602, %v353
    %v604 = vpop.permute.xlu0 %603
    %607 = vset.pattern.permute.xlu0 0
    %608 = vperm.xlu0 %607, %v354
    %v609 = vpop.permute.xlu0 %608
    %612 = vset.pattern.permute.xlu0 0
    %613 = vperm.xlu0 %612, %v355
    %v614 = vpop.permute.xlu0 %613
    %617 = vset.pattern.permute.xlu0 0
    %618 = vperm.xlu0 %617, %v356
    %v619 = vpop.permute.xlu0 %618
    %622 = vset.pattern.permute.xlu0 0
    %623 = vperm.xlu0 %622, %v357
    %v624 = vpop.permute.xlu0 %623
    %627 = vset.pattern.permute.xlu0 0
    %628 = vperm.xlu0 %627, %v358
    %v629 = vpop.permute.xlu0 %628
    %632 = vset.pattern.permute.xlu0 0
    %633 = vperm.xlu0 %632, %v359
    %v634 = vpop.permute.xlu0 %633
    %637 = vset.pattern.permute.xlu0 0
    %638 = vperm.xlu0 %637, %v360
    %v639 = vpop.permute.xlu0 %638
    %642 = vset.pattern.permute.xlu0 0
    %643 = vperm.xlu0 %642, %v361
    %v644 = vpop.permute.xlu0 %643
    %647 = vset.pattern.permute.xlu0 0
    %648 = vperm.xlu0 %647, %v362
    %v649 = vpop.permute.xlu0 %648
    %652 = vset.pattern.permute.xlu0 0
    %653 = vperm.xlu0 %652, %v363
    %v654 = vpop.permute.xlu0 %653
    %657 = vset.pattern.permute.xlu0 0
    %658 = vperm.xlu0 %657, %v364
    %v659 = vpop.permute.xlu0 %658
    %662 = vset.pattern.permute.xlu0 0
    %663 = vperm.xlu0 %662, %v365
    %v664 = vpop.permute.xlu0 %663
    %667 = vset.pattern.permute.xlu0 0
    %668 = vperm.xlu0 %667, %v366
    %v669 = vpop.permute.xlu0 %668
    %672 = vset.pattern.permute.xlu0 0
    %673 = vperm.xlu0 %672, %v367
    %v674 = vpop.permute.xlu0 %673
    %677 = vset.pattern.permute.xlu0 0
    %678 = vperm.xlu0 %677, %v368
    %v679 = vpop.permute.xlu0 %678
    %682 = vset.pattern.permute.xlu0 0
    %683 = vperm.xlu0 %682, %v369
    %v684 = vpop.permute.xlu0 %683
    %687 = vset.pattern.permute.xlu0 0
    %688 = vperm.xlu0 %687, %v370
    %v689 = vpop.permute.xlu0 %688
    %692 = vset.pattern.permute.xlu0 0
    %693 = vperm.xlu0 %692, %v371
    %v694 = vpop.permute.xlu0 %693
    %697 = vset.pattern.permute.xlu0 0
    %698 = vperm.xlu0 %697, %v372
    %v699 = vpop.permute.xlu0 %698
    %702 = vset.pattern.permute.xlu0 0
    %703 = vperm.xlu0 %702, %v373
    %v704 = vpop.permute.xlu0 %703
    %707 = vset.pattern.permute.xlu0 0
    %708 = vperm.xlu0 %707, %v374
    %v709 = vpop.permute.xlu0 %708
    %712 = vset.pattern.permute.xlu0 0
    %713 = vperm.xlu0 %712, %v375
    %v714 = vpop.permute.xlu0 %713
    %717 = vset.pattern.permute.xlu0 0
    %718 = vperm.xlu0 %717, %v376
    %v719 = vpop.permute.xlu0 %718
    %722 = vset.pattern.permute.xlu0 0
    %723 = vperm.xlu0 %722, %v377
    %v724 = vpop.permute.xlu0 %723
    %727 = vset.pattern.permute.xlu0 0
    %728 = vperm.xlu0 %727, %v378
    %v729 = vpop.permute.xlu0 %728
    %732 = vset.pattern.permute.xlu0 0
    %733 = vperm.xlu0 %732, %v379
    %v734 = vpop.permute.xlu0 %733
    %737 = vset.pattern.permute.xlu0 0
    %738 = vperm.xlu0 %737, %v380
    %v739 = vpop.permute.xlu0 %738
    %742 = vset.pattern.permute.xlu0 0
    %743 = vperm.xlu0 %742, %v381
    %v744 = vpop.permute.xlu0 %743
    %747 = vset.pattern.permute.xlu0 0
    %748 = vperm.xlu0 %747, %v382
    %v749 = vpop.permute.xlu0 %748
    %752 = vset.pattern.permute.xlu0 0
    %753 = vperm.xlu0 %752, %v383
    %v754 = vpop.permute.xlu0 %753
    %757 = vset.pattern.permute.xlu0 0
    %758 = vperm.xlu0 %757, %v384
    %v759 = vpop.permute.xlu0 %758
    %762 = vset.pattern.permute.xlu0 0
    %763 = vperm.xlu0 %762, %v385
    %v764 = vpop.permute.xlu0 %763
    %767 = vset.pattern.permute.xlu0 0
    %768 = vperm.xlu0 %767, %v386
    %v769 = vpop.permute.xlu0 %768
    %772 = vset.pattern.permute.xlu0 0
    %773 = vperm.xlu0 %772, %v387
    %v774 = vpop.permute.xlu0 %773
    %777 = vset.pattern.permute.xlu0 0
    %778 = vperm.xlu0 %777, %v388
    %v779 = vpop.permute.xlu0 %778
    %782 = vset.pattern.permute.xlu0 0
    %783 = vperm.xlu0 %782, %v389
    %v784 = vpop.permute.xlu0 %783
    %787 = vset.pattern.permute.xlu0 0
    %788 = vperm.xlu0 %787, %v390
    %v789 = vpop.permute.xlu0 %788
    %792 = vset.pattern.permute.xlu0 0
    %793 = vperm.xlu0 %792, %v391
    %v794 = vpop.permute.xlu0 %793
    %797 = vset.pattern.permute.xlu0 0
    %798 = vperm.xlu0 %797, %v392
    %v799 = vpop.permute.xlu0 %798
    %802 = vset.pattern.permute.xlu0 0
    %803 = vperm.xlu0 %802, %v393
    %v804 = vpop.permute.xlu0 %803
    %807 = vset.pattern.permute.xlu0 0
    %808 = vperm.xlu0 %807, %v394
    %v809 = vpop.permute.xlu0 %808
    %812 = vset.pattern.permute.xlu0 0
    %813 = vperm.xlu0 %812, %v395
    %v814 = vpop.permute.xlu0 %813
    %817 = vset.pattern.permute.xlu0 0
    %818 = vperm.xlu0 %817, %v396
    %v819 = vpop.permute.xlu0 %818
    %822 = vset.pattern.permute.xlu0 0
    %823 = vperm.xlu0 %822, %v397
    %v824 = vpop.permute.xlu0 %823
    %827 = vset.pattern.permute.xlu0 0
    %828 = vperm.xlu0 %827, %v398
    %v829 = vpop.permute.xlu0 %828
    %832 = vset.pattern.permute.xlu0 0
    %833 = vperm.xlu0 %832, %v399
    %v834 = vpop.permute.xlu0 %833
    %837 = vset.pattern.permute.xlu0 0
    %838 = vperm.xlu0 %837, %v400
    %v839 = vpop.permute.xlu0 %838
    %842 = vset.pattern.permute.xlu0 0
    %843 = vperm.xlu0 %842, %v401
    %v844 = vpop.permute.xlu0 %843
    %847 = vset.pattern.permute.xlu0 0
    %848 = vperm.xlu0 %847, %v402
    %v849 = vpop.permute.xlu0 %848
    %852 = vset.pattern.permute.xlu0 0
    %853 = vperm.xlu0 %852, %v403
    %v854 = vpop.permute.xlu0 %853
    %857 = vset.pattern.permute.xlu0 0
    %858 = vperm.xlu0 %857, %v404
    %v859 = vpop.permute.xlu0 %858
    %862 = vset.pattern.permute.xlu0 0
    %863 = vperm.xlu0 %862, %v405
    %v864 = vpop.permute.xlu0 %863
    %867 = vset.pattern.permute.xlu0 0
    %868 = vperm.xlu0 %867, %v406
    %v869 = vpop.permute.xlu0 %868
    %872 = vset.pattern.permute.xlu0 0
    %873 = vperm.xlu0 %872, %v407
    %v874 = vpop.permute.xlu0 %873
    %877 = vset.pattern.permute.xlu0 0
    %878 = vperm.xlu0 %877, %v408
    %v879 = vpop.permute.xlu0 %878
    %882 = vset.pattern.permute.xlu0 0
    %883 = vperm.xlu0 %882, %v409
    %v884 = vpop.permute.xlu0 %883
    %887 = vset.pattern.permute.xlu0 0
    %888 = vperm.xlu0 %887, %v410
    %v889 = vpop.permute.xlu0 %888
    %892 = vset.pattern.permute.xlu0 0
    %893 = vperm.xlu0 %892, %v411
    %v894 = vpop.permute.xlu0 %893
    %897 = vset.pattern.permute.xlu0 0
    %898 = vperm.xlu0 %897, %v412
    %v899 = vpop.permute.xlu0 %898
    %902 = vset.pattern.permute.xlu0 0
    %903 = vperm.xlu0 %902, %v413
    %v904 = vpop.permute.xlu0 %903
    %907 = vset.pattern.permute.xlu0 0
    %908 = vperm.xlu0 %907, %v414
    %v909 = vpop.permute.xlu0 %908
    %912 = vset.pattern.permute.xlu0 0
    %913 = vperm.xlu0 %912, %v415
    %v914 = vpop.permute.xlu0 %913
    %917 = vset.pattern.permute.xlu0 0
    %918 = vperm.xlu0 %917, %v416
    %v919 = vpop.permute.xlu0 %918
    %922 = vset.pattern.permute.xlu0 0
    %923 = vperm.xlu0 %922, %v417
    %v924 = vpop.permute.xlu0 %923
    %927 = vset.pattern.permute.xlu0 0
    %928 = vperm.xlu0 %927, %v418
    %v929 = vpop.permute.xlu0 %928
    %932 = vset.pattern.permute.xlu0 0
    %933 = vperm.xlu0 %932, %v419
    %v934 = vpop.permute.xlu0 %933
    %937 = vset.pattern.permute.xlu0 0
    %938 = vperm.xlu0 %937, %v420
    %v939 = vpop.permute.xlu0 %938
    %942 = vset.pattern.permute.xlu0 0
    %943 = vperm.xlu0 %942, %v421
    %v944 = vpop.permute.xlu0 %943
    %947 = vset.pattern.permute.xlu0 0
    %948 = vperm.xlu0 %947, %v422
    %v949 = vpop.permute.xlu0 %948
    %952 = vset.pattern.permute.xlu0 0
    %953 = vperm.xlu0 %952, %v423
    %v954 = vpop.permute.xlu0 %953
    %957 = vset.pattern.permute.xlu0 0
    %958 = vperm.xlu0 %957, %v424
    %v959 = vpop.permute.xlu0 %958
    %962 = vset.pattern.permute.xlu0 0
    %963 = vperm.xlu0 %962, %v425
    %v964 = vpop.permute.xlu0 %963
    %967 = vset.pattern.permute.xlu0 0
    %968 = vperm.xlu0 %967, %v426
    %v969 = vpop.permute.xlu0 %968
    %972 = vset.pattern.permute.xlu0 0
    %973 = vperm.xlu0 %972, %v427
    %v974 = vpop.permute.xlu0 %973
    %977 = vset.pattern.permute.xlu0 0
    %978 = vperm.xlu0 %977, %v428
    %v979 = vpop.permute.xlu0 %978
    %982 = vset.pattern.permute.xlu0 0
    %983 = vperm.xlu0 %982, %v429
    %v984 = vpop.permute.xlu0 %983
    %987 = vset.pattern.permute.xlu0 0
    %988 = vperm.xlu0 %987, %v430
    %v989 = vpop.permute.xlu0 %988
    %992 = vset.pattern.permute.xlu0 0
    %993 = vperm.xlu0 %992, %v431
    %v994 = vpop.permute.xlu0 %993
    %997 = vset.pattern.permute.xlu0 0
    %998 = vperm.xlu0 %997, %v432
    %v999 = vpop.permute.xlu0 %998
    %1002 = vset.pattern.permute.xlu0 0
    %1003 = vperm.xlu0 %1002, %v433
    %v1004 = vpop.permute.xlu0 %1003
    %1007 = vset.pattern.permute.xlu0 0
    %1008 = vperm.xlu0 %1007, %v434
    %v1009 = vpop.permute.xlu0 %1008
    %1012 = vset.pattern.permute.xlu0 0
    %1013 = vperm.xlu0 %1012, %v435
    %v1014 = vpop.permute.xlu0 %1013
    %1017 = vset.pattern.permute.xlu0 0
    %1018 = vperm.xlu0 %1017, %v436
    %v1019 = vpop.permute.xlu0 %1018
    %1022 = vset.pattern.permute.xlu0 0
    %1023 = vperm.xlu0 %1022, %v437
    %v1024 = vpop.permute.xlu0 %1023
    %1027 = vset.pattern.permute.xlu0 0
    %1028 = vperm.xlu0 %1027, %v438
    %v1029 = vpop.permute.xlu0 %1028
    %1032 = vset.pattern.permute.xlu0 0
    %1033 = vperm.xlu0 %1032, %v439
    %v1034 = vpop.permute.xlu0 %1033
    %1037 = vset.pattern.permute.xlu0 0
    %1038 = vperm.xlu0 %1037, %v440
    %v1039 = vpop.permute.xlu0 %1038
    %1042 = vset.pattern.permute.xlu0 0
    %1043 = vperm.xlu0 %1042, %v441
    %v1044 = vpop.permute.xlu0 %1043
    %1047 = vset.pattern.permute.xlu0 0
    %1048 = vperm.xlu0 %1047, %v442
    %v1049 = vpop.permute.xlu0 %1048
    %1052 = vset.pattern.permute.xlu0 0
    %1053 = vperm.xlu0 %1052, %v443
    %v1054 = vpop.permute.xlu0 %1053
    %1057 = vset.pattern.permute.xlu0 0
    %1058 = vperm.xlu0 %1057, %v444
    %v1059 = vpop.permute.xlu0 %1058
    %1062 = vset.pattern.permute.xlu0 0
    %1063 = vperm.xlu0 %1062, %v445
    %v1064 = vpop.permute.xlu0 %1063
    %1067 = vset.pattern.permute.xlu0 0
    %1068 = vperm.xlu0 %1067, %v446
    %v1069 = vpop.permute.xlu0 %1068
    %1072 = vset.pattern.permute.xlu0 0
    %1073 = vperm.xlu0 %1072, %v447
    %v1074 = vpop.permute.xlu0 %1073
    %1077 = vset.pattern.permute.xlu0 0
    %1078 = vperm.xlu0 %1077, %v448
    %v1079 = vpop.permute.xlu0 %1078
    %1082 = vset.pattern.permute.xlu0 0
    %1083 = vperm.xlu0 %1082, %v449
    %v1084 = vpop.permute.xlu0 %1083
    %1087 = vset.pattern.permute.xlu0 0
    %1088 = vperm.xlu0 %1087, %v450
    %v1089 = vpop.permute.xlu0 %1088
    %v1347 = vunpack.c.l.b16 %v34
    %v1348 = vunpack.c.h.b16 %v34
    %v1349 = vunpack.c.l.b16 %v35
    %v1350 = vunpack.c.l.b16 %v36
    %v1351 = vunpack.c.h.b16 %v36
    %v1352 = vunpack.c.l.b16 %v37
    %v1353 = vunpack.c.l.b16 %v38
    %v1354 = vunpack.c.h.b16 %v38
    %v1355 = vunpack.c.l.b16 %v39
    %v1356 = vunpack.c.l.b16 %v40
    %v1357 = vunpack.c.h.b16 %v40
    %v1358 = vunpack.c.l.b16 %v41
    %v1359 = vunpack.c.l.b16 %v42
    %v1360 = vunpack.c.h.b16 %v42
    %v1361 = vunpack.c.l.b16 %v43
    %v1362 = vunpack.c.l.b16 %v44
    %v1363 = vunpack.c.h.b16 %v44
    %v1364 = vunpack.c.l.b16 %v45
    %v1365 = vunpack.c.l.b16 %v46
    %v1366 = vunpack.c.h.b16 %v46
    %v1367 = vunpack.c.l.b16 %v47
    %v1368 = vunpack.c.l.b16 %v48
    %v1369 = vunpack.c.h.b16 %v48
    %v1370 = vunpack.c.l.b16 %v49
    %v1371 = vunpack.c.l.b16 %v50
    %v1372 = vunpack.c.h.b16 %v50
    %v1373 = vunpack.c.l.b16 %v51
    %v1374 = vunpack.c.l.b16 %v52
    %v1375 = vunpack.c.h.b16 %v52
    %v1376 = vunpack.c.l.b16 %v53
    %v1377 = vunpack.c.l.b16 %v54
    %v1378 = vunpack.c.h.b16 %v54
    %v1379 = vunpack.c.l.b16 %v55
    %v1380 = vunpack.c.l.b16 %v56
    %v1381 = vunpack.c.h.b16 %v56
    %v1382 = vunpack.c.l.b16 %v57
    %v1383 = vunpack.c.l.b16 %v58
    %v1384 = vunpack.c.h.b16 %v58
    %v1385 = vunpack.c.l.b16 %v59
    %v1386 = vunpack.c.l.b16 %v60
    %v1387 = vunpack.c.h.b16 %v60
    %v1388 = vunpack.c.l.b16 %v61
    %v1389 = vunpack.c.l.b16 %v62
    %v1390 = vunpack.c.h.b16 %v62
    %v1391 = vunpack.c.l.b16 %v63
    %v1392 = vunpack.c.l.b16 %v64
    %v1393 = vunpack.c.h.b16 %v64
    %v1394 = vunpack.c.l.b16 %v65
    %v1395 = vunpack.c.l.b16 %v66
    %v1396 = vunpack.c.h.b16 %v66
    %v1397 = vunpack.c.l.b16 %v67
    %v1398 = vunpack.c.l.b16 %v68
    %v1399 = vunpack.c.h.b16 %v68
    %v1400 = vunpack.c.l.b16 %v69
    %v1401 = vunpack.c.l.b16 %v70
    %v1402 = vunpack.c.h.b16 %v70
    %v1403 = vunpack.c.l.b16 %v71
    %v1404 = vunpack.c.l.b16 %v72
    %v1405 = vunpack.c.h.b16 %v72
    %v1406 = vunpack.c.l.b16 %v73
    %v1407 = vunpack.c.l.b16 %v74
    %v1408 = vunpack.c.h.b16 %v74
    %v1409 = vunpack.c.l.b16 %v75
    %v1410 = vunpack.c.l.b16 %v76
    %v1411 = vunpack.c.h.b16 %v76
    %v1412 = vunpack.c.l.b16 %v77
    %v1413 = vunpack.c.l.b16 %v78
    %v1414 = vunpack.c.h.b16 %v78
    %v1415 = vunpack.c.l.b16 %v79
    %v1416 = vunpack.c.l.b16 %v80
    %v1417 = vunpack.c.h.b16 %v80
    %v1418 = vunpack.c.l.b16 %v81
    %v1419 = vunpack.c.l.b16 %v82
    %v1420 = vunpack.c.h.b16 %v82
    %v1421 = vunpack.c.l.b16 %v83
    %v1422 = vunpack.c.l.b16 %v84
    %v1423 = vunpack.c.h.b16 %v84
    %v1424 = vunpack.c.l.b16 %v85
    %v1425 = vunpack.c.l.b16 %v86
    %v1426 = vunpack.c.h.b16 %v86
    %v1427 = vunpack.c.l.b16 %v87
    %v1428 = vunpack.c.l.b16 %v88
    %v1429 = vunpack.c.h.b16 %v88
    %v1430 = vunpack.c.l.b16 %v89
    %v1431 = vunpack.c.l.b16 %v90
    %v1432 = vunpack.c.h.b16 %v90
    %v1433 = vunpack.c.l.b16 %v91
    %v1434 = vunpack.c.l.b16 %v92
    %v1435 = vunpack.c.h.b16 %v92
    %v1436 = vunpack.c.l.b16 %v93
    %v1437 = vunpack.c.l.b16 %v94
    %v1438 = vunpack.c.h.b16 %v94
    %v1439 = vunpack.c.l.b16 %v95
    %v1440 = vunpack.c.l.b16 %v96
    %v1441 = vunpack.c.h.b16 %v96
    %v1442 = vunpack.c.l.b16 %v97
    %v1443 = vunpack.c.l.b16 %v98
    %v1444 = vunpack.c.h.b16 %v98
    %v1445 = vunpack.c.l.b16 %v99
    %v1446 = vunpack.c.l.b16 %v100
    %v1447 = vunpack.c.h.b16 %v100
    %v1448 = vunpack.c.l.b16 %v101
    %v1449 = vunpack.c.l.b16 %v102
    %v1450 = vunpack.c.h.b16 %v102
    %v1451 = vunpack.c.l.b16 %v103
    %v1452 = vunpack.c.l.b16 %v104
    %v1453 = vunpack.c.h.b16 %v104
    %v1454 = vunpack.c.l.b16 %v105
    %v1455 = vunpack.c.l.b16 %v106
    %v1456 = vunpack.c.h.b16 %v106
    %v1457 = vunpack.c.l.b16 %v107
    %v1458 = vunpack.c.l.b16 %v108
    %v1459 = vunpack.c.h.b16 %v108
    %v1460 = vunpack.c.l.b16 %v109
    %v1461 = vunpack.c.l.b16 %v110
    %v1462 = vunpack.c.h.b16 %v110
    %v1463 = vunpack.c.l.b16 %v111
    %v1464 = vunpack.c.l.b16 %v112
    %v1465 = vunpack.c.h.b16 %v112
    %v1466 = vunpack.c.l.b16 %v113
    %v1467 = vunpack.c.l.b16 %v114
    %v1468 = vunpack.c.h.b16 %v114
    %v1469 = vunpack.c.l.b16 %v115
    %v1470 = vunpack.c.l.b16 %v116
    %v1471 = vunpack.c.h.b16 %v116
    %v1472 = vunpack.c.l.b16 %v117
    %v1473 = vunpack.c.l.b16 %v118
    %v1474 = vunpack.c.h.b16 %v118
    %v1475 = vunpack.c.l.b16 %v119
    %v1476 = vunpack.c.l.b16 %v120
    %v1477 = vunpack.c.h.b16 %v120
    %v1478 = vunpack.c.l.b16 %v121
    %v1479 = vunpack.c.l.b16 %v122
    %v1480 = vunpack.c.h.b16 %v122
    %v1481 = vunpack.c.l.b16 %v123
    %v1482 = vunpack.c.l.b16 %v124
    %v1483 = vunpack.c.h.b16 %v124
    %v1484 = vunpack.c.l.b16 %v125
    %v1485 = vunpack.c.l.b16 %v126
    %v1486 = vunpack.c.h.b16 %v126
    %v1487 = vunpack.c.l.b16 %v127
    %v1488 = vunpack.c.l.b16 %v128
    %v1489 = vunpack.c.h.b16 %v128
    %v1490 = vunpack.c.l.b16 %v129
    %v1491 = vunpack.c.l.b16 %v130
    %v1492 = vunpack.c.h.b16 %v130
    %v1493 = vunpack.c.l.b16 %v131
    %v1494 = vunpack.c.l.b16 %v132
    %v1495 = vunpack.c.h.b16 %v132
    %v1496 = vunpack.c.l.b16 %v133
    %v1497 = vunpack.c.l.b16 %v134
    %v1498 = vunpack.c.h.b16 %v134
    %v1499 = vunpack.c.l.b16 %v135
    %v1500 = vunpack.c.l.b16 %v136
    %v1501 = vunpack.c.h.b16 %v136
    %v1502 = vunpack.c.l.b16 %v137
    %v1503 = vunpack.c.l.b16 %v138
    %v1504 = vunpack.c.h.b16 %v138
    %v1505 = vunpack.c.l.b16 %v139
    %v1506 = vunpack.c.l.b16 %v140
    %v1507 = vunpack.c.h.b16 %v140
    %v1508 = vunpack.c.l.b16 %v141
    %v1509 = vunpack.c.l.b16 %v142
    %v1510 = vunpack.c.h.b16 %v142
    %v1511 = vunpack.c.l.b16 %v143
    %v1512 = vunpack.c.l.b16 %v144
    %v1513 = vunpack.c.h.b16 %v144
    %v1514 = vunpack.c.l.b16 %v145
    %v1515 = vunpack.c.l.b16 %v146
    %v1516 = vunpack.c.h.b16 %v146
    %v1517 = vunpack.c.l.b16 %v147
    %v1518 = vunpack.c.l.b16 %v148
    %v1519 = vunpack.c.h.b16 %v148
    %v1520 = vunpack.c.l.b16 %v149
    %v1521 = vunpack.c.l.b16 %v150
    %v1522 = vunpack.c.h.b16 %v150
    %v1523 = vunpack.c.l.b16 %v151
    %v1524 = vunpack.c.l.b16 %v152
    %v1525 = vunpack.c.h.b16 %v152
    %v1526 = vunpack.c.l.b16 %v153
    %v1527 = vunpack.c.l.b16 %v154
    %v1528 = vunpack.c.h.b16 %v154
    %v1529 = vunpack.c.l.b16 %v155
    %v1530 = vunpack.c.l.b16 %v156
    %v1531 = vunpack.c.h.b16 %v156
    %v1532 = vunpack.c.l.b16 %v157
    %v1533 = vunpack.c.l.b16 %v158
    %v1534 = vunpack.c.h.b16 %v158
    %v1535 = vunpack.c.l.b16 %v159
    %v1536 = vunpack.c.l.b16 %v160
    %v1537 = vunpack.c.h.b16 %v160
    %v1538 = vunpack.c.l.b16 %v161
    %v1539 = vunpack.c.l.b16 %v162
    %v1540 = vunpack.c.h.b16 %v162
    %v1541 = vunpack.c.l.b16 %v163
    %v1542 = vunpack.c.l.b16 %v164
    %v1543 = vunpack.c.h.b16 %v164
    %v1544 = vunpack.c.l.b16 %v165
    %v1545 = vunpack.c.l.b16 %v166
    %v1546 = vunpack.c.h.b16 %v166
    %v1547 = vunpack.c.l.b16 %v167
    %v1548 = vunpack.c.l.b16 %v168
    %v1549 = vunpack.c.h.b16 %v168
    %v1550 = vunpack.c.l.b16 %v169
    %v1551 = vunpack.c.l.b16 %v170
    %v1552 = vunpack.c.h.b16 %v170
    %v1553 = vunpack.c.l.b16 %v171
    %v1554 = vunpack.c.l.b16 %v172
    %v1555 = vunpack.c.h.b16 %v172
    %v1556 = vunpack.c.l.b16 %v173
    %v1557 = vunpack.c.l.b16 %v174
    %v1558 = vunpack.c.h.b16 %v174
    %v1559 = vunpack.c.l.b16 %v175
    %v1560 = vunpack.c.l.b16 %v176
    %v1561 = vunpack.c.h.b16 %v176
    %v1562 = vunpack.c.l.b16 %v177
    %v1563 = vunpack.c.l.b16 %v178
    %v1564 = vunpack.c.h.b16 %v178
    %v1565 = vunpack.c.l.b16 %v179
    %v1566 = vunpack.c.l.b16 %v180
    %v1567 = vunpack.c.h.b16 %v180
    %v1568 = vunpack.c.l.b16 %v181
    %v1569 = vunpack.c.l.b16 %v182
    %v1570 = vunpack.c.h.b16 %v182
    %v1571 = vunpack.c.l.b16 %v183
    %v1572 = vunpack.c.l.b16 %v184
    %v1573 = vunpack.c.h.b16 %v184
    %v1574 = vunpack.c.l.b16 %v185
    %v1575 = vunpack.c.l.b16 %v186
    %v1576 = vunpack.c.h.b16 %v186
    %v1577 = vunpack.c.l.b16 %v187
    %v1578 = vunpack.c.l.b16 %v188
    %v1579 = vunpack.c.h.b16 %v188
    %v1580 = vunpack.c.l.b16 %v189
    %v1581 = vunpack.c.l.b16 %v190
    %v1582 = vunpack.c.h.b16 %v190
    %v1583 = vunpack.c.l.b16 %v191
    %v1584 = vunpack.c.l.b16 %v192
    %v1585 = vunpack.c.h.b16 %v192
    %v1586 = vunpack.c.l.b16 %v193
    %v1587 = vunpack.c.l.b16 %v194
    %v1588 = vunpack.c.h.b16 %v194
    %v1589 = vunpack.c.l.b16 %v195
    %v1590 = vunpack.c.l.b16 %v196
    %v1591 = vunpack.c.h.b16 %v196
    %v1592 = vunpack.c.l.b16 %v197
    %v1593 = vunpack.c.l.b16 %v198
    %v1594 = vunpack.c.h.b16 %v198
    %v1595 = vunpack.c.l.b16 %v199
    %v1596 = vunpack.c.l.b16 %v200
    %v1597 = vunpack.c.h.b16 %v200
    %v1598 = vunpack.c.l.b16 %v201
    %v1599 = vunpack.c.l.b16 %v202
    %v1600 = vunpack.c.h.b16 %v202
    %v1601 = vunpack.c.l.b16 %v203
    %v1602 = vunpack.c.l.b16 %v204
    %v1603 = vunpack.c.h.b16 %v204
    %v1604 = vunpack.c.l.b16 %v205
    %v1605 = vunpack.c.l.b16 %v206
    %v1606 = vunpack.c.h.b16 %v206
    %v1607 = vunpack.c.l.b16 %v207
    %v1608 = vunpack.c.l.b16 %v208
    %v1609 = vunpack.c.h.b16 %v208
    %v1610 = vunpack.c.l.b16 %v209
    %v1611 = vunpack.c.l.b16 %v210
    %v1612 = vunpack.c.h.b16 %v210
    %v1613 = vunpack.c.l.b16 %v211
    %v1614 = vunpack.c.l.b16 %v212
    %v1615 = vunpack.c.h.b16 %v212
    %v1616 = vunpack.c.l.b16 %v213
    %v1617 = vunpack.c.l.b16 %v214
    %v1618 = vunpack.c.h.b16 %v214
    %v1619 = vunpack.c.l.b16 %v215
    %v1620 = vunpack.c.l.b16 %v216
    %v1621 = vunpack.c.h.b16 %v216
    %v1622 = vunpack.c.l.b16 %v217
    %v1623 = vunpack.c.l.b16 %v218
    %v1624 = vunpack.c.h.b16 %v218
    %v1625 = vunpack.c.l.b16 %v219
    %v1626 = vunpack.c.l.b16 %v220
    %v1627 = vunpack.c.h.b16 %v220
    %v1628 = vunpack.c.l.b16 %v221
    %v1629 = vunpack.c.l.b16 %v222
    %v1630 = vunpack.c.h.b16 %v222
    %v1631 = vunpack.c.l.b16 %v223
    %v1632 = vunpack.c.l.b16 %v224
    %v1633 = vunpack.c.h.b16 %v224
    %v1634 = vunpack.c.l.b16 %v225
    %v1635 = vunpack.c.l.b16 %v226
    %v1636 = vunpack.c.h.b16 %v226
    %v1637 = vunpack.c.l.b16 %v227
    %v1638 = vunpack.c.l.b16 %v228
    %v1639 = vunpack.c.h.b16 %v228
    %v1640 = vunpack.c.l.b16 %v229
    %v1641 = vunpack.c.l.b16 %v230
    %v1642 = vunpack.c.h.b16 %v230
    %v1643 = vunpack.c.l.b16 %v231
    %v1644 = vunpack.c.l.b16 %v232
    %v1645 = vunpack.c.h.b16 %v232
    %v1646 = vunpack.c.l.b16 %v233
    %v1647 = vunpack.c.l.b16 %v234
    %v1648 = vunpack.c.h.b16 %v234
    %v1649 = vunpack.c.l.b16 %v235
    %v1650 = vunpack.c.l.b16 %v236
    %v1651 = vunpack.c.h.b16 %v236
    %v1652 = vunpack.c.l.b16 %v237
    %v1653 = vunpack.c.l.b16 %v238
    %v1654 = vunpack.c.h.b16 %v238
    %v1655 = vunpack.c.l.b16 %v239
    %v1656 = vunpack.c.l.b16 %v240
    %v1657 = vunpack.c.h.b16 %v240
    %v1658 = vunpack.c.l.b16 %v241
    %v1659 = vunpack.c.l.b16 %v242
    %v1660 = vunpack.c.h.b16 %v242
    %v1661 = vunpack.c.l.b16 %v243
    %v1662 = vunpack.c.l.b16 %v244
    %v1663 = vunpack.c.h.b16 %v244
    %v1664 = vunpack.c.l.b16 %v245
    %v1665 = vunpack.c.l.b16 %v246
    %v1666 = vunpack.c.h.b16 %v246
    %v1667 = vunpack.c.l.b16 %v247
    %v1668 = vunpack.c.l.b16 %v248
    %v1669 = vunpack.c.h.b16 %v248
    %v1670 = vunpack.c.l.b16 %v249
    %v1671 = vunpack.c.l.b16 %v250
    %v1672 = vunpack.c.h.b16 %v250
    %v1673 = vunpack.c.l.b16 %v251
    %v1674 = vunpack.c.l.b16 %v252
    %v1675 = vunpack.c.h.b16 %v252
    %v1676 = vunpack.c.l.b16 %v253
    %v1677 = vunpack.c.l.b16 %v254
    %v1678 = vunpack.c.h.b16 %v254
    %v1679 = vunpack.c.l.b16 %v255
    %v1680 = vunpack.c.l.b16 %v256
    %v1681 = vunpack.c.h.b16 %v256
    %v1682 = vunpack.c.l.b16 %v257
    %v1683 = vunpack.c.l.b16 %v258
    %v1684 = vunpack.c.h.b16 %v258
    %v1685 = vunpack.c.l.b16 %v259
    %v1686 = vunpack.c.l.b16 %v260
    %v1687 = vunpack.c.h.b16 %v260
    %v1688 = vunpack.c.l.b16 %v261
    %v1689 = vunpack.c.l.b16 %v262
    %v1690 = vunpack.c.h.b16 %v262
    %v1691 = vunpack.c.l.b16 %v263
    %v1692 = vunpack.c.l.b16 %v264
    %v1693 = vunpack.c.h.b16 %v264
    %v1694 = vunpack.c.l.b16 %v265
    %v1695 = vunpack.c.l.b16 %v266
    %v1696 = vunpack.c.h.b16 %v266
    %v1697 = vunpack.c.l.b16 %v267
    %v1698 = vunpack.c.l.b16 %v268
    %v1699 = vunpack.c.h.b16 %v268
    %v1700 = vunpack.c.l.b16 %v269
    %v1701 = vunpack.c.l.b16 %v270
    %v1702 = vunpack.c.h.b16 %v270
    %v1703 = vunpack.c.l.b16 %v271
    %v1704 = vunpack.c.l.b16 %v272
    %v1705 = vunpack.c.h.b16 %v272
    %v1706 = vunpack.c.l.b16 %v273
    %v1707 = vunpack.c.l.b16 %v274
    %v1708 = vunpack.c.h.b16 %v274
    %v1709 = vunpack.c.l.b16 %v275
    %v1710 = vunpack.c.l.b16 %v276
    %v1711 = vunpack.c.h.b16 %v276
    %v1712 = vunpack.c.l.b16 %v277
    %v1713 = vunpack.c.l.b16 %v278
    %v1714 = vunpack.c.h.b16 %v278
    %v1715 = vunpack.c.l.b16 %v279
    %v1716 = vunpack.c.l.b16 %v280
    %v1717 = vunpack.c.h.b16 %v280
    %v1718 = vunpack.c.l.b16 %v281
    %v1719 = vunpack.c.l.b16 %v282
    %v1720 = vunpack.c.h.b16 %v282
    %v1721 = vunpack.c.l.b16 %v283
    %v1722 = vunpack.c.l.b16 %v284
    %v1723 = vunpack.c.h.b16 %v284
    %v1724 = vunpack.c.l.b16 %v285
    %v1725 = vunpack.c.l.b16 %v286
    %v1726 = vunpack.c.h.b16 %v286
    %v1727 = vunpack.c.l.b16 %v287
    %v1728 = vunpack.c.l.b16 %v288
    %v1729 = vunpack.c.h.b16 %v288
    %v1730 = vunpack.c.l.b16 %v289
    %v1731 = vpack.c.b16 %v1350, %v1347
    %v1732 = vpack.c.b16 %v1351, %v1348
    %v1733 = vpack.c.b16 %v1352, %v1349
    %v1734 = vpack.c.b16 %v1356, %v1353
    %v1735 = vpack.c.b16 %v1357, %v1354
    %v1736 = vpack.c.b16 %v1358, %v1355
    %v1737 = vpack.c.b16 %v1362, %v1359
    %v1738 = vpack.c.b16 %v1363, %v1360
    %v1739 = vpack.c.b16 %v1364, %v1361
    %v1740 = vpack.c.b16 %v1368, %v1365
    %v1741 = vpack.c.b16 %v1369, %v1366
    %v1742 = vpack.c.b16 %v1370, %v1367
    %v1743 = vpack.c.b16 %v1374, %v1371
    %v1744 = vpack.c.b16 %v1375, %v1372
    %v1745 = vpack.c.b16 %v1376, %v1373
    %v1746 = vpack.c.b16 %v1380, %v1377
    %v1747 = vpack.c.b16 %v1381, %v1378
    %v1748 = vpack.c.b16 %v1382, %v1379
    %v1749 = vpack.c.b16 %v1386, %v1383
    %v1750 = vpack.c.b16 %v1387, %v1384
    %v1751 = vpack.c.b16 %v1388, %v1385
    %v1752 = vpack.c.b16 %v1392, %v1389
    %v1753 = vpack.c.b16 %v1393, %v1390
    %v1754 = vpack.c.b16 %v1394, %v1391
    %v1755 = vpack.c.b16 %v1398, %v1395
    %v1756 = vpack.c.b16 %v1399, %v1396
    %v1757 = vpack.c.b16 %v1400, %v1397
    %v1758 = vpack.c.b16 %v1404, %v1401
    %v1759 = vpack.c.b16 %v1405, %v1402
    %v1760 = vpack.c.b16 %v1406, %v1403
    %v1761 = vpack.c.b16 %v1410, %v1407
    %v1762 = vpack.c.b16 %v1411, %v1408
    %v1763 = vpack.c.b16 %v1412, %v1409
    %v1764 = vpack.c.b16 %v1416, %v1413
    %v1765 = vpack.c.b16 %v1417, %v1414
    %v1766 = vpack.c.b16 %v1418, %v1415
    %v1767 = vpack.c.b16 %v1422, %v1419
    %v1768 = vpack.c.b16 %v1423, %v1420
    %v1769 = vpack.c.b16 %v1424, %v1421
    %v1770 = vpack.c.b16 %v1428, %v1425
    %v1771 = vpack.c.b16 %v1429, %v1426
    %v1772 = vpack.c.b16 %v1430, %v1427
    %v1773 = vpack.c.b16 %v1434, %v1431
    %v1774 = vpack.c.b16 %v1435, %v1432
    %v1775 = vpack.c.b16 %v1436, %v1433
    %v1776 = vpack.c.b16 %v1440, %v1437
    %v1777 = vpack.c.b16 %v1441, %v1438
    %v1778 = vpack.c.b16 %v1442, %v1439
    %v1779 = vpack.c.b16 %v1446, %v1443
    %v1780 = vpack.c.b16 %v1447, %v1444
    %v1781 = vpack.c.b16 %v1448, %v1445
    %v1782 = vpack.c.b16 %v1452, %v1449
    %v1783 = vpack.c.b16 %v1453, %v1450
    %v1784 = vpack.c.b16 %v1454, %v1451
    %v1785 = vpack.c.b16 %v1458, %v1455
    %v1786 = vpack.c.b16 %v1459, %v1456
    %v1787 = vpack.c.b16 %v1460, %v1457
    %v1788 = vpack.c.b16 %v1464, %v1461
    %v1789 = vpack.c.b16 %v1465, %v1462
    %v1790 = vpack.c.b16 %v1466, %v1463
    %v1791 = vpack.c.b16 %v1470, %v1467
    %v1792 = vpack.c.b16 %v1471, %v1468
    %v1793 = vpack.c.b16 %v1472, %v1469
    %v1794 = vpack.c.b16 %v1476, %v1473
    %v1795 = vpack.c.b16 %v1477, %v1474
    %v1796 = vpack.c.b16 %v1478, %v1475
    %v1797 = vpack.c.b16 %v1482, %v1479
    %v1798 = vpack.c.b16 %v1483, %v1480
    %v1799 = vpack.c.b16 %v1484, %v1481
    %v1800 = vpack.c.b16 %v1488, %v1485
    %v1801 = vpack.c.b16 %v1489, %v1486
    %v1802 = vpack.c.b16 %v1490, %v1487
    %v1803 = vpack.c.b16 %v1494, %v1491
    %v1804 = vpack.c.b16 %v1495, %v1492
    %v1805 = vpack.c.b16 %v1496, %v1493
    %v1806 = vpack.c.b16 %v1500, %v1497
    %v1807 = vpack.c.b16 %v1501, %v1498
    %v1808 = vpack.c.b16 %v1502, %v1499
    %v1809 = vpack.c.b16 %v1506, %v1503
    %v1810 = vpack.c.b16 %v1507, %v1504
    %v1811 = vpack.c.b16 %v1508, %v1505
    %v1812 = vpack.c.b16 %v1512, %v1509
    %v1813 = vpack.c.b16 %v1513, %v1510
    %v1814 = vpack.c.b16 %v1514, %v1511
    %v1815 = vpack.c.b16 %v1518, %v1515
    %v1816 = vpack.c.b16 %v1519, %v1516
    %v1817 = vpack.c.b16 %v1520, %v1517
    %v1818 = vpack.c.b16 %v1524, %v1521
    %v1819 = vpack.c.b16 %v1525, %v1522
    %v1820 = vpack.c.b16 %v1526, %v1523
    %v1821 = vpack.c.b16 %v1530, %v1527
    %v1822 = vpack.c.b16 %v1531, %v1528
    %v1823 = vpack.c.b16 %v1532, %v1529
    %v1824 = vpack.c.b16 %v1536, %v1533
    %v1825 = vpack.c.b16 %v1537, %v1534
    %v1826 = vpack.c.b16 %v1538, %v1535
    %v1827 = vpack.c.b16 %v1542, %v1539
    %v1828 = vpack.c.b16 %v1543, %v1540
    %v1829 = vpack.c.b16 %v1544, %v1541
    %v1830 = vpack.c.b16 %v1548, %v1545
    %v1831 = vpack.c.b16 %v1549, %v1546
    %v1832 = vpack.c.b16 %v1550, %v1547
    %v1833 = vpack.c.b16 %v1554, %v1551
    %v1834 = vpack.c.b16 %v1555, %v1552
    %v1835 = vpack.c.b16 %v1556, %v1553
    %v1836 = vpack.c.b16 %v1560, %v1557
    %v1837 = vpack.c.b16 %v1561, %v1558
    %v1838 = vpack.c.b16 %v1562, %v1559
    %v1839 = vpack.c.b16 %v1566, %v1563
    %v1840 = vpack.c.b16 %v1567, %v1564
    %v1841 = vpack.c.b16 %v1568, %v1565
    %v1842 = vpack.c.b16 %v1572, %v1569
    %v1843 = vpack.c.b16 %v1573, %v1570
    %v1844 = vpack.c.b16 %v1574, %v1571
    %v1845 = vpack.c.b16 %v1578, %v1575
    %v1846 = vpack.c.b16 %v1579, %v1576
    %v1847 = vpack.c.b16 %v1580, %v1577
    %v1848 = vpack.c.b16 %v1584, %v1581
    %v1849 = vpack.c.b16 %v1585, %v1582
    %v1850 = vpack.c.b16 %v1586, %v1583
    %v1851 = vpack.c.b16 %v1590, %v1587
    %v1852 = vpack.c.b16 %v1591, %v1588
    %v1853 = vpack.c.b16 %v1592, %v1589
    %v1854 = vpack.c.b16 %v1596, %v1593
    %v1855 = vpack.c.b16 %v1597, %v1594
    %v1856 = vpack.c.b16 %v1598, %v1595
    %v1857 = vpack.c.b16 %v1602, %v1599
    %v1858 = vpack.c.b16 %v1603, %v1600
    %v1859 = vpack.c.b16 %v1604, %v1601
    %v1860 = vpack.c.b16 %v1608, %v1605
    %v1861 = vpack.c.b16 %v1609, %v1606
    %v1862 = vpack.c.b16 %v1610, %v1607
    %v1863 = vpack.c.b16 %v1614, %v1611
    %v1864 = vpack.c.b16 %v1615, %v1612
    %v1865 = vpack.c.b16 %v1616, %v1613
    %v1866 = vpack.c.b16 %v1620, %v1617
    %v1867 = vpack.c.b16 %v1621, %v1618
    %v1868 = vpack.c.b16 %v1622, %v1619
    %v1869 = vpack.c.b16 %v1626, %v1623
    %v1870 = vpack.c.b16 %v1627, %v1624
    %v1871 = vpack.c.b16 %v1628, %v1625
    %v1872 = vpack.c.b16 %v1632, %v1629
    %v1873 = vpack.c.b16 %v1633, %v1630
    %v1874 = vpack.c.b16 %v1634, %v1631
    %v1875 = vpack.c.b16 %v1638, %v1635
    %v1876 = vpack.c.b16 %v1639, %v1636
    %v1877 = vpack.c.b16 %v1640, %v1637
    %v1878 = vpack.c.b16 %v1644, %v1641
    %v1879 = vpack.c.b16 %v1645, %v1642
    %v1880 = vpack.c.b16 %v1646, %v1643
    %v1881 = vpack.c.b16 %v1650, %v1647
    %v1882 = vpack.c.b16 %v1651, %v1648
    %v1883 = vpack.c.b16 %v1652, %v1649
    %v1884 = vpack.c.b16 %v1656, %v1653
    %v1885 = vpack.c.b16 %v1657, %v1654
    %v1886 = vpack.c.b16 %v1658, %v1655
    %v1887 = vpack.c.b16 %v1662, %v1659
    %v1888 = vpack.c.b16 %v1663, %v1660
    %v1889 = vpack.c.b16 %v1664, %v1661
    %v1890 = vpack.c.b16 %v1668, %v1665
    %v1891 = vpack.c.b16 %v1669, %v1666
    %v1892 = vpack.c.b16 %v1670, %v1667
    %v1893 = vpack.c.b16 %v1674, %v1671
    %v1894 = vpack.c.b16 %v1675, %v1672
    %v1895 = vpack.c.b16 %v1676, %v1673
    %v1896 = vpack.c.b16 %v1680, %v1677
    %v1897 = vpack.c.b16 %v1681, %v1678
    %v1898 = vpack.c.b16 %v1682, %v1679
    %v1899 = vpack.c.b16 %v1686, %v1683
    %v1900 = vpack.c.b16 %v1687, %v1684
    %v1901 = vpack.c.b16 %v1688, %v1685
    %v1902 = vpack.c.b16 %v1692, %v1689
    %v1903 = vpack.c.b16 %v1693, %v1690
    %v1904 = vpack.c.b16 %v1694, %v1691
    %v1905 = vpack.c.b16 %v1698, %v1695
    %v1906 = vpack.c.b16 %v1699, %v1696
    %v1907 = vpack.c.b16 %v1700, %v1697
    %v1908 = vpack.c.b16 %v1704, %v1701
    %v1909 = vpack.c.b16 %v1705, %v1702
    %v1910 = vpack.c.b16 %v1706, %v1703
    %v1911 = vpack.c.b16 %v1710, %v1707
    %v1912 = vpack.c.b16 %v1711, %v1708
    %v1913 = vpack.c.b16 %v1712, %v1709
    %v1914 = vpack.c.b16 %v1716, %v1713
    %v1915 = vpack.c.b16 %v1717, %v1714
    %v1916 = vpack.c.b16 %v1718, %v1715
    %v1917 = vpack.c.b16 %v1722, %v1719
    %v1918 = vpack.c.b16 %v1723, %v1720
    %v1919 = vpack.c.b16 %v1724, %v1721
    %v1920 = vpack.c.b16 %v1728, %v1725
    %v1921 = vpack.c.b16 %v1729, %v1726
    %v1922 = vpack.c.b16 %v1730, %v1727
    %v2084 = vunpack.c.l.b16 %v290
    %v2085 = vunpack.c.h.b16 %v290
    %v2086 = vunpack.c.l.b16 %v291
    %v2087 = vunpack.c.h.b16 %v291
    %v2088 = vunpack.c.l.b16 %v292
    %v2089 = vunpack.c.h.b16 %v292
    %v2090 = vunpack.c.l.b16 %v293
    %v2091 = vunpack.c.h.b16 %v293
    %v2092 = vunpack.c.l.b16 %v294
    %v2093 = vunpack.c.h.b16 %v294
    %v2094 = vunpack.c.l.b16 %v295
    %v2095 = vunpack.c.h.b16 %v295
    %v2096 = vunpack.c.l.b16 %v296
    %v2097 = vunpack.c.h.b16 %v296
    %v2098 = vunpack.c.l.b16 %v297
    %v2099 = vunpack.c.h.b16 %v297
    %v2100 = vunpack.c.l.b16 %v298
    %v2101 = vunpack.c.h.b16 %v298
    %v2102 = vunpack.c.l.b16 %v299
    %v2103 = vunpack.c.h.b16 %v299
    %v2104 = vunpack.c.l.b16 %v300
    %v2105 = vunpack.c.h.b16 %v300
    %v2106 = vunpack.c.l.b16 %v301
    %v2107 = vunpack.c.h.b16 %v301
    %v2108 = vunpack.c.l.b16 %v302
    %v2109 = vunpack.c.h.b16 %v302
    %v2110 = vunpack.c.l.b16 %v303
    %v2111 = vunpack.c.h.b16 %v303
    %v2112 = vunpack.c.l.b16 %v304
    %v2113 = vunpack.c.h.b16 %v304
    %v2114 = vunpack.c.l.b16 %v305
    %v2115 = vunpack.c.h.b16 %v305
    %v2116 = vunpack.c.l.b16 %v306
    %v2117 = vunpack.c.h.b16 %v306
    %v2118 = vunpack.c.l.b16 %v307
    %v2119 = vunpack.c.h.b16 %v307
    %v2120 = vunpack.c.l.b16 %v308
    %v2121 = vunpack.c.h.b16 %v308
    %v2122 = vunpack.c.l.b16 %v309
    %v2123 = vunpack.c.h.b16 %v309
    %v2124 = vunpack.c.l.b16 %v310
    %v2125 = vunpack.c.h.b16 %v310
    %v2126 = vunpack.c.l.b16 %v311
    %v2127 = vunpack.c.h.b16 %v311
    %v2128 = vunpack.c.l.b16 %v312
    %v2129 = vunpack.c.h.b16 %v312
    %v2130 = vunpack.c.l.b16 %v313
    %v2131 = vunpack.c.h.b16 %v313
    %v2132 = vunpack.c.l.b16 %v314
    %v2133 = vunpack.c.h.b16 %v314
    %v2134 = vunpack.c.l.b16 %v315
    %v2135 = vunpack.c.h.b16 %v315
    %v2136 = vunpack.c.l.b16 %v316
    %v2137 = vunpack.c.h.b16 %v316
    %v2138 = vunpack.c.l.b16 %v317
    %v2139 = vunpack.c.h.b16 %v317
    %v2140 = vunpack.c.l.b16 %v318
    %v2141 = vunpack.c.h.b16 %v318
    %v2142 = vunpack.c.l.b16 %v319
    %v2143 = vunpack.c.h.b16 %v319
    %v2144 = vunpack.c.l.b16 %v320
    %v2145 = vunpack.c.h.b16 %v320
    %v2146 = vunpack.c.l.b16 %v321
    %v2147 = vunpack.c.h.b16 %v321
    %v2148 = vunpack.c.l.b16 %v322
    %v2149 = vunpack.c.h.b16 %v322
    %v2150 = vpack.c.b16 %v2086, %v2084
    %v2151 = vpack.c.b16 %v2087, %v2085
    %v2152 = vpack.c.b16 %v2090, %v2088
    %v2153 = vpack.c.b16 %v2091, %v2089
    %v2154 = vpack.c.b16 %v2094, %v2092
    %v2155 = vpack.c.b16 %v2095, %v2093
    %v2156 = vpack.c.b16 %v2098, %v2096
    %v2157 = vpack.c.b16 %v2099, %v2097
    %v2158 = vpack.c.b16 %v2102, %v2100
    %v2159 = vpack.c.b16 %v2103, %v2101
    %v2160 = vpack.c.b16 %v2106, %v2104
    %v2161 = vpack.c.b16 %v2107, %v2105
    %v2162 = vpack.c.b16 %v2110, %v2108
    %v2163 = vpack.c.b16 %v2111, %v2109
    %v2164 = vpack.c.b16 %v2114, %v2112
    %v2165 = vpack.c.b16 %v2115, %v2113
    %v2166 = vpack.c.b16 %v2118, %v2116
    %v2167 = vpack.c.b16 %v2119, %v2117
    %v2168 = vpack.c.b16 %v2122, %v2120
    %v2169 = vpack.c.b16 %v2123, %v2121
    %v2170 = vpack.c.b16 %v2126, %v2124
    %v2171 = vpack.c.b16 %v2127, %v2125
    %v2172 = vpack.c.b16 %v2130, %v2128
    %v2173 = vpack.c.b16 %v2131, %v2129
    %v2174 = vpack.c.b16 %v2134, %v2132
    %v2175 = vpack.c.b16 %v2135, %v2133
    %v2176 = vpack.c.b16 %v2138, %v2136
    %v2177 = vpack.c.b16 %v2139, %v2137
    %v2178 = vpack.c.b16 %v2142, %v2140
    %v2179 = vpack.c.b16 %v2143, %v2141
    %v2180 = vpack.c.b16 %v2146, %v2144
    %v2181 = vpack.c.b16 %v2147, %v2145
    %v2182 = vpack.c.b16 %v2148, %v2148
    %v2183 = vpack.c.b16 %v2149, %v2149
    %vm2216 = vcmask 64512
    %v2218 = vsel %vm2216, %v1733, 0
    %v2221 = vsel %vm2216, %v1736, 0
    %v2224 = vsel %vm2216, %v1739, 0
    %v2227 = vsel %vm2216, %v1742, 0
    %v2230 = vsel %vm2216, %v1745, 0
    %v2233 = vsel %vm2216, %v1748, 0
    %v2236 = vsel %vm2216, %v1751, 0
    %v2239 = vsel %vm2216, %v1754, 0
    %v2242 = vsel %vm2216, %v1757, 0
    %v2245 = vsel %vm2216, %v1760, 0
    %v2248 = vsel %vm2216, %v1763, 0
    %v2251 = vsel %vm2216, %v1766, 0
    %v2254 = vsel %vm2216, %v1769, 0
    %v2257 = vsel %vm2216, %v1772, 0
    %v2260 = vsel %vm2216, %v1775, 0
    %v2263 = vsel %vm2216, %v1778, 0
    %v2266 = vsel %vm2216, %v1781, 0
    %v2269 = vsel %vm2216, %v1784, 0
    %v2272 = vsel %vm2216, %v1787, 0
    %v2275 = vsel %vm2216, %v1790, 0
    %v2278 = vsel %vm2216, %v1793, 0
    %v2281 = vsel %vm2216, %v1796, 0
    %v2284 = vsel %vm2216, %v1799, 0
    %v2287 = vsel %vm2216, %v1802, 0
    %v2290 = vsel %vm2216, %v1805, 0
    %v2293 = vsel %vm2216, %v1808, 0
    %v2296 = vsel %vm2216, %v1811, 0
    %v2299 = vsel %vm2216, %v1814, 0
    %v2302 = vsel %vm2216, %v1817, 0
    %v2305 = vsel %vm2216, %v1820, 0
    %v2308 = vsel %vm2216, %v1823, 0
    %v2311 = vsel %vm2216, %v1826, 0
    %v2314 = vsel %vm2216, %v1829, 0
    %v2317 = vsel %vm2216, %v1832, 0
    %v2320 = vsel %vm2216, %v1835, 0
    %v2323 = vsel %vm2216, %v1838, 0
    %v2326 = vsel %vm2216, %v1841, 0
    %v2329 = vsel %vm2216, %v1844, 0
    %v2332 = vsel %vm2216, %v1847, 0
    %v2335 = vsel %vm2216, %v1850, 0
    %v2338 = vsel %vm2216, %v1853, 0
    %v2341 = vsel %vm2216, %v1856, 0
    %v2344 = vsel %vm2216, %v1859, 0
    %v2347 = vsel %vm2216, %v1862, 0
    %v2350 = vsel %vm2216, %v1865, 0
    %v2353 = vsel %vm2216, %v1868, 0
    %v2356 = vsel %vm2216, %v1871, 0
    %v2359 = vsel %vm2216, %v1874, 0
    %v2362 = vsel %vm2216, %v1877, 0
    %v2365 = vsel %vm2216, %v1880, 0
    %v2368 = vsel %vm2216, %v1883, 0
    %v2371 = vsel %vm2216, %v1886, 0
    %v2374 = vsel %vm2216, %v1889, 0
    %v2377 = vsel %vm2216, %v1892, 0
    %v2380 = vsel %vm2216, %v1895, 0
    %v2383 = vsel %vm2216, %v1898, 0
    %v2386 = vsel %vm2216, %v1901, 0
    %v2389 = vsel %vm2216, %v1904, 0
    %v2392 = vsel %vm2216, %v1907, 0
    %v2395 = vsel %vm2216, %v1910, 0
    %v2398 = vsel %vm2216, %v1913, 0
    %v2401 = vsel %vm2216, %v1916, 0
    %v2404 = vsel %vm2216, %v1919, 0
    %v2407 = vsel %vm2216, %v1922, 0
    %vm2409 = vcmask 1043456
    %v2411 = vsel %vm2409, %v2182, 0
    %v2414 = vsel %vm2409, %v2183, 0
    %2416 = vmatprep.subr.bf16.mxu0 %v2151
    %2417 = vmatpush1.bf16.msra.mxu0 %v2150
    %2418 = vmatprep.subr.bf16.mxu0 %v2153
    %2419 = vmatpush1.bf16.msra.mxu0 %v2152
    %2420 = vmatprep.subr.bf16.mxu0 %v2155
    %2421 = vmatpush1.bf16.msra.mxu0 %v2154
    %2422 = vmatprep.subr.bf16.mxu0 %v2157
    %2423 = vmatpush1.bf16.msra.mxu0 %v2156
    %2424 = vmatprep.subr.bf16.mxu0 %v2159
    %2425 = vmatpush1.bf16.msra.mxu0 %v2158
    %2426 = vmatprep.subr.bf16.mxu0 %v2161
    %2427 = vmatpush1.bf16.msra.mxu0 %v2160
    %2428 = vmatprep.subr.bf16.mxu0 %v2163
    %2429 = vmatpush1.bf16.msra.mxu0 %v2162
    %2430 = vmatprep.subr.bf16.mxu0 %v2165
    %2431 = vmatpush1.bf16.msra.mxu0 %v2164
    %2432 = vmatprep.subr.bf16.mxu0 %v2167
    %2433 = vmatpush1.bf16.msra.mxu0 %v2166
    %2434 = vmatprep.subr.bf16.mxu0 %v2169
    %2435 = vmatpush1.bf16.msra.mxu0 %v2168
    %2436 = vmatprep.subr.bf16.mxu0 %v2171
    %2437 = vmatpush1.bf16.msra.mxu0 %v2170
    %2438 = vmatprep.subr.bf16.mxu0 %v2173
    %2439 = vmatpush1.bf16.msra.mxu0 %v2172
    %2440 = vmatprep.subr.bf16.mxu0 %v2175
    %2441 = vmatpush1.bf16.msra.mxu0 %v2174
    %2442 = vmatprep.subr.bf16.mxu0 %v2177
    %2443 = vmatpush1.bf16.msra.mxu0 %v2176
    %2444 = vmatprep.subr.bf16.mxu0 %v2179
    %2445 = vmatpush1.bf16.msra.mxu0 %v2178
    %2446 = vmatprep.subr.bf16.mxu0 %v2181
    %2447 = vmatpush1.bf16.msra.mxu0 %v2180
    %2448 = vmatprep.mubr.bf16.mxu0 %v1732
    %2449 = vmatmul.mubr.bf16.gmra.mrb[0].mxu0 %v1731
    %v2450 = vpop.f32.mrb[0].mxu0
    %v2451 = vadd.f32 %v454, %v2450
    %v2452 = vpop.f32.mrb[0].mxu0
    %v2453 = vadd.f32 %v454, %v2452
    %v2454 = vpop.f32.mrb[0].mxu0
    %v2455 = vadd.f32 %v459, %v2454
    %v2456 = vpop.f32.mrb[0].mxu0
    %v2457 = vadd.f32 %v459, %v2456
    %2458 = vmatprep.mubr.bf16.mxu0 %v1735
    %2459 = vmatmul.mubr.bf16.gmra.mrb[0].mxu0 %v1734
    %v2460 = vpop.f32.mrb[0].mxu0
    %v2461 = vadd.f32 %v464, %v2460
    %v2462 = vpop.f32.mrb[0].mxu0
    %v2463 = vadd.f32 %v464, %v2462
    %v2464 = vpop.f32.mrb[0].mxu0
    %v2465 = vadd.f32 %v469, %v2464
    %v2466 = vpop.f32.mrb[0].mxu0
    %v2467 = vadd.f32 %v469, %v2466
    %2468 = vmatprep.mubr.bf16.mxu0 %v1738
    %2469 = vmatmul.mubr.bf16.gmra.mrb[0].mxu0 %v1737
    %v2470 = vpop.f32.mrb[0].mxu0
    %v2471 = vadd.f32 %v474, %v2470
    %v2472 = vpop.f32.mrb[0].mxu0
    %v2473 = vadd.f32 %v474, %v2472
    %v2474 = vpop.f32.mrb[0].mxu0
    %v2475 = vadd.f32 %v479, %v2474
    %v2476 = vpop.f32.mrb[0].mxu0
    %v2477 = vadd.f32 %v479, %v2476
    %2478 = vmatprep.mubr.bf16.mxu0 %v1741
    %2479 = vmatmul.mubr.bf16.gmra.mrb[0].mxu0 %v1740
    %v2480 = vpop.f32.mrb[0].mxu0
    %v2481 = vadd.f32 %v484, %v2480
    %v2482 = vpop.f32.mrb[0].mxu0
    %v2483 = vadd.f32 %v484, %v2482
    %v2484 = vpop.f32.mrb[0].mxu0
    %v2485 = vadd.f32 %v489, %v2484
    %v2486 = vpop.f32.mrb[0].mxu0
    %v2487 = vadd.f32 %v489, %v2486
    %2488 = vmatprep.mubr.bf16.mxu0 %v1744
    %2489 = vmatmul.mubr.bf16.gmra.mrb[0].mxu0 %v1743
    %v2490 = vpop.f32.mrb[0].mxu0
    %v2491 = vadd.f32 %v494, %v2490
    %v2492 = vpop.f32.mrb[0].mxu0
    %v2493 = vadd.f32 %v494, %v2492
    %v2494 = vpop.f32.mrb[0].mxu0
    %v2495 = vadd.f32 %v499, %v2494
    %v2496 = vpop.f32.mrb[0].mxu0
    %v2497 = vadd.f32 %v499, %v2496
    %2498 = vmatprep.mubr.bf16.mxu0 %v1747
    %2499 = vmatmul.mubr.bf16.gmra.mrb[0].mxu0 %v1746
    %v2500 = vpop.f32.mrb[0].mxu0
    %v2501 = vadd.f32 %v504, %v2500
    %v2502 = vpop.f32.mrb[0].mxu0
    %v2503 = vadd.f32 %v504, %v2502
    %v2504 = vpop.f32.mrb[0].mxu0
    %v2505 = vadd.f32 %v509, %v2504
    %v2506 = vpop.f32.mrb[0].mxu0
    %v2507 = vadd.f32 %v509, %v2506
    %2508 = vmatprep.mubr.bf16.mxu0 %v1750
    %2509 = vmatmul.mubr.bf16.gmra.mrb[0].mxu0 %v1749
    %v2510 = vpop.f32.mrb[0].mxu0
    %v2511 = vadd.f32 %v514, %v2510
    %v2512 = vpop.f32.mrb[0].mxu0
    %v2513 = vadd.f32 %v514, %v2512
    %v2514 = vpop.f32.mrb[0].mxu0
    %v2515 = vadd.f32 %v519, %v2514
    %v2516 = vpop.f32.mrb[0].mxu0
    %v2517 = vadd.f32 %v519, %v2516
    %2518 = vmatprep.mubr.bf16.mxu0 %v1753
    %2519 = vmatmul.mubr.bf16.gmra.mrb[0].mxu0 %v1752
    %v2520 = vpop.f32.mrb[0].mxu0
    %v2521 = vadd.f32 %v524, %v2520
    %v2522 = vpop.f32.mrb[0].mxu0
    %v2523 = vadd.f32 %v524, %v2522
    %v2524 = vpop.f32.mrb[0].mxu0
    %v2525 = vadd.f32 %v529, %v2524
    %v2526 = vpop.f32.mrb[0].mxu0
    %v2527 = vadd.f32 %v529, %v2526
    %2528 = vmatprep.mubr.bf16.mxu0 %v1756
    %2529 = vmatmul.mubr.bf16.gmra.mrb[0].mxu0 %v1755
    %v2530 = vpop.f32.mrb[0].mxu0
    %v2531 = vadd.f32 %v534, %v2530
    %v2532 = vpop.f32.mrb[0].mxu0
    %v2533 = vadd.f32 %v534, %v2532
    %v2534 = vpop.f32.mrb[0].mxu0
    %v2535 = vadd.f32 %v539, %v2534
    %v2536 = vpop.f32.mrb[0].mxu0
    %v2537 = vadd.f32 %v539, %v2536
    %2538 = vmatprep.mubr.bf16.mxu0 %v1759
    %2539 = vmatmul.mubr.bf16.gmra.mrb[0].mxu0 %v1758
    %v2540 = vpop.f32.mrb[0].mxu0
    %v2541 = vadd.f32 %v544, %v2540
    %v2542 = vpop.f32.mrb[0].mxu0
    %v2543 = vadd.f32 %v544, %v2542
    %v2544 = vpop.f32.mrb[0].mxu0
    %v2545 = vadd.f32 %v549, %v2544
    %v2546 = vpop.f32.mrb[0].mxu0
    %v2547 = vadd.f32 %v549, %v2546
    %2548 = vmatprep.mubr.bf16.mxu0 %v1762
    %2549 = vmatmul.mubr.bf16.gmra.mrb[0].mxu0 %v1761
    %v2550 = vpop.f32.mrb[0].mxu0
    %v2551 = vadd.f32 %v554, %v2550
    %v2552 = vpop.f32.mrb[0].mxu0
    %v2553 = vadd.f32 %v554, %v2552
    %v2554 = vpop.f32.mrb[0].mxu0
    %v2555 = vadd.f32 %v559, %v2554
    %v2556 = vpop.f32.mrb[0].mxu0
    %v2557 = vadd.f32 %v559, %v2556
    %2558 = vmatprep.mubr.bf16.mxu0 %v1765
    %2559 = vmatmul.mubr.bf16.gmra.mrb[0].mxu0 %v1764
    %v2560 = vpop.f32.mrb[0].mxu0
    %v2561 = vadd.f32 %v564, %v2560
    %v2562 = vpop.f32.mrb[0].mxu0
    %v2563 = vadd.f32 %v564, %v2562
    %v2564 = vpop.f32.mrb[0].mxu0
    %v2565 = vadd.f32 %v569, %v2564
    %v2566 = vpop.f32.mrb[0].mxu0
    %v2567 = vadd.f32 %v569, %v2566
    %2568 = vmatprep.mubr.bf16.mxu0 %v1768
    %2569 = vmatmul.mubr.bf16.gmra.mrb[0].mxu0 %v1767
    %v2570 = vpop.f32.mrb[0].mxu0
    %v2571 = vadd.f32 %v574, %v2570
    %v2572 = vpop.f32.mrb[0].mxu0
    %v2573 = vadd.f32 %v574, %v2572
    %v2574 = vpop.f32.mrb[0].mxu0
    %v2575 = vadd.f32 %v579, %v2574
    %v2576 = vpop.f32.mrb[0].mxu0
    %v2577 = vadd.f32 %v579, %v2576
    %2578 = vmatprep.mubr.bf16.mxu0 %v1771
    %2579 = vmatmul.mubr.bf16.gmra.mrb[0].mxu0 %v1770
    %v2580 = vpop.f32.mrb[0].mxu0
    %v2581 = vadd.f32 %v584, %v2580
    %v2582 = vpop.f32.mrb[0].mxu0
    %v2583 = vadd.f32 %v584, %v2582
    %v2584 = vpop.f32.mrb[0].mxu0
    %v2585 = vadd.f32 %v589, %v2584
    %v2586 = vpop.f32.mrb[0].mxu0
    %v2587 = vadd.f32 %v589, %v2586
    %2588 = vmatprep.mubr.bf16.mxu0 %v1774
    %2589 = vmatmul.mubr.bf16.gmra.mrb[0].mxu0 %v1773
    %v2590 = vpop.f32.mrb[0].mxu0
    %v2591 = vadd.f32 %v594, %v2590
    %v2592 = vpop.f32.mrb[0].mxu0
    %v2593 = vadd.f32 %v594, %v2592
    %v2594 = vpop.f32.mrb[0].mxu0
    %v2595 = vadd.f32 %v599, %v2594
    %v2596 = vpop.f32.mrb[0].mxu0
    %v2597 = vadd.f32 %v599, %v2596
    %2598 = vmatprep.mubr.bf16.mxu0 %v1777
    %2599 = vmatmul.mubr.bf16.gmra.mrb[0].mxu0 %v1776
    %v2600 = vpop.f32.mrb[0].mxu0
    %v2601 = vadd.f32 %v604, %v2600
    %v2602 = vpop.f32.mrb[0].mxu0
    %v2603 = vadd.f32 %v604, %v2602
    %v2604 = vpop.f32.mrb[0].mxu0
    %v2605 = vadd.f32 %v609, %v2604
    %v2606 = vpop.f32.mrb[0].mxu0
    %v2607 = vadd.f32 %v609, %v2606
    %2608 = vmatprep.mubr.bf16.mxu0 %v1780
    %2609 = vmatmul.mubr.bf16.gmra.mrb[0].mxu0 %v1779
    %v2610 = vpop.f32.mrb[0].mxu0
    %v2611 = vadd.f32 %v614, %v2610
    %v2612 = vpop.f32.mrb[0].mxu0
    %v2613 = vadd.f32 %v614, %v2612
    %v2614 = vpop.f32.mrb[0].mxu0
    %v2615 = vadd.f32 %v619, %v2614
    %v2616 = vpop.f32.mrb[0].mxu0
    %v2617 = vadd.f32 %v619, %v2616
    %2618 = vmatprep.mubr.bf16.mxu0 %v1783
    %2619 = vmatmul.mubr.bf16.gmra.mrb[0].mxu0 %v1782
    %v2620 = vpop.f32.mrb[0].mxu0
    %v2621 = vadd.f32 %v624, %v2620
    %v2622 = vpop.f32.mrb[0].mxu0
    %v2623 = vadd.f32 %v624, %v2622
    %v2624 = vpop.f32.mrb[0].mxu0
    %v2625 = vadd.f32 %v629, %v2624
    %v2626 = vpop.f32.mrb[0].mxu0
    %v2627 = vadd.f32 %v629, %v2626
    %2628 = vmatprep.mubr.bf16.mxu0 %v1786
    %2629 = vmatmul.mubr.bf16.gmra.mrb[0].mxu0 %v1785
    %v2630 = vpop.f32.mrb[0].mxu0
    %v2631 = vadd.f32 %v634, %v2630
    %v2632 = vpop.f32.mrb[0].mxu0
    %v2633 = vadd.f32 %v634, %v2632
    %v2634 = vpop.f32.mrb[0].mxu0
    %v2635 = vadd.f32 %v639, %v2634
    %v2636 = vpop.f32.mrb[0].mxu0
    %v2637 = vadd.f32 %v639, %v2636
    %2638 = vmatprep.mubr.bf16.mxu0 %v1789
    %2639 = vmatmul.mubr.bf16.gmra.mrb[0].mxu0 %v1788
    %v2640 = vpop.f32.mrb[0].mxu0
    %v2641 = vadd.f32 %v644, %v2640
    %v2642 = vpop.f32.mrb[0].mxu0
    %v2643 = vadd.f32 %v644, %v2642
    %v2644 = vpop.f32.mrb[0].mxu0
    %v2645 = vadd.f32 %v649, %v2644
    %v2646 = vpop.f32.mrb[0].mxu0
    %v2647 = vadd.f32 %v649, %v2646
    %2648 = vmatprep.mubr.bf16.mxu0 %v1792
    %2649 = vmatmul.mubr.bf16.gmra.mrb[0].mxu0 %v1791
    %v2650 = vpop.f32.mrb[0].mxu0
    %v2651 = vadd.f32 %v654, %v2650
    %v2652 = vpop.f32.mrb[0].mxu0
    %v2653 = vadd.f32 %v654, %v2652
    %v2654 = vpop.f32.mrb[0].mxu0
    %v2655 = vadd.f32 %v659, %v2654
    %v2656 = vpop.f32.mrb[0].mxu0
    %v2657 = vadd.f32 %v659, %v2656
    %2658 = vmatprep.mubr.bf16.mxu0 %v1795
    %2659 = vmatmul.mubr.bf16.gmra.mrb[0].mxu0 %v1794
    %v2660 = vpop.f32.mrb[0].mxu0
    %v2661 = vadd.f32 %v664, %v2660
    %v2662 = vpop.f32.mrb[0].mxu0
    %v2663 = vadd.f32 %v664, %v2662
    %v2664 = vpop.f32.mrb[0].mxu0
    %v2665 = vadd.f32 %v669, %v2664
    %v2666 = vpop.f32.mrb[0].mxu0
    %v2667 = vadd.f32 %v669, %v2666
    %2668 = vmatprep.mubr.bf16.mxu0 %v1798
    %2669 = vmatmul.mubr.bf16.gmra.mrb[0].mxu0 %v1797
    %v2670 = vpop.f32.mrb[0].mxu0
    %v2671 = vadd.f32 %v674, %v2670
    %v2672 = vpop.f32.mrb[0].mxu0
    %v2673 = vadd.f32 %v674, %v2672
    %v2674 = vpop.f32.mrb[0].mxu0
    %v2675 = vadd.f32 %v679, %v2674
    %v2676 = vpop.f32.mrb[0].mxu0
    %v2677 = vadd.f32 %v679, %v2676
    %2678 = vmatprep.mubr.bf16.mxu0 %v1801
    %2679 = vmatmul.mubr.bf16.gmra.mrb[0].mxu0 %v1800
    %v2680 = vpop.f32.mrb[0].mxu0
    %v2681 = vadd.f32 %v684, %v2680
    %v2682 = vpop.f32.mrb[0].mxu0
    %v2683 = vadd.f32 %v684, %v2682
    %v2684 = vpop.f32.mrb[0].mxu0
    %v2685 = vadd.f32 %v689, %v2684
    %v2686 = vpop.f32.mrb[0].mxu0
    %v2687 = vadd.f32 %v689, %v2686
    %2688 = vmatprep.mubr.bf16.mxu0 %v1804
    %2689 = vmatmul.mubr.bf16.gmra.mrb[0].mxu0 %v1803
    %v2690 = vpop.f32.mrb[0].mxu0
    %v2691 = vadd.f32 %v694, %v2690
    %v2692 = vpop.f32.mrb[0].mxu0
    %v2693 = vadd.f32 %v694, %v2692
    %v2694 = vpop.f32.mrb[0].mxu0
    %v2695 = vadd.f32 %v699, %v2694
    %v2696 = vpop.f32.mrb[0].mxu0
    %v2697 = vadd.f32 %v699, %v2696
    %2698 = vmatprep.mubr.bf16.mxu0 %v1807
    %2699 = vmatmul.mubr.bf16.gmra.mrb[0].mxu0 %v1806
    %v2700 = vpop.f32.mrb[0].mxu0
    %v2701 = vadd.f32 %v704, %v2700
    %v2702 = vpop.f32.mrb[0].mxu0
    %v2703 = vadd.f32 %v704, %v2702
    %v2704 = vpop.f32.mrb[0].mxu0
    %v2705 = vadd.f32 %v709, %v2704
    %v2706 = vpop.f32.mrb[0].mxu0
    %v2707 = vadd.f32 %v709, %v2706
    %2708 = vmatprep.mubr.bf16.mxu0 %v1810
    %2709 = vmatmul.mubr.bf16.gmra.mrb[0].mxu0 %v1809
    %v2710 = vpop.f32.mrb[0].mxu0
    %v2711 = vadd.f32 %v714, %v2710
    %v2712 = vpop.f32.mrb[0].mxu0
    %v2713 = vadd.f32 %v714, %v2712
    %v2714 = vpop.f32.mrb[0].mxu0
    %v2715 = vadd.f32 %v719, %v2714
    %v2716 = vpop.f32.mrb[0].mxu0
    %v2717 = vadd.f32 %v719, %v2716
    %2718 = vmatprep.mubr.bf16.mxu0 %v1813
    %2719 = vmatmul.mubr.bf16.gmra.mrb[0].mxu0 %v1812
    %v2720 = vpop.f32.mrb[0].mxu0
    %v2721 = vadd.f32 %v724, %v2720
    %v2722 = vpop.f32.mrb[0].mxu0
    %v2723 = vadd.f32 %v724, %v2722
    %v2724 = vpop.f32.mrb[0].mxu0
    %v2725 = vadd.f32 %v729, %v2724
    %v2726 = vpop.f32.mrb[0].mxu0
    %v2727 = vadd.f32 %v729, %v2726
    %2728 = vmatprep.mubr.bf16.mxu0 %v1816
    %2729 = vmatmul.mubr.bf16.gmra.mrb[0].mxu0 %v1815
    %v2730 = vpop.f32.mrb[0].mxu0
    %v2731 = vadd.f32 %v734, %v2730
    %v2732 = vpop.f32.mrb[0].mxu0
    %v2733 = vadd.f32 %v734, %v2732
    %v2734 = vpop.f32.mrb[0].mxu0
    %v2735 = vadd.f32 %v739, %v2734
    %v2736 = vpop.f32.mrb[0].mxu0
    %v2737 = vadd.f32 %v739, %v2736
    %2738 = vmatprep.mubr.bf16.mxu0 %v1819
    %2739 = vmatmul.mubr.bf16.gmra.mrb[0].mxu0 %v1818
    %v2740 = vpop.f32.mrb[0].mxu0
    %v2741 = vadd.f32 %v744, %v2740
    %v2742 = vpop.f32.mrb[0].mxu0
    %v2743 = vadd.f32 %v744, %v2742
    %v2744 = vpop.f32.mrb[0].mxu0
    %v2745 = vadd.f32 %v749, %v2744
    %v2746 = vpop.f32.mrb[0].mxu0
    %v2747 = vadd.f32 %v749, %v2746
    %2748 = vmatprep.mubr.bf16.mxu0 %v1822
    %2749 = vmatmul.mubr.bf16.gmra.mrb[0].mxu0 %v1821
    %v2750 = vpop.f32.mrb[0].mxu0
    %v2751 = vadd.f32 %v754, %v2750
    %v2752 = vpop.f32.mrb[0].mxu0
    %v2753 = vadd.f32 %v754, %v2752
    %v2754 = vpop.f32.mrb[0].mxu0
    %v2755 = vadd.f32 %v759, %v2754
    %v2756 = vpop.f32.mrb[0].mxu0
    %v2757 = vadd.f32 %v759, %v2756
    %2758 = vmatprep.mubr.bf16.mxu0 %v1825
    %2759 = vmatmul.mubr.bf16.gmra.mrb[0].mxu0 %v1824
    %v2760 = vpop.f32.mrb[0].mxu0
    %v2761 = vadd.f32 %v764, %v2760
    %v2762 = vpop.f32.mrb[0].mxu0
    %v2763 = vadd.f32 %v764, %v2762
    %v2764 = vpop.f32.mrb[0].mxu0
    %v2765 = vadd.f32 %v769, %v2764
    %v2766 = vpop.f32.mrb[0].mxu0
    %v2767 = vadd.f32 %v769, %v2766
    %2768 = vmatprep.mubr.bf16.mxu0 %v1828
    %2769 = vmatmul.mubr.bf16.gmra.mrb[0].mxu0 %v1827
    %v2770 = vpop.f32.mrb[0].mxu0
    %v2771 = vadd.f32 %v774, %v2770
    %v2772 = vpop.f32.mrb[0].mxu0
    %v2773 = vadd.f32 %v774, %v2772
    %v2774 = vpop.f32.mrb[0].mxu0
    %v2775 = vadd.f32 %v779, %v2774
    %v2776 = vpop.f32.mrb[0].mxu0
    %v2777 = vadd.f32 %v779, %v2776
    %2778 = vmatprep.mubr.bf16.mxu0 %v1831
    %2779 = vmatmul.mubr.bf16.gmra.mrb[0].mxu0 %v1830
    %v2780 = vpop.f32.mrb[0].mxu0
    %v2781 = vadd.f32 %v784, %v2780
    %v2782 = vpop.f32.mrb[0].mxu0
    %v2783 = vadd.f32 %v784, %v2782
    %v2784 = vpop.f32.mrb[0].mxu0
    %v2785 = vadd.f32 %v789, %v2784
    %v2786 = vpop.f32.mrb[0].mxu0
    %v2787 = vadd.f32 %v789, %v2786
    %2788 = vmatprep.mubr.bf16.mxu0 %v1834
    %2789 = vmatmul.mubr.bf16.gmra.mrb[0].mxu0 %v1833
    %v2790 = vpop.f32.mrb[0].mxu0
    %v2791 = vadd.f32 %v794, %v2790
    %v2792 = vpop.f32.mrb[0].mxu0
    %v2793 = vadd.f32 %v794, %v2792
    %v2794 = vpop.f32.mrb[0].mxu0
    %v2795 = vadd.f32 %v799, %v2794
    %v2796 = vpop.f32.mrb[0].mxu0
    %v2797 = vadd.f32 %v799, %v2796
    %2798 = vmatprep.mubr.bf16.mxu0 %v1837
    %2799 = vmatmul.mubr.bf16.gmra.mrb[0].mxu0 %v1836
    %v2800 = vpop.f32.mrb[0].mxu0
    %v2801 = vadd.f32 %v804, %v2800
    %v2802 = vpop.f32.mrb[0].mxu0
    %v2803 = vadd.f32 %v804, %v2802
    %v2804 = vpop.f32.mrb[0].mxu0
    %v2805 = vadd.f32 %v809, %v2804
    %v2806 = vpop.f32.mrb[0].mxu0
    %v2807 = vadd.f32 %v809, %v2806
    %2808 = vmatprep.mubr.bf16.mxu0 %v1840
    %2809 = vmatmul.mubr.bf16.gmra.mrb[0].mxu0 %v1839
    %v2810 = vpop.f32.mrb[0].mxu0
    %v2811 = vadd.f32 %v814, %v2810
    %v2812 = vpop.f32.mrb[0].mxu0
    %v2813 = vadd.f32 %v814, %v2812
    %v2814 = vpop.f32.mrb[0].mxu0
    %v2815 = vadd.f32 %v819, %v2814
    %v2816 = vpop.f32.mrb[0].mxu0
    %v2817 = vadd.f32 %v819, %v2816
    %2818 = vmatprep.mubr.bf16.mxu0 %v1843
    %2819 = vmatmul.mubr.bf16.gmra.mrb[0].mxu0 %v1842
    %v2820 = vpop.f32.mrb[0].mxu0
    %v2821 = vadd.f32 %v824, %v2820
    %v2822 = vpop.f32.mrb[0].mxu0
    %v2823 = vadd.f32 %v824, %v2822
    %v2824 = vpop.f32.mrb[0].mxu0
    %v2825 = vadd.f32 %v829, %v2824
    %v2826 = vpop.f32.mrb[0].mxu0
    %v2827 = vadd.f32 %v829, %v2826
    %2828 = vmatprep.mubr.bf16.mxu0 %v1846
    %2829 = vmatmul.mubr.bf16.gmra.mrb[0].mxu0 %v1845
    %v2830 = vpop.f32.mrb[0].mxu0
    %v2831 = vadd.f32 %v834, %v2830
    %v2832 = vpop.f32.mrb[0].mxu0
    %v2833 = vadd.f32 %v834, %v2832
    %v2834 = vpop.f32.mrb[0].mxu0
    %v2835 = vadd.f32 %v839, %v2834
    %v2836 = vpop.f32.mrb[0].mxu0
    %v2837 = vadd.f32 %v839, %v2836
    %2838 = vmatprep.mubr.bf16.mxu0 %v1849
    %2839 = vmatmul.mubr.bf16.gmra.mrb[0].mxu0 %v1848
    %v2840 = vpop.f32.mrb[0].mxu0
    %v2841 = vadd.f32 %v844, %v2840
    %v2842 = vpop.f32.mrb[0].mxu0
    %v2843 = vadd.f32 %v844, %v2842
    %v2844 = vpop.f32.mrb[0].mxu0
    %v2845 = vadd.f32 %v849, %v2844
    %v2846 = vpop.f32.mrb[0].mxu0
    %v2847 = vadd.f32 %v849, %v2846
    %2848 = vmatprep.mubr.bf16.mxu0 %v1852
    %2849 = vmatmul.mubr.bf16.gmra.mrb[0].mxu0 %v1851
    %v2850 = vpop.f32.mrb[0].mxu0
    %v2851 = vadd.f32 %v854, %v2850
    %v2852 = vpop.f32.mrb[0].mxu0
    %v2853 = vadd.f32 %v854, %v2852
    %v2854 = vpop.f32.mrb[0].mxu0
    %v2855 = vadd.f32 %v859, %v2854
    %v2856 = vpop.f32.mrb[0].mxu0
    %v2857 = vadd.f32 %v859, %v2856
    %2858 = vmatprep.mubr.bf16.mxu0 %v1855
    %2859 = vmatmul.mubr.bf16.gmra.mrb[0].mxu0 %v1854
    %v2860 = vpop.f32.mrb[0].mxu0
    %v2861 = vadd.f32 %v864, %v2860
    %v2862 = vpop.f32.mrb[0].mxu0
    %v2863 = vadd.f32 %v864, %v2862
    %v2864 = vpop.f32.mrb[0].mxu0
    %v2865 = vadd.f32 %v869, %v2864
    %v2866 = vpop.f32.mrb[0].mxu0
    %v2867 = vadd.f32 %v869, %v2866
    %2868 = vmatprep.mubr.bf16.mxu0 %v1858
    %2869 = vmatmul.mubr.bf16.gmra.mrb[0].mxu0 %v1857
    %v2870 = vpop.f32.mrb[0].mxu0
    %v2871 = vadd.f32 %v874, %v2870
    %v2872 = vpop.f32.mrb[0].mxu0
    %v2873 = vadd.f32 %v874, %v2872
    %v2874 = vpop.f32.mrb[0].mxu0
    %v2875 = vadd.f32 %v879, %v2874
    %v2876 = vpop.f32.mrb[0].mxu0
    %v2877 = vadd.f32 %v879, %v2876
    %2878 = vmatprep.mubr.bf16.mxu0 %v1861
    %2879 = vmatmul.mubr.bf16.gmra.mrb[0].mxu0 %v1860
    %v2880 = vpop.f32.mrb[0].mxu0
    %v2881 = vadd.f32 %v884, %v2880
    %v2882 = vpop.f32.mrb[0].mxu0
    %v2883 = vadd.f32 %v884, %v2882
    %v2884 = vpop.f32.mrb[0].mxu0
    %v2885 = vadd.f32 %v889, %v2884
    %v2886 = vpop.f32.mrb[0].mxu0
    %v2887 = vadd.f32 %v889, %v2886
    %2888 = vmatprep.mubr.bf16.mxu0 %v1864
    %2889 = vmatmul.mubr.bf16.gmra.mrb[0].mxu0 %v1863
    %v2890 = vpop.f32.mrb[0].mxu0
    %v2891 = vadd.f32 %v894, %v2890
    %v2892 = vpop.f32.mrb[0].mxu0
    %v2893 = vadd.f32 %v894, %v2892
    %v2894 = vpop.f32.mrb[0].mxu0
    %v2895 = vadd.f32 %v899, %v2894
    %v2896 = vpop.f32.mrb[0].mxu0
    %v2897 = vadd.f32 %v899, %v2896
    %2898 = vmatprep.mubr.bf16.mxu0 %v1867
    %2899 = vmatmul.mubr.bf16.gmra.mrb[0].mxu0 %v1866
    %v2900 = vpop.f32.mrb[0].mxu0
    %v2901 = vadd.f32 %v904, %v2900
    %v2902 = vpop.f32.mrb[0].mxu0
    %v2903 = vadd.f32 %v904, %v2902
    %v2904 = vpop.f32.mrb[0].mxu0
    %v2905 = vadd.f32 %v909, %v2904
    %v2906 = vpop.f32.mrb[0].mxu0
    %v2907 = vadd.f32 %v909, %v2906
    %2908 = vmatprep.mubr.bf16.mxu0 %v1870
    %2909 = vmatmul.mubr.bf16.gmra.mrb[0].mxu0 %v1869
    %v2910 = vpop.f32.mrb[0].mxu0
    %v2911 = vadd.f32 %v914, %v2910
    %v2912 = vpop.f32.mrb[0].mxu0
    %v2913 = vadd.f32 %v914, %v2912
    %v2914 = vpop.f32.mrb[0].mxu0
    %v2915 = vadd.f32 %v919, %v2914
    %v2916 = vpop.f32.mrb[0].mxu0
    %v2917 = vadd.f32 %v919, %v2916
    %2918 = vmatprep.mubr.bf16.mxu0 %v1873
    %2919 = vmatmul.mubr.bf16.gmra.mrb[0].mxu0 %v1872
    %v2920 = vpop.f32.mrb[0].mxu0
    %v2921 = vadd.f32 %v924, %v2920
    %v2922 = vpop.f32.mrb[0].mxu0
    %v2923 = vadd.f32 %v924, %v2922
    %v2924 = vpop.f32.mrb[0].mxu0
    %v2925 = vadd.f32 %v929, %v2924
    %v2926 = vpop.f32.mrb[0].mxu0
    %v2927 = vadd.f32 %v929, %v2926
    %2928 = vmatprep.mubr.bf16.mxu0 %v1876
    %2929 = vmatmul.mubr.bf16.gmra.mrb[0].mxu0 %v1875
    %v2930 = vpop.f32.mrb[0].mxu0
    %v2931 = vadd.f32 %v934, %v2930
    %v2932 = vpop.f32.mrb[0].mxu0
    %v2933 = vadd.f32 %v934, %v2932
    %v2934 = vpop.f32.mrb[0].mxu0
    %v2935 = vadd.f32 %v939, %v2934
    %v2936 = vpop.f32.mrb[0].mxu0
    %v2937 = vadd.f32 %v939, %v2936
    %2938 = vmatprep.mubr.bf16.mxu0 %v1879
    %2939 = vmatmul.mubr.bf16.gmra.mrb[0].mxu0 %v1878
    %v2940 = vpop.f32.mrb[0].mxu0
    %v2941 = vadd.f32 %v944, %v2940
    %v2942 = vpop.f32.mrb[0].mxu0
    %v2943 = vadd.f32 %v944, %v2942
    %v2944 = vpop.f32.mrb[0].mxu0
    %v2945 = vadd.f32 %v949, %v2944
    %v2946 = vpop.f32.mrb[0].mxu0
    %v2947 = vadd.f32 %v949, %v2946
    %2948 = vmatprep.mubr.bf16.mxu0 %v1882
    %2949 = vmatmul.mubr.bf16.gmra.mrb[0].mxu0 %v1881
    %v2950 = vpop.f32.mrb[0].mxu0
    %v2951 = vadd.f32 %v954, %v2950
    %v2952 = vpop.f32.mrb[0].mxu0
    %v2953 = vadd.f32 %v954, %v2952
    %v2954 = vpop.f32.mrb[0].mxu0
    %v2955 = vadd.f32 %v959, %v2954
    %v2956 = vpop.f32.mrb[0].mxu0
    %v2957 = vadd.f32 %v959, %v2956
    %2958 = vmatprep.mubr.bf16.mxu0 %v1885
    %2959 = vmatmul.mubr.bf16.gmra.mrb[0].mxu0 %v1884
    %v2960 = vpop.f32.mrb[0].mxu0
    %v2961 = vadd.f32 %v964, %v2960
    %v2962 = vpop.f32.mrb[0].mxu0
    %v2963 = vadd.f32 %v964, %v2962
    %v2964 = vpop.f32.mrb[0].mxu0
    %v2965 = vadd.f32 %v969, %v2964
    %v2966 = vpop.f32.mrb[0].mxu0
    %v2967 = vadd.f32 %v969, %v2966
    %2968 = vmatprep.mubr.bf16.mxu0 %v1888
    %2969 = vmatmul.mubr.bf16.gmra.mrb[0].mxu0 %v1887
    %v2970 = vpop.f32.mrb[0].mxu0
    %v2971 = vadd.f32 %v974, %v2970
    %v2972 = vpop.f32.mrb[0].mxu0
    %v2973 = vadd.f32 %v974, %v2972
    %v2974 = vpop.f32.mrb[0].mxu0
    %v2975 = vadd.f32 %v979, %v2974
    %v2976 = vpop.f32.mrb[0].mxu0
    %v2977 = vadd.f32 %v979, %v2976
    %2978 = vmatprep.mubr.bf16.mxu0 %v1891
    %2979 = vmatmul.mubr.bf16.gmra.mrb[0].mxu0 %v1890
    %v2980 = vpop.f32.mrb[0].mxu0
    %v2981 = vadd.f32 %v984, %v2980
    %v2982 = vpop.f32.mrb[0].mxu0
    %v2983 = vadd.f32 %v984, %v2982
    %v2984 = vpop.f32.mrb[0].mxu0
    %v2985 = vadd.f32 %v989, %v2984
    %v2986 = vpop.f32.mrb[0].mxu0
    %v2987 = vadd.f32 %v989, %v2986
    %2988 = vmatprep.mubr.bf16.mxu0 %v1894
    %2989 = vmatmul.mubr.bf16.gmra.mrb[0].mxu0 %v1893
    %v2990 = vpop.f32.mrb[0].mxu0
    %v2991 = vadd.f32 %v994, %v2990
    %v2992 = vpop.f32.mrb[0].mxu0
    %v2993 = vadd.f32 %v994, %v2992
    %v2994 = vpop.f32.mrb[0].mxu0
    %v2995 = vadd.f32 %v999, %v2994
    %v2996 = vpop.f32.mrb[0].mxu0
    %v2997 = vadd.f32 %v999, %v2996
    %2998 = vmatprep.mubr.bf16.mxu0 %v1897
    %2999 = vmatmul.mubr.bf16.gmra.mrb[0].mxu0 %v1896
    %v3000 = vpop.f32.mrb[0].mxu0
    %v3001 = vadd.f32 %v1004, %v3000
    %v3002 = vpop.f32.mrb[0].mxu0
    %v3003 = vadd.f32 %v1004, %v3002
    %v3004 = vpop.f32.mrb[0].mxu0
    %v3005 = vadd.f32 %v1009, %v3004
    %v3006 = vpop.f32.mrb[0].mxu0
    %v3007 = vadd.f32 %v1009, %v3006
    %3008 = vmatprep.mubr.bf16.mxu0 %v1900
    %3009 = vmatmul.mubr.bf16.gmra.mrb[0].mxu0 %v1899
    %v3010 = vpop.f32.mrb[0].mxu0
    %v3011 = vadd.f32 %v1014, %v3010
    %v3012 = vpop.f32.mrb[0].mxu0
    %v3013 = vadd.f32 %v1014, %v3012
    %v3014 = vpop.f32.mrb[0].mxu0
    %v3015 = vadd.f32 %v1019, %v3014
    %v3016 = vpop.f32.mrb[0].mxu0
    %v3017 = vadd.f32 %v1019, %v3016
    %3018 = vmatprep.mubr.bf16.mxu0 %v1903
    %3019 = vmatmul.mubr.bf16.gmra.mrb[0].mxu0 %v1902
    %v3020 = vpop.f32.mrb[0].mxu0
    %v3021 = vadd.f32 %v1024, %v3020
    %v3022 = vpop.f32.mrb[0].mxu0
    %v3023 = vadd.f32 %v1024, %v3022
    %v3024 = vpop.f32.mrb[0].mxu0
    %v3025 = vadd.f32 %v1029, %v3024
    %v3026 = vpop.f32.mrb[0].mxu0
    %v3027 = vadd.f32 %v1029, %v3026
    %3028 = vmatprep.mubr.bf16.mxu0 %v1906
    %3029 = vmatmul.mubr.bf16.gmra.mrb[0].mxu0 %v1905
    %v3030 = vpop.f32.mrb[0].mxu0
    %v3031 = vadd.f32 %v1034, %v3030
    %v3032 = vpop.f32.mrb[0].mxu0
    %v3033 = vadd.f32 %v1034, %v3032
    %v3034 = vpop.f32.mrb[0].mxu0
    %v3035 = vadd.f32 %v1039, %v3034
    %v3036 = vpop.f32.mrb[0].mxu0
    %v3037 = vadd.f32 %v1039, %v3036
    %3038 = vmatprep.mubr.bf16.mxu0 %v1909
    %3039 = vmatmul.mubr.bf16.gmra.mrb[0].mxu0 %v1908
    %v3040 = vpop.f32.mrb[0].mxu0
    %v3041 = vadd.f32 %v1044, %v3040
    %v3042 = vpop.f32.mrb[0].mxu0
    %v3043 = vadd.f32 %v1044, %v3042
    %v3044 = vpop.f32.mrb[0].mxu0
    %v3045 = vadd.f32 %v1049, %v3044
    %v3046 = vpop.f32.mrb[0].mxu0
    %v3047 = vadd.f32 %v1049, %v3046
    %3048 = vmatprep.mubr.bf16.mxu0 %v1912
    %3049 = vmatmul.mubr.bf16.gmra.mrb[0].mxu0 %v1911
    %v3050 = vpop.f32.mrb[0].mxu0
    %v3051 = vadd.f32 %v1054, %v3050
    %v3052 = vpop.f32.mrb[0].mxu0
    %v3053 = vadd.f32 %v1054, %v3052
    %v3054 = vpop.f32.mrb[0].mxu0
    %v3055 = vadd.f32 %v1059, %v3054
    %v3056 = vpop.f32.mrb[0].mxu0
    %v3057 = vadd.f32 %v1059, %v3056
    %3058 = vmatprep.mubr.bf16.mxu0 %v1915
    %3059 = vmatmul.mubr.bf16.gmra.mrb[0].mxu0 %v1914
    %v3060 = vpop.f32.mrb[0].mxu0
    %v3061 = vadd.f32 %v1064, %v3060
    %v3062 = vpop.f32.mrb[0].mxu0
    %v3063 = vadd.f32 %v1064, %v3062
    %v3064 = vpop.f32.mrb[0].mxu0
    %v3065 = vadd.f32 %v1069, %v3064
    %v3066 = vpop.f32.mrb[0].mxu0
    %v3067 = vadd.f32 %v1069, %v3066
    %3068 = vmatprep.mubr.bf16.mxu0 %v1918
    %3069 = vmatmul.mubr.bf16.gmra.mrb[0].mxu0 %v1917
    %v3070 = vpop.f32.mrb[0].mxu0
    %v3071 = vadd.f32 %v1074, %v3070
    %v3072 = vpop.f32.mrb[0].mxu0
    %v3073 = vadd.f32 %v1074, %v3072
    %v3074 = vpop.f32.mrb[0].mxu0
    %v3075 = vadd.f32 %v1079, %v3074
    %v3076 = vpop.f32.mrb[0].mxu0
    %v3077 = vadd.f32 %v1079, %v3076
    %3078 = vmatprep.mubr.bf16.mxu0 %v1921
    %3079 = vmatmul.mubr.bf16.gmra.mrb[0].mxu0 %v1920
    %v3080 = vpop.f32.mrb[0].mxu0
    %v3081 = vadd.f32 %v1084, %v3080
    %v3082 = vpop.f32.mrb[0].mxu0
    %v3083 = vadd.f32 %v1084, %v3082
    %v3084 = vpop.f32.mrb[0].mxu0
    %v3085 = vadd.f32 %v1089, %v3084
    %v3086 = vpop.f32.mrb[0].mxu0
    %v3087 = vadd.f32 %v1089, %v3086
    %3088 = vdwg.mxu0
    %3089 = vmatprep.subr.bf16.mxu0 %v2414
    %3090 = vmatpush1.bf16.msra.mxu0 %v2411
    %3091 = vmatprep.subr.bf16.mxu0 0
    %3092 = vmatpush1.bf16.msra.mxu0 0
    %3093 = vmatprep.subr.bf16.mxu0 0
    %3094 = vmatpush1.bf16.msra.mxu0 0
    %3095 = vmatprep.subr.bf16.mxu0 0
    %3096 = vmatpush1.bf16.msra.mxu0 0
    %3097 = vmatprep.subr.bf16.mxu0 0
    %3098 = vmatpush1.bf16.msra.mxu0 0
    %3099 = vmatprep.subr.bf16.mxu0 0
    %3100 = vmatpush1.bf16.msra.mxu0 0
    %3101 = vmatprep.subr.bf16.mxu0 0
    %3102 = vmatpush1.bf16.msra.mxu0 0
    %3103 = vmatprep.subr.bf16.mxu0 0
    %3104 = vmatpush1.bf16.msra.mxu0 0
    %3105 = vmatprep.subr.bf16.mxu0 0
    %3106 = vmatpush1.bf16.msra.mxu0 0
    %3107 = vmatprep.subr.bf16.mxu0 0
    %3108 = vmatpush1.bf16.msra.mxu0 0
    %3109 = vmatprep.subr.bf16.mxu0 0
    %3110 = vmatpush1.bf16.msra.mxu0 0
    %3111 = vmatprep.subr.bf16.mxu0 0
    %3112 = vmatpush1.bf16.msra.mxu0 0
    %3113 = vmatprep.subr.bf16.mxu0 0
    %3114 = vmatpush1.bf16.msra.mxu0 0
    %3115 = vmatprep.subr.bf16.mxu0 0
    %3116 = vmatpush1.bf16.msra.mxu0 0
    %3117 = vmatprep.subr.bf16.mxu0 0
    %3118 = vmatpush1.bf16.msra.mxu0 0
    %3119 = vmatprep.subr.bf16.mxu0 0
    %3120 = vmatpush1.bf16.msra.mxu0 0
    %3121 = vmatprep.mubr.bf16.mxu0 0
    %3122 = vmatmul.mubr.bf16.gmra.mrb[0].mxu0 %v2218
    %v3123 = vpop.f32.mrb[0].mxu0
    %v3124 = vadd.f32 %v2451, %v3123
    %v3125 = vpop.f32.mrb[0].mxu0
    %v3126 = vadd.f32 %v2453, %v3125
    %v3127 = vpop.f32.mrb[0].mxu0
    %v3128 = vadd.f32 %v2455, %v3127
    %v3129 = vpop.f32.mrb[0].mxu0
    %v3130 = vadd.f32 %v2457, %v3129
    %3131 = vmatprep.mubr.bf16.mxu0 0
    %3132 = vmatmul.mubr.bf16.gmra.mrb[0].mxu0 %v2221
    %v3133 = vpop.f32.mrb[0].mxu0
    %v3134 = vadd.f32 %v2461, %v3133
    %v3135 = vpop.f32.mrb[0].mxu0
    %v3136 = vadd.f32 %v2463, %v3135
    %v3137 = vpop.f32.mrb[0].mxu0
    %v3138 = vadd.f32 %v2465, %v3137
    %v3139 = vpop.f32.mrb[0].mxu0
    %v3140 = vadd.f32 %v2467, %v3139
    %3141 = vmatprep.mubr.bf16.mxu0 0
    %3142 = vmatmul.mubr.bf16.gmra.mrb[0].mxu0 %v2224
    %v3143 = vpop.f32.mrb[0].mxu0
    %v3144 = vadd.f32 %v2471, %v3143
    %v3145 = vpop.f32.mrb[0].mxu0
    %v3146 = vadd.f32 %v2473, %v3145
    %v3147 = vpop.f32.mrb[0].mxu0
    %v3148 = vadd.f32 %v2475, %v3147
    %v3149 = vpop.f32.mrb[0].mxu0
    %v3150 = vadd.f32 %v2477, %v3149
    %3151 = vmatprep.mubr.bf16.mxu0 0
    %3152 = vmatmul.mubr.bf16.gmra.mrb[0].mxu0 %v2227
    %v3153 = vpop.f32.mrb[0].mxu0
    %v3154 = vadd.f32 %v2481, %v3153
    %v3155 = vpop.f32.mrb[0].mxu0
    %v3156 = vadd.f32 %v2483, %v3155
    %v3157 = vpop.f32.mrb[0].mxu0
    %v3158 = vadd.f32 %v2485, %v3157
    %v3159 = vpop.f32.mrb[0].mxu0
    %v3160 = vadd.f32 %v2487, %v3159
    %3161 = vmatprep.mubr.bf16.mxu0 0
    %3162 = vmatmul.mubr.bf16.gmra.mrb[0].mxu0 %v2230
    %v3163 = vpop.f32.mrb[0].mxu0
    %v3164 = vadd.f32 %v2491, %v3163
    %v3165 = vpop.f32.mrb[0].mxu0
    %v3166 = vadd.f32 %v2493, %v3165
    %v3167 = vpop.f32.mrb[0].mxu0
    %v3168 = vadd.f32 %v2495, %v3167
    %v3169 = vpop.f32.mrb[0].mxu0
    %v3170 = vadd.f32 %v2497, %v3169
    %3171 = vmatprep.mubr.bf16.mxu0 0
    %3172 = vmatmul.mubr.bf16.gmra.mrb[0].mxu0 %v2233
    %v3173 = vpop.f32.mrb[0].mxu0
    %v3174 = vadd.f32 %v2501, %v3173
    %v3175 = vpop.f32.mrb[0].mxu0
    %v3176 = vadd.f32 %v2503, %v3175
    %v3177 = vpop.f32.mrb[0].mxu0
    %v3178 = vadd.f32 %v2505, %v3177
    %v3179 = vpop.f32.mrb[0].mxu0
    %v3180 = vadd.f32 %v2507, %v3179
    %3181 = vmatprep.mubr.bf16.mxu0 0
    %3182 = vmatmul.mubr.bf16.gmra.mrb[0].mxu0 %v2236
    %v3183 = vpop.f32.mrb[0].mxu0
    %v3184 = vadd.f32 %v2511, %v3183
    %v3185 = vpop.f32.mrb[0].mxu0
    %v3186 = vadd.f32 %v2513, %v3185
    %v3187 = vpop.f32.mrb[0].mxu0
    %v3188 = vadd.f32 %v2515, %v3187
    %v3189 = vpop.f32.mrb[0].mxu0
    %v3190 = vadd.f32 %v2517, %v3189
    %3191 = vmatprep.mubr.bf16.mxu0 0
    %3192 = vmatmul.mubr.bf16.gmra.mrb[0].mxu0 %v2239
    %v3193 = vpop.f32.mrb[0].mxu0
    %v3194 = vadd.f32 %v2521, %v3193
    %v3195 = vpop.f32.mrb[0].mxu0
    %v3196 = vadd.f32 %v2523, %v3195
    %v3197 = vpop.f32.mrb[0].mxu0
    %v3198 = vadd.f32 %v2525, %v3197
    %v3199 = vpop.f32.mrb[0].mxu0
    %v3200 = vadd.f32 %v2527, %v3199
    %3201 = vmatprep.mubr.bf16.mxu0 0
    %3202 = vmatmul.mubr.bf16.gmra.mrb[0].mxu0 %v2242
    %v3203 = vpop.f32.mrb[0].mxu0
    %v3204 = vadd.f32 %v2531, %v3203
    %v3205 = vpop.f32.mrb[0].mxu0
    %v3206 = vadd.f32 %v2533, %v3205
    %v3207 = vpop.f32.mrb[0].mxu0
    %v3208 = vadd.f32 %v2535, %v3207
    %v3209 = vpop.f32.mrb[0].mxu0
    %v3210 = vadd.f32 %v2537, %v3209
    %3211 = vmatprep.mubr.bf16.mxu0 0
    %3212 = vmatmul.mubr.bf16.gmra.mrb[0].mxu0 %v2245
    %v3213 = vpop.f32.mrb[0].mxu0
    %v3214 = vadd.f32 %v2541, %v3213
    %v3215 = vpop.f32.mrb[0].mxu0
    %v3216 = vadd.f32 %v2543, %v3215
    %v3217 = vpop.f32.mrb[0].mxu0
    %v3218 = vadd.f32 %v2545, %v3217
    %v3219 = vpop.f32.mrb[0].mxu0
    %v3220 = vadd.f32 %v2547, %v3219
    %3221 = vmatprep.mubr.bf16.mxu0 0
    %3222 = vmatmul.mubr.bf16.gmra.mrb[0].mxu0 %v2248
    %v3223 = vpop.f32.mrb[0].mxu0
    %v3224 = vadd.f32 %v2551, %v3223
    %v3225 = vpop.f32.mrb[0].mxu0
    %v3226 = vadd.f32 %v2553, %v3225
    %v3227 = vpop.f32.mrb[0].mxu0
    %v3228 = vadd.f32 %v2555, %v3227
    %v3229 = vpop.f32.mrb[0].mxu0
    %v3230 = vadd.f32 %v2557, %v3229
    %3231 = vmatprep.mubr.bf16.mxu0 0
    %3232 = vmatmul.mubr.bf16.gmra.mrb[0].mxu0 %v2251
    %v3233 = vpop.f32.mrb[0].mxu0
    %v3234 = vadd.f32 %v2561, %v3233
    %v3235 = vpop.f32.mrb[0].mxu0
    %v3236 = vadd.f32 %v2563, %v3235
    %v3237 = vpop.f32.mrb[0].mxu0
    %v3238 = vadd.f32 %v2565, %v3237
    %v3239 = vpop.f32.mrb[0].mxu0
    %v3240 = vadd.f32 %v2567, %v3239
    %3241 = vmatprep.mubr.bf16.mxu0 0
    %3242 = vmatmul.mubr.bf16.gmra.mrb[0].mxu0 %v2254
    %v3243 = vpop.f32.mrb[0].mxu0
    %v3244 = vadd.f32 %v2571, %v3243
    %v3245 = vpop.f32.mrb[0].mxu0
    %v3246 = vadd.f32 %v2573, %v3245
    %v3247 = vpop.f32.mrb[0].mxu0
    %v3248 = vadd.f32 %v2575, %v3247
    %v3249 = vpop.f32.mrb[0].mxu0
    %v3250 = vadd.f32 %v2577, %v3249
    %3251 = vmatprep.mubr.bf16.mxu0 0
    %3252 = vmatmul.mubr.bf16.gmra.mrb[0].mxu0 %v2257
    %v3253 = vpop.f32.mrb[0].mxu0
    %v3254 = vadd.f32 %v2581, %v3253
    %v3255 = vpop.f32.mrb[0].mxu0
    %v3256 = vadd.f32 %v2583, %v3255
    %v3257 = vpop.f32.mrb[0].mxu0
    %v3258 = vadd.f32 %v2585, %v3257
    %v3259 = vpop.f32.mrb[0].mxu0
    %v3260 = vadd.f32 %v2587, %v3259
    %3261 = vmatprep.mubr.bf16.mxu0 0
    %3262 = vmatmul.mubr.bf16.gmra.mrb[0].mxu0 %v2260
    %v3263 = vpop.f32.mrb[0].mxu0
    %v3264 = vadd.f32 %v2591, %v3263
    %v3265 = vpop.f32.mrb[0].mxu0
    %v3266 = vadd.f32 %v2593, %v3265
    %v3267 = vpop.f32.mrb[0].mxu0
    %v3268 = vadd.f32 %v2595, %v3267
    %v3269 = vpop.f32.mrb[0].mxu0
    %v3270 = vadd.f32 %v2597, %v3269
    %3271 = vmatprep.mubr.bf16.mxu0 0
    %3272 = vmatmul.mubr.bf16.gmra.mrb[0].mxu0 %v2263
    %v3273 = vpop.f32.mrb[0].mxu0
    %v3274 = vadd.f32 %v2601, %v3273
    %v3275 = vpop.f32.mrb[0].mxu0
    %v3276 = vadd.f32 %v2603, %v3275
    %v3277 = vpop.f32.mrb[0].mxu0
    %v3278 = vadd.f32 %v2605, %v3277
    %v3279 = vpop.f32.mrb[0].mxu0
    %v3280 = vadd.f32 %v2607, %v3279
    %3281 = vmatprep.mubr.bf16.mxu0 0
    %3282 = vmatmul.mubr.bf16.gmra.mrb[0].mxu0 %v2266
    %v3283 = vpop.f32.mrb[0].mxu0
    %v3284 = vadd.f32 %v2611, %v3283
    %v3285 = vpop.f32.mrb[0].mxu0
    %v3286 = vadd.f32 %v2613, %v3285
    %v3287 = vpop.f32.mrb[0].mxu0
    %v3288 = vadd.f32 %v2615, %v3287
    %v3289 = vpop.f32.mrb[0].mxu0
    %v3290 = vadd.f32 %v2617, %v3289
    %3291 = vmatprep.mubr.bf16.mxu0 0
    %3292 = vmatmul.mubr.bf16.gmra.mrb[0].mxu0 %v2269
    %v3293 = vpop.f32.mrb[0].mxu0
    %v3294 = vadd.f32 %v2621, %v3293
    %v3295 = vpop.f32.mrb[0].mxu0
    %v3296 = vadd.f32 %v2623, %v3295
    %v3297 = vpop.f32.mrb[0].mxu0
    %v3298 = vadd.f32 %v2625, %v3297
    %v3299 = vpop.f32.mrb[0].mxu0
    %v3300 = vadd.f32 %v2627, %v3299
    %3301 = vmatprep.mubr.bf16.mxu0 0
    %3302 = vmatmul.mubr.bf16.gmra.mrb[0].mxu0 %v2272
    %v3303 = vpop.f32.mrb[0].mxu0
    %v3304 = vadd.f32 %v2631, %v3303
    %v3305 = vpop.f32.mrb[0].mxu0
    %v3306 = vadd.f32 %v2633, %v3305
    %v3307 = vpop.f32.mrb[0].mxu0
    %v3308 = vadd.f32 %v2635, %v3307
    %v3309 = vpop.f32.mrb[0].mxu0
    %v3310 = vadd.f32 %v2637, %v3309
    %3311 = vmatprep.mubr.bf16.mxu0 0
    %3312 = vmatmul.mubr.bf16.gmra.mrb[0].mxu0 %v2275
    %v3313 = vpop.f32.mrb[0].mxu0
    %v3314 = vadd.f32 %v2641, %v3313
    %v3315 = vpop.f32.mrb[0].mxu0
    %v3316 = vadd.f32 %v2643, %v3315
    %v3317 = vpop.f32.mrb[0].mxu0
    %v3318 = vadd.f32 %v2645, %v3317
    %v3319 = vpop.f32.mrb[0].mxu0
    %v3320 = vadd.f32 %v2647, %v3319
    %3321 = vmatprep.mubr.bf16.mxu0 0
    %3322 = vmatmul.mubr.bf16.gmra.mrb[0].mxu0 %v2278
    %v3323 = vpop.f32.mrb[0].mxu0
    %v3324 = vadd.f32 %v2651, %v3323
    %v3325 = vpop.f32.mrb[0].mxu0
    %v3326 = vadd.f32 %v2653, %v3325
    %v3327 = vpop.f32.mrb[0].mxu0
    %v3328 = vadd.f32 %v2655, %v3327
    %v3329 = vpop.f32.mrb[0].mxu0
    %v3330 = vadd.f32 %v2657, %v3329
    %3331 = vmatprep.mubr.bf16.mxu0 0
    %3332 = vmatmul.mubr.bf16.gmra.mrb[0].mxu0 %v2281
    %v3333 = vpop.f32.mrb[0].mxu0
    %v3334 = vadd.f32 %v2661, %v3333
    %v3335 = vpop.f32.mrb[0].mxu0
    %v3336 = vadd.f32 %v2663, %v3335
    %v3337 = vpop.f32.mrb[0].mxu0
    %v3338 = vadd.f32 %v2665, %v3337
    %v3339 = vpop.f32.mrb[0].mxu0
    %v3340 = vadd.f32 %v2667, %v3339
    %3341 = vmatprep.mubr.bf16.mxu0 0
    %3342 = vmatmul.mubr.bf16.gmra.mrb[0].mxu0 %v2284
    %v3343 = vpop.f32.mrb[0].mxu0
    %v3344 = vadd.f32 %v2671, %v3343
    %v3345 = vpop.f32.mrb[0].mxu0
    %v3346 = vadd.f32 %v2673, %v3345
    %v3347 = vpop.f32.mrb[0].mxu0
    %v3348 = vadd.f32 %v2675, %v3347
    %v3349 = vpop.f32.mrb[0].mxu0
    %v3350 = vadd.f32 %v2677, %v3349
    %3351 = vmatprep.mubr.bf16.mxu0 0
    %3352 = vmatmul.mubr.bf16.gmra.mrb[0].mxu0 %v2287
    %v3353 = vpop.f32.mrb[0].mxu0
    %v3354 = vadd.f32 %v2681, %v3353
    %v3355 = vpop.f32.mrb[0].mxu0
    %v3356 = vadd.f32 %v2683, %v3355
    %v3357 = vpop.f32.mrb[0].mxu0
    %v3358 = vadd.f32 %v2685, %v3357
    %v3359 = vpop.f32.mrb[0].mxu0
    %v3360 = vadd.f32 %v2687, %v3359
    %3361 = vmatprep.mubr.bf16.mxu0 0
    %3362 = vmatmul.mubr.bf16.gmra.mrb[0].mxu0 %v2290
    %v3363 = vpop.f32.mrb[0].mxu0
    %v3364 = vadd.f32 %v2691, %v3363
    %v3365 = vpop.f32.mrb[0].mxu0
    %v3366 = vadd.f32 %v2693, %v3365
    %v3367 = vpop.f32.mrb[0].mxu0
    %v3368 = vadd.f32 %v2695, %v3367
    %v3369 = vpop.f32.mrb[0].mxu0
    %v3370 = vadd.f32 %v2697, %v3369
    %3371 = vmatprep.mubr.bf16.mxu0 0
    %3372 = vmatmul.mubr.bf16.gmra.mrb[0].mxu0 %v2293
    %v3373 = vpop.f32.mrb[0].mxu0
    %v3374 = vadd.f32 %v2701, %v3373
    %v3375 = vpop.f32.mrb[0].mxu0
    %v3376 = vadd.f32 %v2703, %v3375
    %v3377 = vpop.f32.mrb[0].mxu0
    %v3378 = vadd.f32 %v2705, %v3377
    %v3379 = vpop.f32.mrb[0].mxu0
    %v3380 = vadd.f32 %v2707, %v3379
    %3381 = vmatprep.mubr.bf16.mxu0 0
    %3382 = vmatmul.mubr.bf16.gmra.mrb[0].mxu0 %v2296
    %v3383 = vpop.f32.mrb[0].mxu0
    %v3384 = vadd.f32 %v2711, %v3383
    %v3385 = vpop.f32.mrb[0].mxu0
    %v3386 = vadd.f32 %v2713, %v3385
    %v3387 = vpop.f32.mrb[0].mxu0
    %v3388 = vadd.f32 %v2715, %v3387
    %v3389 = vpop.f32.mrb[0].mxu0
    %v3390 = vadd.f32 %v2717, %v3389
    %3391 = vmatprep.mubr.bf16.mxu0 0
    %3392 = vmatmul.mubr.bf16.gmra.mrb[0].mxu0 %v2299
    %v3393 = vpop.f32.mrb[0].mxu0
    %v3394 = vadd.f32 %v2721, %v3393
    %v3395 = vpop.f32.mrb[0].mxu0
    %v3396 = vadd.f32 %v2723, %v3395
    %v3397 = vpop.f32.mrb[0].mxu0
    %v3398 = vadd.f32 %v2725, %v3397
    %v3399 = vpop.f32.mrb[0].mxu0
    %v3400 = vadd.f32 %v2727, %v3399
    %3401 = vmatprep.mubr.bf16.mxu0 0
    %3402 = vmatmul.mubr.bf16.gmra.mrb[0].mxu0 %v2302
    %v3403 = vpop.f32.mrb[0].mxu0
    %v3404 = vadd.f32 %v2731, %v3403
    %v3405 = vpop.f32.mrb[0].mxu0
    %v3406 = vadd.f32 %v2733, %v3405
    %v3407 = vpop.f32.mrb[0].mxu0
    %v3408 = vadd.f32 %v2735, %v3407
    %v3409 = vpop.f32.mrb[0].mxu0
    %v3410 = vadd.f32 %v2737, %v3409
    %3411 = vmatprep.mubr.bf16.mxu0 0
    %3412 = vmatmul.mubr.bf16.gmra.mrb[0].mxu0 %v2305
    %v3413 = vpop.f32.mrb[0].mxu0
    %v3414 = vadd.f32 %v2741, %v3413
    %v3415 = vpop.f32.mrb[0].mxu0
    %v3416 = vadd.f32 %v2743, %v3415
    %v3417 = vpop.f32.mrb[0].mxu0
    %v3418 = vadd.f32 %v2745, %v3417
    %v3419 = vpop.f32.mrb[0].mxu0
    %v3420 = vadd.f32 %v2747, %v3419
    %3421 = vmatprep.mubr.bf16.mxu0 0
    %3422 = vmatmul.mubr.bf16.gmra.mrb[0].mxu0 %v2308
    %v3423 = vpop.f32.mrb[0].mxu0
    %v3424 = vadd.f32 %v2751, %v3423
    %v3425 = vpop.f32.mrb[0].mxu0
    %v3426 = vadd.f32 %v2753, %v3425
    %v3427 = vpop.f32.mrb[0].mxu0
    %v3428 = vadd.f32 %v2755, %v3427
    %v3429 = vpop.f32.mrb[0].mxu0
    %v3430 = vadd.f32 %v2757, %v3429
    %3431 = vmatprep.mubr.bf16.mxu0 0
    %3432 = vmatmul.mubr.bf16.gmra.mrb[0].mxu0 %v2311
    %v3433 = vpop.f32.mrb[0].mxu0
    %v3434 = vadd.f32 %v2761, %v3433
    %v3435 = vpop.f32.mrb[0].mxu0
    %v3436 = vadd.f32 %v2763, %v3435
    %v3437 = vpop.f32.mrb[0].mxu0
    %v3438 = vadd.f32 %v2765, %v3437
    %v3439 = vpop.f32.mrb[0].mxu0
    %v3440 = vadd.f32 %v2767, %v3439
    %3441 = vmatprep.mubr.bf16.mxu0 0
    %3442 = vmatmul.mubr.bf16.gmra.mrb[0].mxu0 %v2314
    %v3443 = vpop.f32.mrb[0].mxu0
    %v3444 = vadd.f32 %v2771, %v3443
    %v3445 = vpop.f32.mrb[0].mxu0
    %v3446 = vadd.f32 %v2773, %v3445
    %v3447 = vpop.f32.mrb[0].mxu0
    %v3448 = vadd.f32 %v2775, %v3447
    %v3449 = vpop.f32.mrb[0].mxu0
    %v3450 = vadd.f32 %v2777, %v3449
    %3451 = vmatprep.mubr.bf16.mxu0 0
    %3452 = vmatmul.mubr.bf16.gmra.mrb[0].mxu0 %v2317
    %v3453 = vpop.f32.mrb[0].mxu0
    %v3454 = vadd.f32 %v2781, %v3453
    %v3455 = vpop.f32.mrb[0].mxu0
    %v3456 = vadd.f32 %v2783, %v3455
    %v3457 = vpop.f32.mrb[0].mxu0
    %v3458 = vadd.f32 %v2785, %v3457
    %v3459 = vpop.f32.mrb[0].mxu0
    %v3460 = vadd.f32 %v2787, %v3459
    %3461 = vmatprep.mubr.bf16.mxu0 0
    %3462 = vmatmul.mubr.bf16.gmra.mrb[0].mxu0 %v2320
    %v3463 = vpop.f32.mrb[0].mxu0
    %v3464 = vadd.f32 %v2791, %v3463
    %v3465 = vpop.f32.mrb[0].mxu0
    %v3466 = vadd.f32 %v2793, %v3465
    %v3467 = vpop.f32.mrb[0].mxu0
    %v3468 = vadd.f32 %v2795, %v3467
    %v3469 = vpop.f32.mrb[0].mxu0
    %v3470 = vadd.f32 %v2797, %v3469
    %3471 = vmatprep.mubr.bf16.mxu0 0
    %3472 = vmatmul.mubr.bf16.gmra.mrb[0].mxu0 %v2323
    %v3473 = vpop.f32.mrb[0].mxu0
    %v3474 = vadd.f32 %v2801, %v3473
    %v3475 = vpop.f32.mrb[0].mxu0
    %v3476 = vadd.f32 %v2803, %v3475
    %v3477 = vpop.f32.mrb[0].mxu0
    %v3478 = vadd.f32 %v2805, %v3477
    %v3479 = vpop.f32.mrb[0].mxu0
    %v3480 = vadd.f32 %v2807, %v3479
    %3481 = vmatprep.mubr.bf16.mxu0 0
    %3482 = vmatmul.mubr.bf16.gmra.mrb[0].mxu0 %v2326
    %v3483 = vpop.f32.mrb[0].mxu0
    %v3484 = vadd.f32 %v2811, %v3483
    %v3485 = vpop.f32.mrb[0].mxu0
    %v3486 = vadd.f32 %v2813, %v3485
    %v3487 = vpop.f32.mrb[0].mxu0
    %v3488 = vadd.f32 %v2815, %v3487
    %v3489 = vpop.f32.mrb[0].mxu0
    %v3490 = vadd.f32 %v2817, %v3489
    %3491 = vmatprep.mubr.bf16.mxu0 0
    %3492 = vmatmul.mubr.bf16.gmra.mrb[0].mxu0 %v2329
    %v3493 = vpop.f32.mrb[0].mxu0
    %v3494 = vadd.f32 %v2821, %v3493
    %v3495 = vpop.f32.mrb[0].mxu0
    %v3496 = vadd.f32 %v2823, %v3495
    %v3497 = vpop.f32.mrb[0].mxu0
    %v3498 = vadd.f32 %v2825, %v3497
    %v3499 = vpop.f32.mrb[0].mxu0
    %v3500 = vadd.f32 %v2827, %v3499
    %3501 = vmatprep.mubr.bf16.mxu0 0
    %3502 = vmatmul.mubr.bf16.gmra.mrb[0].mxu0 %v2332
    %v3503 = vpop.f32.mrb[0].mxu0
    %v3504 = vadd.f32 %v2831, %v3503
    %v3505 = vpop.f32.mrb[0].mxu0
    %v3506 = vadd.f32 %v2833, %v3505
    %v3507 = vpop.f32.mrb[0].mxu0
    %v3508 = vadd.f32 %v2835, %v3507
    %v3509 = vpop.f32.mrb[0].mxu0
    %v3510 = vadd.f32 %v2837, %v3509
    %3511 = vmatprep.mubr.bf16.mxu0 0
    %3512 = vmatmul.mubr.bf16.gmra.mrb[0].mxu0 %v2335
    %v3513 = vpop.f32.mrb[0].mxu0
    %v3514 = vadd.f32 %v2841, %v3513
    %v3515 = vpop.f32.mrb[0].mxu0
    %v3516 = vadd.f32 %v2843, %v3515
    %v3517 = vpop.f32.mrb[0].mxu0
    %v3518 = vadd.f32 %v2845, %v3517
    %v3519 = vpop.f32.mrb[0].mxu0
    %v3520 = vadd.f32 %v2847, %v3519
    %3521 = vmatprep.mubr.bf16.mxu0 0
    %3522 = vmatmul.mubr.bf16.gmra.mrb[0].mxu0 %v2338
    %v3523 = vpop.f32.mrb[0].mxu0
    %v3524 = vadd.f32 %v2851, %v3523
    %v3525 = vpop.f32.mrb[0].mxu0
    %v3526 = vadd.f32 %v2853, %v3525
    %v3527 = vpop.f32.mrb[0].mxu0
    %v3528 = vadd.f32 %v2855, %v3527
    %v3529 = vpop.f32.mrb[0].mxu0
    %v3530 = vadd.f32 %v2857, %v3529
    %3531 = vmatprep.mubr.bf16.mxu0 0
    %3532 = vmatmul.mubr.bf16.gmra.mrb[0].mxu0 %v2341
    %v3533 = vpop.f32.mrb[0].mxu0
    %v3534 = vadd.f32 %v2861, %v3533
    %v3535 = vpop.f32.mrb[0].mxu0
    %v3536 = vadd.f32 %v2863, %v3535
    %v3537 = vpop.f32.mrb[0].mxu0
    %v3538 = vadd.f32 %v2865, %v3537
    %v3539 = vpop.f32.mrb[0].mxu0
    %v3540 = vadd.f32 %v2867, %v3539
    %3541 = vmatprep.mubr.bf16.mxu0 0
    %3542 = vmatmul.mubr.bf16.gmra.mrb[0].mxu0 %v2344
    %v3543 = vpop.f32.mrb[0].mxu0
    %v3544 = vadd.f32 %v2871, %v3543
    %v3545 = vpop.f32.mrb[0].mxu0
    %v3546 = vadd.f32 %v2873, %v3545
    %v3547 = vpop.f32.mrb[0].mxu0
    %v3548 = vadd.f32 %v2875, %v3547
    %v3549 = vpop.f32.mrb[0].mxu0
    %v3550 = vadd.f32 %v2877, %v3549
    %3551 = vmatprep.mubr.bf16.mxu0 0
    %3552 = vmatmul.mubr.bf16.gmra.mrb[0].mxu0 %v2347
    %v3553 = vpop.f32.mrb[0].mxu0
    %v3554 = vadd.f32 %v2881, %v3553
    %v3555 = vpop.f32.mrb[0].mxu0
    %v3556 = vadd.f32 %v2883, %v3555
    %v3557 = vpop.f32.mrb[0].mxu0
    %v3558 = vadd.f32 %v2885, %v3557
    %v3559 = vpop.f32.mrb[0].mxu0
    %v3560 = vadd.f32 %v2887, %v3559
    %3561 = vmatprep.mubr.bf16.mxu0 0
    %3562 = vmatmul.mubr.bf16.gmra.mrb[0].mxu0 %v2350
    %v3563 = vpop.f32.mrb[0].mxu0
    %v3564 = vadd.f32 %v2891, %v3563
    %v3565 = vpop.f32.mrb[0].mxu0
    %v3566 = vadd.f32 %v2893, %v3565
    %v3567 = vpop.f32.mrb[0].mxu0
    %v3568 = vadd.f32 %v2895, %v3567
    %v3569 = vpop.f32.mrb[0].mxu0
    %v3570 = vadd.f32 %v2897, %v3569
    %3571 = vmatprep.mubr.bf16.mxu0 0
    %3572 = vmatmul.mubr.bf16.gmra.mrb[0].mxu0 %v2353
    %v3573 = vpop.f32.mrb[0].mxu0
    %v3574 = vadd.f32 %v2901, %v3573
    %v3575 = vpop.f32.mrb[0].mxu0
    %v3576 = vadd.f32 %v2903, %v3575
    %v3577 = vpop.f32.mrb[0].mxu0
    %v3578 = vadd.f32 %v2905, %v3577
    %v3579 = vpop.f32.mrb[0].mxu0
    %v3580 = vadd.f32 %v2907, %v3579
    %3581 = vmatprep.mubr.bf16.mxu0 0
    %3582 = vmatmul.mubr.bf16.gmra.mrb[0].mxu0 %v2356
    %v3583 = vpop.f32.mrb[0].mxu0
    %v3584 = vadd.f32 %v2911, %v3583
    %v3585 = vpop.f32.mrb[0].mxu0
    %v3586 = vadd.f32 %v2913, %v3585
    %v3587 = vpop.f32.mrb[0].mxu0
    %v3588 = vadd.f32 %v2915, %v3587
    %v3589 = vpop.f32.mrb[0].mxu0
    %v3590 = vadd.f32 %v2917, %v3589
    %3591 = vmatprep.mubr.bf16.mxu0 0
    %3592 = vmatmul.mubr.bf16.gmra.mrb[0].mxu0 %v2359
    %v3593 = vpop.f32.mrb[0].mxu0
    %v3594 = vadd.f32 %v2921, %v3593
    %v3595 = vpop.f32.mrb[0].mxu0
    %v3596 = vadd.f32 %v2923, %v3595
    %v3597 = vpop.f32.mrb[0].mxu0
    %v3598 = vadd.f32 %v2925, %v3597
    %v3599 = vpop.f32.mrb[0].mxu0
    %v3600 = vadd.f32 %v2927, %v3599
    %3601 = vmatprep.mubr.bf16.mxu0 0
    %3602 = vmatmul.mubr.bf16.gmra.mrb[0].mxu0 %v2362
    %v3603 = vpop.f32.mrb[0].mxu0
    %v3604 = vadd.f32 %v2931, %v3603
    %v3605 = vpop.f32.mrb[0].mxu0
    %v3606 = vadd.f32 %v2933, %v3605
    %v3607 = vpop.f32.mrb[0].mxu0
    %v3608 = vadd.f32 %v2935, %v3607
    %v3609 = vpop.f32.mrb[0].mxu0
    %v3610 = vadd.f32 %v2937, %v3609
    %3611 = vmatprep.mubr.bf16.mxu0 0
    %3612 = vmatmul.mubr.bf16.gmra.mrb[0].mxu0 %v2365
    %v3613 = vpop.f32.mrb[0].mxu0
    %v3614 = vadd.f32 %v2941, %v3613
    %v3615 = vpop.f32.mrb[0].mxu0
    %v3616 = vadd.f32 %v2943, %v3615
    %v3617 = vpop.f32.mrb[0].mxu0
    %v3618 = vadd.f32 %v2945, %v3617
    %v3619 = vpop.f32.mrb[0].mxu0
    %v3620 = vadd.f32 %v2947, %v3619
    %3621 = vmatprep.mubr.bf16.mxu0 0
    %3622 = vmatmul.mubr.bf16.gmra.mrb[0].mxu0 %v2368
    %v3623 = vpop.f32.mrb[0].mxu0
    %v3624 = vadd.f32 %v2951, %v3623
    %v3625 = vpop.f32.mrb[0].mxu0
    %v3626 = vadd.f32 %v2953, %v3625
    %v3627 = vpop.f32.mrb[0].mxu0
    %v3628 = vadd.f32 %v2955, %v3627
    %v3629 = vpop.f32.mrb[0].mxu0
    %v3630 = vadd.f32 %v2957, %v3629
    %3631 = vmatprep.mubr.bf16.mxu0 0
    %3632 = vmatmul.mubr.bf16.gmra.mrb[0].mxu0 %v2371
    %v3633 = vpop.f32.mrb[0].mxu0
    %v3634 = vadd.f32 %v2961, %v3633
    %v3635 = vpop.f32.mrb[0].mxu0
    %v3636 = vadd.f32 %v2963, %v3635
    %v3637 = vpop.f32.mrb[0].mxu0
    %v3638 = vadd.f32 %v2965, %v3637
    %v3639 = vpop.f32.mrb[0].mxu0
    %v3640 = vadd.f32 %v2967, %v3639
    %3641 = vmatprep.mubr.bf16.mxu0 0
    %3642 = vmatmul.mubr.bf16.gmra.mrb[0].mxu0 %v2374
    %v3643 = vpop.f32.mrb[0].mxu0
    %v3644 = vadd.f32 %v2971, %v3643
    %v3645 = vpop.f32.mrb[0].mxu0
    %v3646 = vadd.f32 %v2973, %v3645
    %v3647 = vpop.f32.mrb[0].mxu0
    %v3648 = vadd.f32 %v2975, %v3647
    %v3649 = vpop.f32.mrb[0].mxu0
    %v3650 = vadd.f32 %v2977, %v3649
    %3651 = vmatprep.mubr.bf16.mxu0 0
    %3652 = vmatmul.mubr.bf16.gmra.mrb[0].mxu0 %v2377
    %v3653 = vpop.f32.mrb[0].mxu0
    %v3654 = vadd.f32 %v2981, %v3653
    %v3655 = vpop.f32.mrb[0].mxu0
    %v3656 = vadd.f32 %v2983, %v3655
    %v3657 = vpop.f32.mrb[0].mxu0
    %v3658 = vadd.f32 %v2985, %v3657
    %v3659 = vpop.f32.mrb[0].mxu0
    %v3660 = vadd.f32 %v2987, %v3659
    %3661 = vmatprep.mubr.bf16.mxu0 0
    %3662 = vmatmul.mubr.bf16.gmra.mrb[0].mxu0 %v2380
    %v3663 = vpop.f32.mrb[0].mxu0
    %v3664 = vadd.f32 %v2991, %v3663
    %v3665 = vpop.f32.mrb[0].mxu0
    %v3666 = vadd.f32 %v2993, %v3665
    %v3667 = vpop.f32.mrb[0].mxu0
    %v3668 = vadd.f32 %v2995, %v3667
    %v3669 = vpop.f32.mrb[0].mxu0
    %v3670 = vadd.f32 %v2997, %v3669
    %3671 = vmatprep.mubr.bf16.mxu0 0
    %3672 = vmatmul.mubr.bf16.gmra.mrb[0].mxu0 %v2383
    %v3673 = vpop.f32.mrb[0].mxu0
    %v3674 = vadd.f32 %v3001, %v3673
    %v3675 = vpop.f32.mrb[0].mxu0
    %v3676 = vadd.f32 %v3003, %v3675
    %v3677 = vpop.f32.mrb[0].mxu0
    %v3678 = vadd.f32 %v3005, %v3677
    %v3679 = vpop.f32.mrb[0].mxu0
    %v3680 = vadd.f32 %v3007, %v3679
    %3681 = vmatprep.mubr.bf16.mxu0 0
    %3682 = vmatmul.mubr.bf16.gmra.mrb[0].mxu0 %v2386
    %v3683 = vpop.f32.mrb[0].mxu0
    %v3684 = vadd.f32 %v3011, %v3683
    %v3685 = vpop.f32.mrb[0].mxu0
    %v3686 = vadd.f32 %v3013, %v3685
    %v3687 = vpop.f32.mrb[0].mxu0
    %v3688 = vadd.f32 %v3015, %v3687
    %v3689 = vpop.f32.mrb[0].mxu0
    %v3690 = vadd.f32 %v3017, %v3689
    %3691 = vmatprep.mubr.bf16.mxu0 0
    %3692 = vmatmul.mubr.bf16.gmra.mrb[0].mxu0 %v2389
    %v3693 = vpop.f32.mrb[0].mxu0
    %v3694 = vadd.f32 %v3021, %v3693
    %v3695 = vpop.f32.mrb[0].mxu0
    %v3696 = vadd.f32 %v3023, %v3695
    %v3697 = vpop.f32.mrb[0].mxu0
    %v3698 = vadd.f32 %v3025, %v3697
    %v3699 = vpop.f32.mrb[0].mxu0
    %v3700 = vadd.f32 %v3027, %v3699
    %3701 = vmatprep.mubr.bf16.mxu0 0
    %3702 = vmatmul.mubr.bf16.gmra.mrb[0].mxu0 %v2392
    %v3703 = vpop.f32.mrb[0].mxu0
    %v3704 = vadd.f32 %v3031, %v3703
    %v3705 = vpop.f32.mrb[0].mxu0
    %v3706 = vadd.f32 %v3033, %v3705
    %v3707 = vpop.f32.mrb[0].mxu0
    %v3708 = vadd.f32 %v3035, %v3707
    %v3709 = vpop.f32.mrb[0].mxu0
    %v3710 = vadd.f32 %v3037, %v3709
    %3711 = vmatprep.mubr.bf16.mxu0 0
    %3712 = vmatmul.mubr.bf16.gmra.mrb[0].mxu0 %v2395
    %v3713 = vpop.f32.mrb[0].mxu0
    %v3714 = vadd.f32 %v3041, %v3713
    %v3715 = vpop.f32.mrb[0].mxu0
    %v3716 = vadd.f32 %v3043, %v3715
    %v3717 = vpop.f32.mrb[0].mxu0
    %v3718 = vadd.f32 %v3045, %v3717
    %v3719 = vpop.f32.mrb[0].mxu0
    %v3720 = vadd.f32 %v3047, %v3719
    %3721 = vmatprep.mubr.bf16.mxu0 0
    %3722 = vmatmul.mubr.bf16.gmra.mrb[0].mxu0 %v2398
    %v3723 = vpop.f32.mrb[0].mxu0
    %v3724 = vadd.f32 %v3051, %v3723
    %v3725 = vpop.f32.mrb[0].mxu0
    %v3726 = vadd.f32 %v3053, %v3725
    %v3727 = vpop.f32.mrb[0].mxu0
    %v3728 = vadd.f32 %v3055, %v3727
    %v3729 = vpop.f32.mrb[0].mxu0
    %v3730 = vadd.f32 %v3057, %v3729
    %3731 = vmatprep.mubr.bf16.mxu0 0
    %3732 = vmatmul.mubr.bf16.gmra.mrb[0].mxu0 %v2401
    %v3733 = vpop.f32.mrb[0].mxu0
    %v3734 = vadd.f32 %v3061, %v3733
    %v3735 = vpop.f32.mrb[0].mxu0
    %v3736 = vadd.f32 %v3063, %v3735
    %v3737 = vpop.f32.mrb[0].mxu0
    %v3738 = vadd.f32 %v3065, %v3737
    %v3739 = vpop.f32.mrb[0].mxu0
    %v3740 = vadd.f32 %v3067, %v3739
    %3741 = vmatprep.mubr.bf16.mxu0 0
    %3742 = vmatmul.mubr.bf16.gmra.mrb[0].mxu0 %v2404
    %v3743 = vpop.f32.mrb[0].mxu0
    %v3744 = vadd.f32 %v3071, %v3743
    %v3745 = vpop.f32.mrb[0].mxu0
    %v3746 = vadd.f32 %v3073, %v3745
    %v3747 = vpop.f32.mrb[0].mxu0
    %v3748 = vadd.f32 %v3075, %v3747
    %v3749 = vpop.f32.mrb[0].mxu0
    %v3750 = vadd.f32 %v3077, %v3749
    %3751 = vmatprep.mubr.bf16.mxu0 0
    %3752 = vmatmul.mubr.bf16.gmra.mrb[0].mxu0 %v2407
    %v3753 = vpop.f32.mrb[0].mxu0
    %v3754 = vadd.f32 %v3081, %v3753
    %v3755 = vpop.f32.mrb[0].mxu0
    %v3756 = vadd.f32 %v3083, %v3755
    %v3757 = vpop.f32.mrb[0].mxu0
    %v3758 = vadd.f32 %v3085, %v3757
    %v3759 = vpop.f32.mrb[0].mxu0
    %v3760 = vadd.f32 %v3087, %v3759
    %3761 = vdwg.mxu0
    %v3762 = vmax.f32 %v3124, 0.0
    %v3763 = vmax.f32 %v3126, 0.0
    %v3764 = vmax.f32 %v3128, 0.0
    %v3765 = vmax.f32 %v3130, 0.0
    %v3766 = vmax.f32 %v3134, 0.0
    %v3767 = vmax.f32 %v3136, 0.0
    %v3768 = vmax.f32 %v3138, 0.0
    %v3769 = vmax.f32 %v3140, 0.0
    %v3770 = vmax.f32 %v3144, 0.0
    %v3771 = vmax.f32 %v3146, 0.0
    %v3772 = vmax.f32 %v3148, 0.0
    %v3773 = vmax.f32 %v3150, 0.0
    %v3774 = vmax.f32 %v3154, 0.0
    %v3775 = vmax.f32 %v3156, 0.0
    %v3776 = vmax.f32 %v3158, 0.0
    %v3777 = vmax.f32 %v3160, 0.0
    %v3778 = vmax.f32 %v3164, 0.0
    %v3779 = vmax.f32 %v3166, 0.0
    %v3780 = vmax.f32 %v3168, 0.0
    %v3781 = vmax.f32 %v3170, 0.0
    %v3782 = vmax.f32 %v3174, 0.0
    %v3783 = vmax.f32 %v3176, 0.0
    %v3784 = vmax.f32 %v3178, 0.0
    %v3785 = vmax.f32 %v3180, 0.0
    %v3786 = vmax.f32 %v3184, 0.0
    %v3787 = vmax.f32 %v3186, 0.0
    %v3788 = vmax.f32 %v3188, 0.0
    %v3789 = vmax.f32 %v3190, 0.0
    %v3790 = vmax.f32 %v3194, 0.0
    %v3791 = vmax.f32 %v3196, 0.0
    %v3792 = vmax.f32 %v3198, 0.0
    %v3793 = vmax.f32 %v3200, 0.0
    %v3794 = vmax.f32 %v3204, 0.0
    %v3795 = vmax.f32 %v3206, 0.0
    %v3796 = vmax.f32 %v3208, 0.0
    %v3797 = vmax.f32 %v3210, 0.0
    %v3798 = vmax.f32 %v3214, 0.0
    %v3799 = vmax.f32 %v3216, 0.0
    %v3800 = vmax.f32 %v3218, 0.0
    %v3801 = vmax.f32 %v3220, 0.0
    %v3802 = vmax.f32 %v3224, 0.0
    %v3803 = vmax.f32 %v3226, 0.0
    %v3804 = vmax.f32 %v3228, 0.0
    %v3805 = vmax.f32 %v3230, 0.0
    %v3806 = vmax.f32 %v3234, 0.0
    %v3807 = vmax.f32 %v3236, 0.0
    %v3808 = vmax.f32 %v3238, 0.0
    %v3809 = vmax.f32 %v3240, 0.0
    %v3810 = vmax.f32 %v3244, 0.0
    %v3811 = vmax.f32 %v3246, 0.0
    %v3812 = vmax.f32 %v3248, 0.0
    %v3813 = vmax.f32 %v3250, 0.0
    %v3814 = vmax.f32 %v3254, 0.0
    %v3815 = vmax.f32 %v3256, 0.0
    %v3816 = vmax.f32 %v3258, 0.0
    %v3817 = vmax.f32 %v3260, 0.0
    %v3818 = vmax.f32 %v3264, 0.0
    %v3819 = vmax.f32 %v3266, 0.0
    %v3820 = vmax.f32 %v3268, 0.0
    %v3821 = vmax.f32 %v3270, 0.0
    %v3822 = vmax.f32 %v3274, 0.0
    %v3823 = vmax.f32 %v3276, 0.0
    %v3824 = vmax.f32 %v3278, 0.0
    %v3825 = vmax.f32 %v3280, 0.0
    %v3826 = vmax.f32 %v3284, 0.0
    %v3827 = vmax.f32 %v3286, 0.0
    %v3828 = vmax.f32 %v3288, 0.0
    %v3829 = vmax.f32 %v3290, 0.0
    %v3830 = vmax.f32 %v3294, 0.0
    %v3831 = vmax.f32 %v3296, 0.0
    %v3832 = vmax.f32 %v3298, 0.0
    %v3833 = vmax.f32 %v3300, 0.0
    %v3834 = vmax.f32 %v3304, 0.0
    %v3835 = vmax.f32 %v3306, 0.0
    %v3836 = vmax.f32 %v3308, 0.0
    %v3837 = vmax.f32 %v3310, 0.0
    %v3838 = vmax.f32 %v3314, 0.0
    %v3839 = vmax.f32 %v3316, 0.0
    %v3840 = vmax.f32 %v3318, 0.0
    %v3841 = vmax.f32 %v3320, 0.0
    %v3842 = vmax.f32 %v3324, 0.0
    %v3843 = vmax.f32 %v3326, 0.0
    %v3844 = vmax.f32 %v3328, 0.0
    %v3845 = vmax.f32 %v3330, 0.0
    %v3846 = vmax.f32 %v3334, 0.0
    %v3847 = vmax.f32 %v3336, 0.0
    %v3848 = vmax.f32 %v3338, 0.0
    %v3849 = vmax.f32 %v3340, 0.0
    %v3850 = vmax.f32 %v3344, 0.0
    %v3851 = vmax.f32 %v3346, 0.0
    %v3852 = vmax.f32 %v3348, 0.0
    %v3853 = vmax.f32 %v3350, 0.0
    %v3854 = vmax.f32 %v3354, 0.0
    %v3855 = vmax.f32 %v3356, 0.0
    %v3856 = vmax.f32 %v3358, 0.0
    %v3857 = vmax.f32 %v3360, 0.0
    %v3858 = vmax.f32 %v3364, 0.0
    %v3859 = vmax.f32 %v3366, 0.0
    %v3860 = vmax.f32 %v3368, 0.0
    %v3861 = vmax.f32 %v3370, 0.0
    %v3862 = vmax.f32 %v3374, 0.0
    %v3863 = vmax.f32 %v3376, 0.0
    %v3864 = vmax.f32 %v3378, 0.0
    %v3865 = vmax.f32 %v3380, 0.0
    %v3866 = vmax.f32 %v3384, 0.0
    %v3867 = vmax.f32 %v3386, 0.0
    %v3868 = vmax.f32 %v3388, 0.0
    %v3869 = vmax.f32 %v3390, 0.0
    %v3870 = vmax.f32 %v3394, 0.0
    %v3871 = vmax.f32 %v3396, 0.0
    %v3872 = vmax.f32 %v3398, 0.0
    %v3873 = vmax.f32 %v3400, 0.0
    %v3874 = vmax.f32 %v3404, 0.0
    %v3875 = vmax.f32 %v3406, 0.0
    %v3876 = vmax.f32 %v3408, 0.0
    %v3877 = vmax.f32 %v3410, 0.0
    %v3878 = vmax.f32 %v3414, 0.0
    %v3879 = vmax.f32 %v3416, 0.0
    %v3880 = vmax.f32 %v3418, 0.0
    %v3881 = vmax.f32 %v3420, 0.0
    %v3882 = vmax.f32 %v3424, 0.0
    %v3883 = vmax.f32 %v3426, 0.0
    %v3884 = vmax.f32 %v3428, 0.0
    %v3885 = vmax.f32 %v3430, 0.0
    %v3886 = vmax.f32 %v3434, 0.0
    %v3887 = vmax.f32 %v3436, 0.0
    %v3888 = vmax.f32 %v3438, 0.0
    %v3889 = vmax.f32 %v3440, 0.0
    %v3890 = vmax.f32 %v3444, 0.0
    %v3891 = vmax.f32 %v3446, 0.0
    %v3892 = vmax.f32 %v3448, 0.0
    %v3893 = vmax.f32 %v3450, 0.0
    %v3894 = vmax.f32 %v3454, 0.0
    %v3895 = vmax.f32 %v3456, 0.0
    %v3896 = vmax.f32 %v3458, 0.0
    %v3897 = vmax.f32 %v3460, 0.0
    %v3898 = vmax.f32 %v3464, 0.0
    %v3899 = vmax.f32 %v3466, 0.0
    %v3900 = vmax.f32 %v3468, 0.0
    %v3901 = vmax.f32 %v3470, 0.0
    %v3902 = vmax.f32 %v3474, 0.0
    %v3903 = vmax.f32 %v3476, 0.0
    %v3904 = vmax.f32 %v3478, 0.0
    %v3905 = vmax.f32 %v3480, 0.0
    %v3906 = vmax.f32 %v3484, 0.0
    %v3907 = vmax.f32 %v3486, 0.0
    %v3908 = vmax.f32 %v3488, 0.0
    %v3909 = vmax.f32 %v3490, 0.0
    %v3910 = vmax.f32 %v3494, 0.0
    %v3911 = vmax.f32 %v3496, 0.0
    %v3912 = vmax.f32 %v3498, 0.0
    %v3913 = vmax.f32 %v3500, 0.0
    %v3914 = vmax.f32 %v3504, 0.0
    %v3915 = vmax.f32 %v3506, 0.0
    %v3916 = vmax.f32 %v3508, 0.0
    %v3917 = vmax.f32 %v3510, 0.0
    %v3918 = vmax.f32 %v3514, 0.0
    %v3919 = vmax.f32 %v3516, 0.0
    %v3920 = vmax.f32 %v3518, 0.0
    %v3921 = vmax.f32 %v3520, 0.0
    %v3922 = vmax.f32 %v3524, 0.0
    %v3923 = vmax.f32 %v3526, 0.0
    %v3924 = vmax.f32 %v3528, 0.0
    %v3925 = vmax.f32 %v3530, 0.0
    %v3926 = vmax.f32 %v3534, 0.0
    %v3927 = vmax.f32 %v3536, 0.0
    %v3928 = vmax.f32 %v3538, 0.0
    %v3929 = vmax.f32 %v3540, 0.0
    %v3930 = vmax.f32 %v3544, 0.0
    %v3931 = vmax.f32 %v3546, 0.0
    %v3932 = vmax.f32 %v3548, 0.0
    %v3933 = vmax.f32 %v3550, 0.0
    %v3934 = vmax.f32 %v3554, 0.0
    %v3935 = vmax.f32 %v3556, 0.0
    %v3936 = vmax.f32 %v3558, 0.0
    %v3937 = vmax.f32 %v3560, 0.0
    %v3938 = vmax.f32 %v3564, 0.0
    %v3939 = vmax.f32 %v3566, 0.0
    %v3940 = vmax.f32 %v3568, 0.0
    %v3941 = vmax.f32 %v3570, 0.0
    %v3942 = vmax.f32 %v3574, 0.0
    %v3943 = vmax.f32 %v3576, 0.0
    %v3944 = vmax.f32 %v3578, 0.0
    %v3945 = vmax.f32 %v3580, 0.0
    %v3946 = vmax.f32 %v3584, 0.0
    %v3947 = vmax.f32 %v3586, 0.0
    %v3948 = vmax.f32 %v3588, 0.0
    %v3949 = vmax.f32 %v3590, 0.0
    %v3950 = vmax.f32 %v3594, 0.0
    %v3951 = vmax.f32 %v3596, 0.0
    %v3952 = vmax.f32 %v3598, 0.0
    %v3953 = vmax.f32 %v3600, 0.0
    %v3954 = vmax.f32 %v3604, 0.0
    %v3955 = vmax.f32 %v3606, 0.0
    %v3956 = vmax.f32 %v3608, 0.0
    %v3957 = vmax.f32 %v3610, 0.0
    %v3958 = vmax.f32 %v3614, 0.0
    %v3959 = vmax.f32 %v3616, 0.0
    %v3960 = vmax.f32 %v3618, 0.0
    %v3961 = vmax.f32 %v3620, 0.0
    %v3962 = vmax.f32 %v3624, 0.0
    %v3963 = vmax.f32 %v3626, 0.0
    %v3964 = vmax.f32 %v3628, 0.0
    %v3965 = vmax.f32 %v3630, 0.0
    %v3966 = vmax.f32 %v3634, 0.0
    %v3967 = vmax.f32 %v3636, 0.0
    %v3968 = vmax.f32 %v3638, 0.0
    %v3969 = vmax.f32 %v3640, 0.0
    %v3970 = vmax.f32 %v3644, 0.0
    %v3971 = vmax.f32 %v3646, 0.0
    %v3972 = vmax.f32 %v3648, 0.0
    %v3973 = vmax.f32 %v3650, 0.0
    %v3974 = vmax.f32 %v3654, 0.0
    %v3975 = vmax.f32 %v3656, 0.0
    %v3976 = vmax.f32 %v3658, 0.0
    %v3977 = vmax.f32 %v3660, 0.0
    %v3978 = vmax.f32 %v3664, 0.0
    %v3979 = vmax.f32 %v3666, 0.0
    %v3980 = vmax.f32 %v3668, 0.0
    %v3981 = vmax.f32 %v3670, 0.0
    %v3982 = vmax.f32 %v3674, 0.0
    %v3983 = vmax.f32 %v3676, 0.0
    %v3984 = vmax.f32 %v3678, 0.0
    %v3985 = vmax.f32 %v3680, 0.0
    %v3986 = vmax.f32 %v3684, 0.0
    %v3987 = vmax.f32 %v3686, 0.0
    %v3988 = vmax.f32 %v3688, 0.0
    %v3989 = vmax.f32 %v3690, 0.0
    %v3990 = vmax.f32 %v3694, 0.0
    %v3991 = vmax.f32 %v3696, 0.0
    %v3992 = vmax.f32 %v3698, 0.0
    %v3993 = vmax.f32 %v3700, 0.0
    %v3994 = vmax.f32 %v3704, 0.0
    %v3995 = vmax.f32 %v3706, 0.0
    %v3996 = vmax.f32 %v3708, 0.0
    %v3997 = vmax.f32 %v3710, 0.0
    %v3998 = vmax.f32 %v3714, 0.0
    %v3999 = vmax.f32 %v3716, 0.0
    %v4000 = vmax.f32 %v3718, 0.0
    %v4001 = vmax.f32 %v3720, 0.0
    %v4002 = vmax.f32 %v3724, 0.0
    %v4003 = vmax.f32 %v3726, 0.0
    %v4004 = vmax.f32 %v3728, 0.0
    %v4005 = vmax.f32 %v3730, 0.0
    %v4006 = vmax.f32 %v3734, 0.0
    %v4007 = vmax.f32 %v3736, 0.0
    %v4008 = vmax.f32 %v3738, 0.0
    %v4009 = vmax.f32 %v3740, 0.0
    %v4010 = vmax.f32 %v3744, 0.0
    %v4011 = vmax.f32 %v3746, 0.0
    %v4012 = vmax.f32 %v3748, 0.0
    %v4013 = vmax.f32 %v3750, 0.0
    %v4014 = vmax.f32 %v3754, 0.0
    %v4015 = vmax.f32 %v3756, 0.0
    %v4016 = vmax.f32 %v3758, 0.0
    %v4017 = vmax.f32 %v3760, 0.0
    %v4018 = vpack.c.bf16 %v3764, %v3762
    %v4019 = vpack.c.bf16 %v3765, %v3763
    %v4020 = vpack.c.bf16 %v3768, %v3766
    %v4021 = vpack.c.bf16 %v3769, %v3767
    %v4022 = vpack.c.bf16 %v3772, %v3770
    %v4023 = vpack.c.bf16 %v3773, %v3771
    %v4024 = vpack.c.bf16 %v3776, %v3774
    %v4025 = vpack.c.bf16 %v3777, %v3775
    %v4026 = vpack.c.bf16 %v3780, %v3778
    %v4027 = vpack.c.bf16 %v3781, %v3779
    %v4028 = vpack.c.bf16 %v3784, %v3782
    %v4029 = vpack.c.bf16 %v3785, %v3783
    %v4030 = vpack.c.bf16 %v3788, %v3786
    %v4031 = vpack.c.bf16 %v3789, %v3787
    %v4032 = vpack.c.bf16 %v3792, %v3790
    %v4033 = vpack.c.bf16 %v3793, %v3791
    %v4034 = vpack.c.bf16 %v3796, %v3794
    %v4035 = vpack.c.bf16 %v3797, %v3795
    %v4036 = vpack.c.bf16 %v3800, %v3798
    %v4037 = vpack.c.bf16 %v3801, %v3799
    %v4038 = vpack.c.bf16 %v3804, %v3802
    %v4039 = vpack.c.bf16 %v3805, %v3803
    %v4040 = vpack.c.bf16 %v3808, %v3806
    %v4041 = vpack.c.bf16 %v3809, %v3807
    %v4042 = vpack.c.bf16 %v3812, %v3810
    %v4043 = vpack.c.bf16 %v3813, %v3811
    %v4044 = vpack.c.bf16 %v3816, %v3814
    %v4045 = vpack.c.bf16 %v3817, %v3815
    %v4046 = vpack.c.bf16 %v3820, %v3818
    %v4047 = vpack.c.bf16 %v3821, %v3819
    %v4048 = vpack.c.bf16 %v3824, %v3822
    %v4049 = vpack.c.bf16 %v3825, %v3823
    %v4050 = vpack.c.bf16 %v3828, %v3826
    %v4051 = vpack.c.bf16 %v3829, %v3827
    %v4052 = vpack.c.bf16 %v3832, %v3830
    %v4053 = vpack.c.bf16 %v3833, %v3831
    %v4054 = vpack.c.bf16 %v3836, %v3834
    %v4055 = vpack.c.bf16 %v3837, %v3835
    %v4056 = vpack.c.bf16 %v3840, %v3838
    %v4057 = vpack.c.bf16 %v3841, %v3839
    %v4058 = vpack.c.bf16 %v3844, %v3842
    %v4059 = vpack.c.bf16 %v3845, %v3843
    %v4060 = vpack.c.bf16 %v3848, %v3846
    %v4061 = vpack.c.bf16 %v3849, %v3847
    %v4062 = vpack.c.bf16 %v3852, %v3850
    %v4063 = vpack.c.bf16 %v3853, %v3851
    %v4064 = vpack.c.bf16 %v3856, %v3854
    %v4065 = vpack.c.bf16 %v3857, %v3855
    %v4066 = vpack.c.bf16 %v3860, %v3858
    %v4067 = vpack.c.bf16 %v3861, %v3859
    %v4068 = vpack.c.bf16 %v3864, %v3862
    %v4069 = vpack.c.bf16 %v3865, %v3863
    %v4070 = vpack.c.bf16 %v3868, %v3866
    %v4071 = vpack.c.bf16 %v3869, %v3867
    %v4072 = vpack.c.bf16 %v3872, %v3870
    %v4073 = vpack.c.bf16 %v3873, %v3871
    %v4074 = vpack.c.bf16 %v3876, %v3874
    %v4075 = vpack.c.bf16 %v3877, %v3875
    %v4076 = vpack.c.bf16 %v3880, %v3878
    %v4077 = vpack.c.bf16 %v3881, %v3879
    %v4078 = vpack.c.bf16 %v3884, %v3882
    %v4079 = vpack.c.bf16 %v3885, %v3883
    %v4080 = vpack.c.bf16 %v3888, %v3886
    %v4081 = vpack.c.bf16 %v3889, %v3887
    %v4082 = vpack.c.bf16 %v3892, %v3890
    %v4083 = vpack.c.bf16 %v3893, %v3891
    %v4084 = vpack.c.bf16 %v3896, %v3894
    %v4085 = vpack.c.bf16 %v3897, %v3895
    %v4086 = vpack.c.bf16 %v3900, %v3898
    %v4087 = vpack.c.bf16 %v3901, %v3899
    %v4088 = vpack.c.bf16 %v3904, %v3902
    %v4089 = vpack.c.bf16 %v3905, %v3903
    %v4090 = vpack.c.bf16 %v3908, %v3906
    %v4091 = vpack.c.bf16 %v3909, %v3907
    %v4092 = vpack.c.bf16 %v3912, %v3910
    %v4093 = vpack.c.bf16 %v3913, %v3911
    %v4094 = vpack.c.bf16 %v3916, %v3914
    %v4095 = vpack.c.bf16 %v3917, %v3915
    %v4096 = vpack.c.bf16 %v3920, %v3918
    %v4097 = vpack.c.bf16 %v3921, %v3919
    %v4098 = vpack.c.bf16 %v3924, %v3922
    %v4099 = vpack.c.bf16 %v3925, %v3923
    %v4100 = vpack.c.bf16 %v3928, %v3926
    %v4101 = vpack.c.bf16 %v3929, %v3927
    %v4102 = vpack.c.bf16 %v3932, %v3930
    %v4103 = vpack.c.bf16 %v3933, %v3931
    %v4104 = vpack.c.bf16 %v3936, %v3934
    %v4105 = vpack.c.bf16 %v3937, %v3935
    %v4106 = vpack.c.bf16 %v3940, %v3938
    %v4107 = vpack.c.bf16 %v3941, %v3939
    %v4108 = vpack.c.bf16 %v3944, %v3942
    %v4109 = vpack.c.bf16 %v3945, %v3943
    %v4110 = vpack.c.bf16 %v3948, %v3946
    %v4111 = vpack.c.bf16 %v3949, %v3947
    %v4112 = vpack.c.bf16 %v3952, %v3950
    %v4113 = vpack.c.bf16 %v3953, %v3951
    %v4114 = vpack.c.bf16 %v3956, %v3954
    %v4115 = vpack.c.bf16 %v3957, %v3955
    %v4116 = vpack.c.bf16 %v3960, %v3958
    %v4117 = vpack.c.bf16 %v3961, %v3959
    %v4118 = vpack.c.bf16 %v3964, %v3962
    %v4119 = vpack.c.bf16 %v3965, %v3963
    %v4120 = vpack.c.bf16 %v3968, %v3966
    %v4121 = vpack.c.bf16 %v3969, %v3967
    %v4122 = vpack.c.bf16 %v3972, %v3970
    %v4123 = vpack.c.bf16 %v3973, %v3971
    %v4124 = vpack.c.bf16 %v3976, %v3974
    %v4125 = vpack.c.bf16 %v3977, %v3975
    %v4126 = vpack.c.bf16 %v3980, %v3978
    %v4127 = vpack.c.bf16 %v3981, %v3979
    %v4128 = vpack.c.bf16 %v3984, %v3982
    %v4129 = vpack.c.bf16 %v3985, %v3983
    %v4130 = vpack.c.bf16 %v3988, %v3986
    %v4131 = vpack.c.bf16 %v3989, %v3987
    %v4132 = vpack.c.bf16 %v3992, %v3990
    %v4133 = vpack.c.bf16 %v3993, %v3991
    %v4134 = vpack.c.bf16 %v3996, %v3994
    %v4135 = vpack.c.bf16 %v3997, %v3995
    %v4136 = vpack.c.bf16 %v4000, %v3998
    %v4137 = vpack.c.bf16 %v4001, %v3999
    %v4138 = vpack.c.bf16 %v4004, %v4002
    %v4139 = vpack.c.bf16 %v4005, %v4003
    %v4140 = vpack.c.bf16 %v4008, %v4006
    %v4141 = vpack.c.bf16 %v4009, %v4007
    %v4142 = vpack.c.bf16 %v4012, %v4010
    %v4143 = vpack.c.bf16 %v4013, %v4011
    %v4144 = vpack.c.bf16 %v4016, %v4014
    %v4145 = vpack.c.bf16 %v4017, %v4015
    %v4146 = vld [vmem:[%s6] sm:$0xff]
    %v4147 = vld [vmem:[%s6 + $0x8] sm:$0xff]
    %v4148 = vld [vmem:[%s6 + $0x10] sm:$0xff]
    %v4149 = vld [vmem:[%s6 + $0x18] sm:$0xff]
    %v4150 = vld [vmem:[%s6 + $0x20] sm:$0xff]
    %v4151 = vld [vmem:[%s6 + $0x28] sm:$0xff]
    %v4152 = vld [vmem:[%s6 + $0x30] sm:$0xff]
    %v4153 = vld [vmem:[%s6 + $0x38] sm:$0xff]
    %v4154 = vld [vmem:[%s6 + $0x40] sm:$0xff]
    %v4155 = vld [vmem:[%s6 + $0x48] sm:$0xff]
    %v4156 = vld [vmem:[%s6 + $0x50] sm:$0xff]
    %v4157 = vld [vmem:[%s6 + $0x58] sm:$0xff]
    %v4158 = vld [vmem:[%s6 + $0x60] sm:$0xff]
    %v4159 = vld [vmem:[%s6 + $0x68] sm:$0xff]
    %v4160 = vld [vmem:[%s6 + $0x70] sm:$0xff]
    %v4161 = vld [vmem:[%s6 + $0x78] sm:$0xff]
    %v4162 = vld [vmem:[%s3] sm:$0xff]
    %v4163 = vld [vmem:[%s3 + $0x8] sm:$0xff]
    %v4164 = vld [vmem:[%s3 + $0x10] sm:$0xff]
    %v4165 = vld [vmem:[%s3 + $0x18] sm:$0xff]
    %v4166 = vld [vmem:[%s3 + $0x20] sm:$0xff]
    %v4167 = vld [vmem:[%s3 + $0x28] sm:$0xff]
    %v4168 = vld [vmem:[%s3 + $0x30] sm:$0xff]
    %v4169 = vld [vmem:[%s3 + $0x38] sm:$0xff]
    %v4170 = vld [vmem:[%s3 + $0x40] sm:$0xff]
    %v4171 = vld [vmem:[%s3 + $0x48] sm:$0xff]
    %v4172 = vld [vmem:[%s3 + $0x50] sm:$0xff]
    %v4173 = vld [vmem:[%s3 + $0x58] sm:$0xff]
    %v4174 = vld [vmem:[%s3 + $0x60] sm:$0xff]
    %v4175 = vld [vmem:[%s3 + $0x68] sm:$0xff]
    %v4176 = vld [vmem:[%s3 + $0x70] sm:$0xff]
    %v4177 = vld [vmem:[%s3 + $0x78] sm:$0xff]
    %v4178 = vld [vmem:[%s4] sm:$0xff]
    %v4179 = vld [vmem:[%s4 + $0x8] sm:$0xff]
    %v4180 = vld [vmem:[%s4 + $0x10] sm:$0xff]
    %v4181 = vld [vmem:[%s4 + $0x18] sm:$0xff]
    %v4182 = vld [vmem:[%s4 + $0x20] sm:$0xff]
    %v4183 = vld [vmem:[%s4 + $0x28] sm:$0xff]
    %v4184 = vld [vmem:[%s4 + $0x30] sm:$0xff]
    %v4185 = vld [vmem:[%s4 + $0x38] sm:$0xff]
    %v4186 = vld [vmem:[%s4 + $0x40] sm:$0xff]
    %v4187 = vld [vmem:[%s4 + $0x48] sm:$0xff]
    %v4188 = vld [vmem:[%s4 + $0x50] sm:$0xff]
    %v4189 = vld [vmem:[%s4 + $0x58] sm:$0xff]
    %v4190 = vld [vmem:[%s4 + $0x60] sm:$0xff]
    %v4191 = vld [vmem:[%s4 + $0x68] sm:$0xff]
    %v4192 = vld [vmem:[%s4 + $0x70] sm:$0xff]
    %v4193 = vld [vmem:[%s4 + $0x78] sm:$0xff]
    %4195 = vset.pattern.permute.xlu0 0
    %4196 = vperm.xlu0 %4195, %v4178
    %v4197 = vpop.permute.xlu0 %4196
    %4200 = vset.pattern.permute.xlu0 0
    %4201 = vperm.xlu0 %4200, %v4179
    %v4202 = vpop.permute.xlu0 %4201
    %4205 = vset.pattern.permute.xlu0 0
    %4206 = vperm.xlu0 %4205, %v4180
    %v4207 = vpop.permute.xlu0 %4206
    %4210 = vset.pattern.permute.xlu0 0
    %4211 = vperm.xlu0 %4210, %v4181
    %v4212 = vpop.permute.xlu0 %4211
    %4215 = vset.pattern.permute.xlu0 0
    %4216 = vperm.xlu0 %4215, %v4182
    %v4217 = vpop.permute.xlu0 %4216
    %4220 = vset.pattern.permute.xlu0 0
    %4221 = vperm.xlu0 %4220, %v4183
    %v4222 = vpop.permute.xlu0 %4221
    %4225 = vset.pattern.permute.xlu0 0
    %4226 = vperm.xlu0 %4225, %v4184
    %v4227 = vpop.permute.xlu0 %4226
    %4230 = vset.pattern.permute.xlu0 0
    %4231 = vperm.xlu0 %4230, %v4185
    %v4232 = vpop.permute.xlu0 %4231
    %4235 = vset.pattern.permute.xlu0 0
    %4236 = vperm.xlu0 %4235, %v4186
    %v4237 = vpop.permute.xlu0 %4236
    %4240 = vset.pattern.permute.xlu0 0
    %4241 = vperm.xlu0 %4240, %v4187
    %v4242 = vpop.permute.xlu0 %4241
    %4245 = vset.pattern.permute.xlu0 0
    %4246 = vperm.xlu0 %4245, %v4188
    %v4247 = vpop.permute.xlu0 %4246
    %4250 = vset.pattern.permute.xlu0 0
    %4251 = vperm.xlu0 %4250, %v4189
    %v4252 = vpop.permute.xlu0 %4251
    %4255 = vset.pattern.permute.xlu0 0
    %4256 = vperm.xlu0 %4255, %v4190
    %v4257 = vpop.permute.xlu0 %4256
    %4260 = vset.pattern.permute.xlu0 0
    %4261 = vperm.xlu0 %4260, %v4191
    %v4262 = vpop.permute.xlu0 %4261
    %4265 = vset.pattern.permute.xlu0 0
    %4266 = vperm.xlu0 %4265, %v4192
    %v4267 = vpop.permute.xlu0 %4266
    %4270 = vset.pattern.permute.xlu0 0
    %4271 = vperm.xlu0 %4270, %v4193
    %v4272 = vpop.permute.xlu0 %4271
    %v4290 = vunpack.c.l.b16 %v4162
    %v4291 = vunpack.c.h.b16 %v4162
    %v4292 = vunpack.c.l.b16 %v4163
    %v4293 = vunpack.c.h.b16 %v4163
    %v4294 = vunpack.c.l.b16 %v4164
    %v4295 = vunpack.c.h.b16 %v4164
    %v4296 = vunpack.c.l.b16 %v4165
    %v4297 = vunpack.c.h.b16 %v4165
    %v4298 = vunpack.c.l.b16 %v4166
    %v4299 = vunpack.c.h.b16 %v4166
    %v4300 = vunpack.c.l.b16 %v4167
    %v4301 = vunpack.c.h.b16 %v4167
    %v4302 = vunpack.c.l.b16 %v4168
    %v4303 = vunpack.c.h.b16 %v4168
    %v4304 = vunpack.c.l.b16 %v4169
    %v4305 = vunpack.c.h.b16 %v4169
    %v4306 = vunpack.c.l.b16 %v4170
    %v4307 = vunpack.c.h.b16 %v4170
    %v4308 = vunpack.c.l.b16 %v4171
    %v4309 = vunpack.c.h.b16 %v4171
    %v4310 = vunpack.c.l.b16 %v4172
    %v4311 = vunpack.c.h.b16 %v4172
    %v4312 = vunpack.c.l.b16 %v4173
    %v4313 = vunpack.c.h.b16 %v4173
    %v4314 = vunpack.c.l.b16 %v4174
    %v4315 = vunpack.c.h.b16 %v4174
    %v4316 = vunpack.c.l.b16 %v4175
    %v4317 = vunpack.c.h.b16 %v4175
    %v4318 = vunpack.c.l.b16 %v4176
    %v4319 = vunpack.c.h.b16 %v4176
    %v4320 = vunpack.c.l.b16 %v4177
    %v4321 = vunpack.c.h.b16 %v4177
    %v4322 = vpack.c.b16 %v4292, %v4290
    %v4323 = vpack.c.b16 %v4293, %v4291
    %v4324 = vpack.c.b16 %v4296, %v4294
    %v4325 = vpack.c.b16 %v4297, %v4295
    %v4326 = vpack.c.b16 %v4300, %v4298
    %v4327 = vpack.c.b16 %v4301, %v4299
    %v4328 = vpack.c.b16 %v4304, %v4302
    %v4329 = vpack.c.b16 %v4305, %v4303
    %v4330 = vpack.c.b16 %v4308, %v4306
    %v4331 = vpack.c.b16 %v4309, %v4307
    %v4332 = vpack.c.b16 %v4312, %v4310
    %v4333 = vpack.c.b16 %v4313, %v4311
    %v4334 = vpack.c.b16 %v4316, %v4314
    %v4335 = vpack.c.b16 %v4317, %v4315
    %v4336 = vpack.c.b16 %v4320, %v4318
    %v4337 = vpack.c.b16 %v4321, %v4319
    %4354 = vmatprep.subr.bf16.mxu0 %v4019
    %4355 = vmatpush1.bf16.msra.mxu0 %v4018
    %4356 = vmatprep.subr.bf16.mxu0 %v4021
    %4357 = vmatpush1.bf16.msra.mxu0 %v4020
    %4358 = vmatprep.subr.bf16.mxu0 %v4023
    %4359 = vmatpush1.bf16.msra.mxu0 %v4022
    %4360 = vmatprep.subr.bf16.mxu0 %v4025
    %4361 = vmatpush1.bf16.msra.mxu0 %v4024
    %4362 = vmatprep.subr.bf16.mxu0 %v4027
    %4363 = vmatpush1.bf16.msra.mxu0 %v4026
    %4364 = vmatprep.subr.bf16.mxu0 %v4029
    %4365 = vmatpush1.bf16.msra.mxu0 %v4028
    %4366 = vmatprep.subr.bf16.mxu0 %v4031
    %4367 = vmatpush1.bf16.msra.mxu0 %v4030
    %4368 = vmatprep.subr.bf16.mxu0 %v4033
    %4369 = vmatpush1.bf16.msra.mxu0 %v4032
    %4370 = vmatprep.subr.bf16.mxu0 %v4035
    %4371 = vmatpush1.bf16.msra.mxu0 %v4034
    %4372 = vmatprep.subr.bf16.mxu0 %v4037
    %4373 = vmatpush1.bf16.msra.mxu0 %v4036
    %4374 = vmatprep.subr.bf16.mxu0 %v4039
    %4375 = vmatpush1.bf16.msra.mxu0 %v4038
    %4376 = vmatprep.subr.bf16.mxu0 %v4041
    %4377 = vmatpush1.bf16.msra.mxu0 %v4040
    %4378 = vmatprep.subr.bf16.mxu0 %v4043
    %4379 = vmatpush1.bf16.msra.mxu0 %v4042
    %4380 = vmatprep.subr.bf16.mxu0 %v4045
    %4381 = vmatpush1.bf16.msra.mxu0 %v4044
    %4382 = vmatprep.subr.bf16.mxu0 %v4047
    %4383 = vmatpush1.bf16.msra.mxu0 %v4046
    %4384 = vmatprep.subr.bf16.mxu0 %v4049
    %4385 = vmatpush1.bf16.msra.mxu0 %v4048
    %4386 = vmatprep.mubr.bf16.mxu0 %v4323
    %4387 = vmatmul.mubr.bf16.gmra.mrb[0].mxu0 %v4322
    %v4388 = vpop.f32.mrb[0].mxu0
    %v4389 = vadd.f32 %v4197, %v4388
    %v4390 = vpop.f32.mrb[0].mxu0
    %v4391 = vadd.f32 %v4197, %v4390
    %v4392 = vpop.f32.mrb[0].mxu0
    %v4393 = vadd.f32 %v4202, %v4392
    %v4394 = vpop.f32.mrb[0].mxu0
    %v4395 = vadd.f32 %v4202, %v4394
    %4396 = vmatprep.mubr.bf16.mxu0 %v4325
    %4397 = vmatmul.mubr.bf16.gmra.mrb[0].mxu0 %v4324
    %v4398 = vpop.f32.mrb[0].mxu0
    %v4399 = vadd.f32 %v4207, %v4398
    %v4400 = vpop.f32.mrb[0].mxu0
    %v4401 = vadd.f32 %v4207, %v4400
    %v4402 = vpop.f32.mrb[0].mxu0
    %v4403 = vadd.f32 %v4212, %v4402
    %v4404 = vpop.f32.mrb[0].mxu0
    %v4405 = vadd.f32 %v4212, %v4404
    %4406 = vmatprep.mubr.bf16.mxu0 %v4327
    %4407 = vmatmul.mubr.bf16.gmra.mrb[0].mxu0 %v4326
    %v4408 = vpop.f32.mrb[0].mxu0
    %v4409 = vadd.f32 %v4217, %v4408
    %v4410 = vpop.f32.mrb[0].mxu0
    %v4411 = vadd.f32 %v4217, %v4410
    %v4412 = vpop.f32.mrb[0].mxu0
    %v4413 = vadd.f32 %v4222, %v4412
    %v4414 = vpop.f32.mrb[0].mxu0
    %v4415 = vadd.f32 %v4222, %v4414
    %4416 = vmatprep.mubr.bf16.mxu0 %v4329
    %4417 = vmatmul.mubr.bf16.gmra.mrb[0].mxu0 %v4328
    %v4418 = vpop.f32.mrb[0].mxu0
    %v4419 = vadd.f32 %v4227, %v4418
    %v4420 = vpop.f32.mrb[0].mxu0
    %v4421 = vadd.f32 %v4227, %v4420
    %v4422 = vpop.f32.mrb[0].mxu0
    %v4423 = vadd.f32 %v4232, %v4422
    %v4424 = vpop.f32.mrb[0].mxu0
    %v4425 = vadd.f32 %v4232, %v4424
    %4426 = vmatprep.mubr.bf16.mxu0 %v4331
    %4427 = vmatmul.mubr.bf16.gmra.mrb[0].mxu0 %v4330
    %v4428 = vpop.f32.mrb[0].mxu0
    %v4429 = vadd.f32 %v4237, %v4428
    %v4430 = vpop.f32.mrb[0].mxu0
    %v4431 = vadd.f32 %v4237, %v4430
    %v4432 = vpop.f32.mrb[0].mxu0
    %v4433 = vadd.f32 %v4242, %v4432
    %v4434 = vpop.f32.mrb[0].mxu0
    %v4435 = vadd.f32 %v4242, %v4434
    %4436 = vmatprep.mubr.bf16.mxu0 %v4333
    %4437 = vmatmul.mubr.bf16.gmra.mrb[0].mxu0 %v4332
    %v4438 = vpop.f32.mrb[0].mxu0
    %v4439 = vadd.f32 %v4247, %v4438
    %v4440 = vpop.f32.mrb[0].mxu0
    %v4441 = vadd.f32 %v4247, %v4440
    %v4442 = vpop.f32.mrb[0].mxu0
    %v4443 = vadd.f32 %v4252, %v4442
    %v4444 = vpop.f32.mrb[0].mxu0
    %v4445 = vadd.f32 %v4252, %v4444
    %4446 = vmatprep.mubr.bf16.mxu0 %v4335
    %4447 = vmatmul.mubr.bf16.gmra.mrb[0].mxu0 %v4334
    %v4448 = vpop.f32.mrb[0].mxu0
    %v4449 = vadd.f32 %v4257, %v4448
    %v4450 = vpop.f32.mrb[0].mxu0
    %v4451 = vadd.f32 %v4257, %v4450
    %v4452 = vpop.f32.mrb[0].mxu0
    %v4453 = vadd.f32 %v4262, %v4452
    %v4454 = vpop.f32.mrb[0].mxu0
    %v4455 = vadd.f32 %v4262, %v4454
    %4456 = vmatprep.mubr.bf16.mxu0 %v4337
    %4457 = vmatmul.mubr.bf16.gmra.mrb[0].mxu0 %v4336
    %v4458 = vpop.f32.mrb[0].mxu0
    %v4459 = vadd.f32 %v4267, %v4458
    %v4460 = vpop.f32.mrb[0].mxu0
    %v4461 = vadd.f32 %v4267, %v4460
    %v4462 = vpop.f32.mrb[0].mxu0
    %v4463 = vadd.f32 %v4272, %v4462
    %v4464 = vpop.f32.mrb[0].mxu0
    %v4465 = vadd.f32 %v4272, %v4464
    %4466 = vdwg.mxu0
    %v4467 = vmax.f32 %v4389, 0.0
    %v4468 = vmax.f32 %v4391, 0.0
    %v4469 = vmax.f32 %v4393, 0.0
    %v4470 = vmax.f32 %v4395, 0.0
    %v4471 = vmax.f32 %v4399, 0.0
    %v4472 = vmax.f32 %v4401, 0.0
    %v4473 = vmax.f32 %v4403, 0.0
    %v4474 = vmax.f32 %v4405, 0.0
    %v4475 = vmax.f32 %v4409, 0.0
    %v4476 = vmax.f32 %v4411, 0.0
    %v4477 = vmax.f32 %v4413, 0.0
    %v4478 = vmax.f32 %v4415, 0.0
    %v4479 = vmax.f32 %v4419, 0.0
    %v4480 = vmax.f32 %v4421, 0.0
    %v4481 = vmax.f32 %v4423, 0.0
    %v4482 = vmax.f32 %v4425, 0.0
    %v4483 = vmax.f32 %v4429, 0.0
    %v4484 = vmax.f32 %v4431, 0.0
    %v4485 = vmax.f32 %v4433, 0.0
    %v4486 = vmax.f32 %v4435, 0.0
    %v4487 = vmax.f32 %v4439, 0.0
    %v4488 = vmax.f32 %v4441, 0.0
    %v4489 = vmax.f32 %v4443, 0.0
    %v4490 = vmax.f32 %v4445, 0.0
    %v4491 = vmax.f32 %v4449, 0.0
    %v4492 = vmax.f32 %v4451, 0.0
    %v4493 = vmax.f32 %v4453, 0.0
    %v4494 = vmax.f32 %v4455, 0.0
    %v4495 = vmax.f32 %v4459, 0.0
    %v4496 = vmax.f32 %v4461, 0.0
    %v4497 = vmax.f32 %v4463, 0.0
    %v4498 = vmax.f32 %v4465, 0.0
    %v4499 = vpack.c.bf16 %v4469, %v4467
    %v4500 = vpack.c.bf16 %v4470, %v4468
    %v4501 = vpack.c.bf16 %v4473, %v4471
    %v4502 = vpack.c.bf16 %v4474, %v4472
    %v4503 = vpack.c.bf16 %v4477, %v4475
    %v4504 = vpack.c.bf16 %v4478, %v4476
    %v4505 = vpack.c.bf16 %v4481, %v4479
    %v4506 = vpack.c.bf16 %v4482, %v4480
    %v4507 = vpack.c.bf16 %v4485, %v4483
    %v4508 = vpack.c.bf16 %v4486, %v4484
    %v4509 = vpack.c.bf16 %v4489, %v4487
    %v4510 = vpack.c.bf16 %v4490, %v4488
    %v4511 = vpack.c.bf16 %v4493, %v4491
    %v4512 = vpack.c.bf16 %v4494, %v4492
    %v4513 = vpack.c.bf16 %v4497, %v4495
    %v4514 = vpack.c.bf16 %v4498, %v4496
    %v4515 = vld [vmem:[%s5] sm:$0xf]
    %v4516 = vld [vmem:[%s5 + $0x4] sm:$0xf]
    %v4517 = vld [vmem:[%s5 + $0x8] sm:$0xf]
    %v4518 = vld [vmem:[%s5 + $0xc] sm:$0xf]
    %v4519 = vld [vmem:[%s5 + $0x10] sm:$0xf]
    %v4520 = vld [vmem:[%s5 + $0x14] sm:$0xf]
    %v4521 = vld [vmem:[%s5 + $0x18] sm:$0xf]
    %v4522 = vld [vmem:[%s5 + $0x1c] sm:$0xf]
    %v4531 = vunpack.c.l.b16 %v4515
    %v4532 = vunpack.c.l.b16 %v4516
    %v4533 = vunpack.c.l.b16 %v4517
    %v4534 = vunpack.c.l.b16 %v4518
    %v4535 = vunpack.c.l.b16 %v4519
    %v4536 = vunpack.c.l.b16 %v4520
    %v4537 = vunpack.c.l.b16 %v4521
    %v4538 = vunpack.c.l.b16 %v4522
    %v4539 = vpack.c.b16 %v4532, %v4531
    %v4540 = vpack.c.b16 %v4534, %v4533
    %v4541 = vpack.c.b16 %v4536, %v4535
    %v4542 = vpack.c.b16 %v4538, %v4537
    %4547 = vmatprep.subr.bf16.mxu0 %v4500
    %4548 = vmatpush1.bf16.msra.mxu0 %v4499
    %4549 = vmatprep.subr.bf16.mxu0 %v4502
    %4550 = vmatpush1.bf16.msra.mxu0 %v4501
    %4551 = vmatprep.subr.bf16.mxu0 %v4504
    %4552 = vmatpush1.bf16.msra.mxu0 %v4503
    %4553 = vmatprep.subr.bf16.mxu0 %v4506
    %4554 = vmatpush1.bf16.msra.mxu0 %v4505
    %4555 = vmatprep.subr.bf16.mxu0 %v4508
    %4556 = vmatpush1.bf16.msra.mxu0 %v4507
    %4557 = vmatprep.subr.bf16.mxu0 %v4510
    %4558 = vmatpush1.bf16.msra.mxu0 %v4509
    %4559 = vmatprep.subr.bf16.mxu0 %v4512
    %4560 = vmatpush1.bf16.msra.mxu0 %v4511
    %4561 = vmatprep.subr.bf16.mxu0 %v4514
    %4562 = vmatpush1.bf16.msra.mxu0 %v4513
    %4563 = vmatprep.subr.bf16.mxu0 0
    %4564 = vmatpush1.bf16.msra.mxu0 0
    %4565 = vmatprep.subr.bf16.mxu0 0
    %4566 = vmatpush1.bf16.msra.mxu0 0
    %4567 = vmatprep.subr.bf16.mxu0 0
    %4568 = vmatpush1.bf16.msra.mxu0 0
    %4569 = vmatprep.subr.bf16.mxu0 0
    %4570 = vmatpush1.bf16.msra.mxu0 0
    %4571 = vmatprep.subr.bf16.mxu0 0
    %4572 = vmatpush1.bf16.msra.mxu0 0
    %4573 = vmatprep.subr.bf16.mxu0 0
    %4574 = vmatpush1.bf16.msra.mxu0 0
    %4575 = vmatprep.subr.bf16.mxu0 0
    %4576 = vmatpush1.bf16.msra.mxu0 0
    %4577 = vmatprep.subr.bf16.mxu0 0
    %4578 = vmatpush1.bf16.msra.mxu0 0
    %4579 = vmatprep.mubr.bf16.mxu0 0
    %4580 = vmatmul.mubr.bf16.gmra.mrb[0].mxu0 %v4539
    %v4581 = vpop.f32.mrb[0].mxu0
    %v4582 = vadd.f32 0.0, %v4581
    %v4583 = vpop.f32.mrb[0].mxu0
    %v4584 = vadd.f32 0.0, %v4583
    %v4585 = vpop.f32.mrb[0].mxu0
    %v4586 = vadd.f32 0.0, %v4585
    %v4587 = vpop.f32.mrb[0].mxu0
    %v4588 = vadd.f32 0.0, %v4587
    %4589 = vmatprep.mubr.bf16.mxu0 0
    %4590 = vmatmul.mubr.bf16.gmra.mrb[0].mxu0 %v4540
    %v4591 = vpop.f32.mrb[0].mxu0
    %v4592 = vadd.f32 0.0, %v4591
    %v4593 = vpop.f32.mrb[0].mxu0
    %v4594 = vadd.f32 0.0, %v4593
    %v4595 = vpop.f32.mrb[0].mxu0
    %v4596 = vadd.f32 0.0, %v4595
    %v4597 = vpop.f32.mrb[0].mxu0
    %v4598 = vadd.f32 0.0, %v4597
    %4599 = vmatprep.mubr.bf16.mxu0 0
    %4600 = vmatmul.mubr.bf16.gmra.mrb[0].mxu0 %v4541
    %v4601 = vpop.f32.mrb[0].mxu0
    %v4602 = vadd.f32 0.0, %v4601
    %v4603 = vpop.f32.mrb[0].mxu0
    %v4604 = vadd.f32 0.0, %v4603
    %v4605 = vpop.f32.mrb[0].mxu0
    %v4606 = vadd.f32 0.0, %v4605
    %v4607 = vpop.f32.mrb[0].mxu0
    %v4608 = vadd.f32 0.0, %v4607
    %4609 = vmatprep.mubr.bf16.mxu0 0
    %4610 = vmatmul.mubr.bf16.gmra.mrb[0].mxu0 %v4542
    %v4611 = vpop.f32.mrb[0].mxu0
    %v4612 = vadd.f32 0.0, %v4611
    %v4613 = vpop.f32.mrb[0].mxu0
    %v4614 = vadd.f32 0.0, %v4613
    %v4615 = vpop.f32.mrb[0].mxu0
    %v4616 = vadd.f32 0.0, %v4615
    %v4617 = vpop.f32.mrb[0].mxu0
    %v4618 = vadd.f32 0.0, %v4617
    %4619 = vdwg.mxu0
    %v4620 = vadd.f32 %v4146, %v4582
    %v4621 = vadd.f32 %v4147, %v4584
    %v4622 = vadd.f32 %v4148, %v4586
    %v4623 = vadd.f32 %v4149, %v4588
    %v4624 = vadd.f32 %v4150, %v4592
    %v4625 = vadd.f32 %v4151, %v4594
    %v4626 = vadd.f32 %v4152, %v4596
    %v4627 = vadd.f32 %v4153, %v4598
    %v4628 = vadd.f32 %v4154, %v4602
    %v4629 = vadd.f32 %v4155, %v4604
    %v4630 = vadd.f32 %v4156, %v4606
    %v4631 = vadd.f32 %v4157, %v4608
    %v4632 = vadd.f32 %v4158, %v4612
    %v4633 = vadd.f32 %v4159, %v4614
    %v4634 = vadd.f32 %v4160, %v4616
    %v4635 = vadd.f32 %v4161, %v4618
    %s4636 = scalar_lea.vmem %s3, 128
    %v4637 = vld [vmem:[%s4636] sm:$0xff]
    %v4638 = vld [vmem:[%s4636 + $0x8] sm:$0xff]
    %v4639 = vld [vmem:[%s4636 + $0x10] sm:$0xff]
    %v4640 = vld [vmem:[%s4636 + $0x18] sm:$0xff]
    %v4641 = vld [vmem:[%s4636 + $0x20] sm:$0xff]
    %v4642 = vld [vmem:[%s4636 + $0x28] sm:$0xff]
    %v4643 = vld [vmem:[%s4636 + $0x30] sm:$0xff]
    %v4644 = vld [vmem:[%s4636 + $0x38] sm:$0xff]
    %v4645 = vld [vmem:[%s4636 + $0x40] sm:$0xff]
    %v4646 = vld [vmem:[%s4636 + $0x48] sm:$0xff]
    %v4647 = vld [vmem:[%s4636 + $0x50] sm:$0xff]
    %v4648 = vld [vmem:[%s4636 + $0x58] sm:$0xff]
    %v4649 = vld [vmem:[%s4636 + $0x60] sm:$0xff]
    %v4650 = vld [vmem:[%s4636 + $0x68] sm:$0xff]
    %v4651 = vld [vmem:[%s4636 + $0x70] sm:$0xff]
    %v4652 = vld [vmem:[%s4636 + $0x78] sm:$0xff]
    %s4653 = scalar_lea.vmem %s4, 128
    %v4654 = vld [vmem:[%s4653] sm:$0xff]
    %v4655 = vld [vmem:[%s4653 + $0x8] sm:$0xff]
    %v4656 = vld [vmem:[%s4653 + $0x10] sm:$0xff]
    %v4657 = vld [vmem:[%s4653 + $0x18] sm:$0xff]
    %v4658 = vld [vmem:[%s4653 + $0x20] sm:$0xff]
    %v4659 = vld [vmem:[%s4653 + $0x28] sm:$0xff]
    %v4660 = vld [vmem:[%s4653 + $0x30] sm:$0xff]
    %v4661 = vld [vmem:[%s4653 + $0x38] sm:$0xff]
    %v4662 = vld [vmem:[%s4653 + $0x40] sm:$0xff]
    %v4663 = vld [vmem:[%s4653 + $0x48] sm:$0xff]
    %v4664 = vld [vmem:[%s4653 + $0x50] sm:$0xff]
    %v4665 = vld [vmem:[%s4653 + $0x58] sm:$0xff]
    %v4666 = vld [vmem:[%s4653 + $0x60] sm:$0xff]
    %v4667 = vld [vmem:[%s4653 + $0x68] sm:$0xff]
    %v4668 = vld [vmem:[%s4653 + $0x70] sm:$0xff]
    %v4669 = vld [vmem:[%s4653 + $0x78] sm:$0xff]
    %4671 = vset.pattern.permute.xlu0 0
    %4672 = vperm.xlu0 %4671, %v4654
    %v4673 = vpop.permute.xlu0 %4672
    %4676 = vset.pattern.permute.xlu0 0
    %4677 = vperm.xlu0 %4676, %v4655
    %v4678 = vpop.permute.xlu0 %4677
    %4681 = vset.pattern.permute.xlu0 0
    %4682 = vperm.xlu0 %4681, %v4656
    %v4683 = vpop.permute.xlu0 %4682
    %4686 = vset.pattern.permute.xlu0 0
    %4687 = vperm.xlu0 %4686, %v4657
    %v4688 = vpop.permute.xlu0 %4687
    %4691 = vset.pattern.permute.xlu0 0
    %4692 = vperm.xlu0 %4691, %v4658
    %v4693 = vpop.permute.xlu0 %4692
    %4696 = vset.pattern.permute.xlu0 0
    %4697 = vperm.xlu0 %4696, %v4659
    %v4698 = vpop.permute.xlu0 %4697
    %4701 = vset.pattern.permute.xlu0 0
    %4702 = vperm.xlu0 %4701, %v4660
    %v4703 = vpop.permute.xlu0 %4702
    %4706 = vset.pattern.permute.xlu0 0
    %4707 = vperm.xlu0 %4706, %v4661
    %v4708 = vpop.permute.xlu0 %4707
    %4711 = vset.pattern.permute.xlu0 0
    %4712 = vperm.xlu0 %4711, %v4662
    %v4713 = vpop.permute.xlu0 %4712
    %4716 = vset.pattern.permute.xlu0 0
    %4717 = vperm.xlu0 %4716, %v4663
    %v4718 = vpop.permute.xlu0 %4717
    %4721 = vset.pattern.permute.xlu0 0
    %4722 = vperm.xlu0 %4721, %v4664
    %v4723 = vpop.permute.xlu0 %4722
    %4726 = vset.pattern.permute.xlu0 0
    %4727 = vperm.xlu0 %4726, %v4665
    %v4728 = vpop.permute.xlu0 %4727
    %4731 = vset.pattern.permute.xlu0 0
    %4732 = vperm.xlu0 %4731, %v4666
    %v4733 = vpop.permute.xlu0 %4732
    %4736 = vset.pattern.permute.xlu0 0
    %4737 = vperm.xlu0 %4736, %v4667
    %v4738 = vpop.permute.xlu0 %4737
    %4741 = vset.pattern.permute.xlu0 0
    %4742 = vperm.xlu0 %4741, %v4668
    %v4743 = vpop.permute.xlu0 %4742
    %4746 = vset.pattern.permute.xlu0 0
    %4747 = vperm.xlu0 %4746, %v4669
    %v4748 = vpop.permute.xlu0 %4747
    %v4766 = vunpack.c.l.b16 %v4637
    %v4767 = vunpack.c.h.b16 %v4637
    %v4768 = vunpack.c.l.b16 %v4638
    %v4769 = vunpack.c.h.b16 %v4638
    %v4770 = vunpack.c.l.b16 %v4639
    %v4771 = vunpack.c.h.b16 %v4639
    %v4772 = vunpack.c.l.b16 %v4640
    %v4773 = vunpack.c.h.b16 %v4640
    %v4774 = vunpack.c.l.b16 %v4641
    %v4775 = vunpack.c.h.b16 %v4641
    %v4776 = vunpack.c.l.b16 %v4642
    %v4777 = vunpack.c.h.b16 %v4642
    %v4778 = vunpack.c.l.b16 %v4643
    %v4779 = vunpack.c.h.b16 %v4643
    %v4780 = vunpack.c.l.b16 %v4644
    %v4781 = vunpack.c.h.b16 %v4644
    %v4782 = vunpack.c.l.b16 %v4645
    %v4783 = vunpack.c.h.b16 %v4645
    %v4784 = vunpack.c.l.b16 %v4646
    %v4785 = vunpack.c.h.b16 %v4646
    %v4786 = vunpack.c.l.b16 %v4647
    %v4787 = vunpack.c.h.b16 %v4647
    %v4788 = vunpack.c.l.b16 %v4648
    %v4789 = vunpack.c.h.b16 %v4648
    %v4790 = vunpack.c.l.b16 %v4649
    %v4791 = vunpack.c.h.b16 %v4649
    %v4792 = vunpack.c.l.b16 %v4650
    %v4793 = vunpack.c.h.b16 %v4650
    %v4794 = vunpack.c.l.b16 %v4651
    %v4795 = vunpack.c.h.b16 %v4651
    %v4796 = vunpack.c.l.b16 %v4652
    %v4797 = vunpack.c.h.b16 %v4652
    %v4798 = vpack.c.b16 %v4768, %v4766
    %v4799 = vpack.c.b16 %v4769, %v4767
    %v4800 = vpack.c.b16 %v4772, %v4770
    %v4801 = vpack.c.b16 %v4773, %v4771
    %v4802 = vpack.c.b16 %v4776, %v4774
    %v4803 = vpack.c.b16 %v4777, %v4775
    %v4804 = vpack.c.b16 %v4780, %v4778
    %v4805 = vpack.c.b16 %v4781, %v4779
    %v4806 = vpack.c.b16 %v4784, %v4782
    %v4807 = vpack.c.b16 %v4785, %v4783
    %v4808 = vpack.c.b16 %v4788, %v4786
    %v4809 = vpack.c.b16 %v4789, %v4787
    %v4810 = vpack.c.b16 %v4792, %v4790
    %v4811 = vpack.c.b16 %v4793, %v4791
    %v4812 = vpack.c.b16 %v4796, %v4794
    %v4813 = vpack.c.b16 %v4797, %v4795
    %4830 = vmatprep.subr.bf16.mxu0 %v4051
    %4831 = vmatpush1.bf16.msra.mxu0 %v4050
    %4832 = vmatprep.subr.bf16.mxu0 %v4053
    %4833 = vmatpush1.bf16.msra.mxu0 %v4052
    %4834 = vmatprep.subr.bf16.mxu0 %v4055
    %4835 = vmatpush1.bf16.msra.mxu0 %v4054
    %4836 = vmatprep.subr.bf16.mxu0 %v4057
    %4837 = vmatpush1.bf16.msra.mxu0 %v4056
    %4838 = vmatprep.subr.bf16.mxu0 %v4059
    %4839 = vmatpush1.bf16.msra.mxu0 %v4058
    %4840 = vmatprep.subr.bf16.mxu0 %v4061
    %4841 = vmatpush1.bf16.msra.mxu0 %v4060
    %4842 = vmatprep.subr.bf16.mxu0 %v4063
    %4843 = vmatpush1.bf16.msra.mxu0 %v4062
    %4844 = vmatprep.subr.bf16.mxu0 %v4065
    %4845 = vmatpush1.bf16.msra.mxu0 %v4064
    %4846 = vmatprep.subr.bf16.mxu0 %v4067
    %4847 = vmatpush1.bf16.msra.mxu0 %v4066
    %4848 = vmatprep.subr.bf16.mxu0 %v4069
    %4849 = vmatpush1.bf16.msra.mxu0 %v4068
    %4850 = vmatprep.subr.bf16.mxu0 %v4071
    %4851 = vmatpush1.bf16.msra.mxu0 %v4070
    %4852 = vmatprep.subr.bf16.mxu0 %v4073
    %4853 = vmatpush1.bf16.msra.mxu0 %v4072
    %4854 = vmatprep.subr.bf16.mxu0 %v4075
    %4855 = vmatpush1.bf16.msra.mxu0 %v4074
    %4856 = vmatprep.subr.bf16.mxu0 %v4077
    %4857 = vmatpush1.bf16.msra.mxu0 %v4076
    %4858 = vmatprep.subr.bf16.mxu0 %v4079
    %4859 = vmatpush1.bf16.msra.mxu0 %v4078
    %4860 = vmatprep.subr.bf16.mxu0 %v4081
    %4861 = vmatpush1.bf16.msra.mxu0 %v4080
    %4862 = vmatprep.mubr.bf16.mxu0 %v4799
    %4863 = vmatmul.mubr.bf16.gmra.mrb[0].mxu0 %v4798
    %v4864 = vpop.f32.mrb[0].mxu0
    %v4865 = vadd.f32 %v4673, %v4864
    %v4866 = vpop.f32.mrb[0].mxu0
    %v4867 = vadd.f32 %v4673, %v4866
    %v4868 = vpop.f32.mrb[0].mxu0
    %v4869 = vadd.f32 %v4678, %v4868
    %v4870 = vpop.f32.mrb[0].mxu0
    %v4871 = vadd.f32 %v4678, %v4870
    %4872 = vmatprep.mubr.bf16.mxu0 %v4801
    %4873 = vmatmul.mubr.bf16.gmra.mrb[0].mxu0 %v4800
    %v4874 = vpop.f32.mrb[0].mxu0
    %v4875 = vadd.f32 %v4683, %v4874
    %v4876 = vpop.f32.mrb[0].mxu0
    %v4877 = vadd.f32 %v4683, %v4876
    %v4878 = vpop.f32.mrb[0].mxu0
    %v4879 = vadd.f32 %v4688, %v4878
    %v4880 = vpop.f32.mrb[0].mxu0
    %v4881 = vadd.f32 %v4688, %v4880
    %4882 = vmatprep.mubr.bf16.mxu0 %v4803
    %4883 = vmatmul.mubr.bf16.gmra.mrb[0].mxu0 %v4802
    %v4884 = vpop.f32.mrb[0].mxu0
    %v4885 = vadd.f32 %v4693, %v4884
    %v4886 = vpop.f32.mrb[0].mxu0
    %v4887 = vadd.f32 %v4693, %v4886
    %v4888 = vpop.f32.mrb[0].mxu0
    %v4889 = vadd.f32 %v4698, %v4888
    %v4890 = vpop.f32.mrb[0].mxu0
    %v4891 = vadd.f32 %v4698, %v4890
    %4892 = vmatprep.mubr.bf16.mxu0 %v4805
    %4893 = vmatmul.mubr.bf16.gmra.mrb[0].mxu0 %v4804
    %v4894 = vpop.f32.mrb[0].mxu0
    %v4895 = vadd.f32 %v4703, %v4894
    %v4896 = vpop.f32.mrb[0].mxu0
    %v4897 = vadd.f32 %v4703, %v4896
    %v4898 = vpop.f32.mrb[0].mxu0
    %v4899 = vadd.f32 %v4708, %v4898
    %v4900 = vpop.f32.mrb[0].mxu0
    %v4901 = vadd.f32 %v4708, %v4900
    %4902 = vmatprep.mubr.bf16.mxu0 %v4807
    %4903 = vmatmul.mubr.bf16.gmra.mrb[0].mxu0 %v4806
    %v4904 = vpop.f32.mrb[0].mxu0
    %v4905 = vadd.f32 %v4713, %v4904
    %v4906 = vpop.f32.mrb[0].mxu0
    %v4907 = vadd.f32 %v4713, %v4906
    %v4908 = vpop.f32.mrb[0].mxu0
    %v4909 = vadd.f32 %v4718, %v4908
    %v4910 = vpop.f32.mrb[0].mxu0
    %v4911 = vadd.f32 %v4718, %v4910
    %4912 = vmatprep.mubr.bf16.mxu0 %v4809
    %4913 = vmatmul.mubr.bf16.gmra.mrb[0].mxu0 %v4808
    %v4914 = vpop.f32.mrb[0].mxu0
    %v4915 = vadd.f32 %v4723, %v4914
    %v4916 = vpop.f32.mrb[0].mxu0
    %v4917 = vadd.f32 %v4723, %v4916
    %v4918 = vpop.f32.mrb[0].mxu0
    %v4919 = vadd.f32 %v4728, %v4918
    %v4920 = vpop.f32.mrb[0].mxu0
    %v4921 = vadd.f32 %v4728, %v4920
    %4922 = vmatprep.mubr.bf16.mxu0 %v4811
    %4923 = vmatmul.mubr.bf16.gmra.mrb[0].mxu0 %v4810
    %v4924 = vpop.f32.mrb[0].mxu0
    %v4925 = vadd.f32 %v4733, %v4924
    %v4926 = vpop.f32.mrb[0].mxu0
    %v4927 = vadd.f32 %v4733, %v4926
    %v4928 = vpop.f32.mrb[0].mxu0
    %v4929 = vadd.f32 %v4738, %v4928
    %v4930 = vpop.f32.mrb[0].mxu0
    %v4931 = vadd.f32 %v4738, %v4930
    %4932 = vmatprep.mubr.bf16.mxu0 %v4813
    %4933 = vmatmul.mubr.bf16.gmra.mrb[0].mxu0 %v4812
    %v4934 = vpop.f32.mrb[0].mxu0
    %v4935 = vadd.f32 %v4743, %v4934
    %v4936 = vpop.f32.mrb[0].mxu0
    %v4937 = vadd.f32 %v4743, %v4936
    %v4938 = vpop.f32.mrb[0].mxu0
    %v4939 = vadd.f32 %v4748, %v4938
    %v4940 = vpop.f32.mrb[0].mxu0
    %v4941 = vadd.f32 %v4748, %v4940
    %4942 = vdwg.mxu0
    %v4943 = vmax.f32 %v4865, 0.0
    %v4944 = vmax.f32 %v4867, 0.0
    %v4945 = vmax.f32 %v4869, 0.0
    %v4946 = vmax.f32 %v4871, 0.0
    %v4947 = vmax.f32 %v4875, 0.0
    %v4948 = vmax.f32 %v4877, 0.0
    %v4949 = vmax.f32 %v4879, 0.0
    %v4950 = vmax.f32 %v4881, 0.0
    %v4951 = vmax.f32 %v4885, 0.0
    %v4952 = vmax.f32 %v4887, 0.0
    %v4953 = vmax.f32 %v4889, 0.0
    %v4954 = vmax.f32 %v4891, 0.0
    %v4955 = vmax.f32 %v4895, 0.0
    %v4956 = vmax.f32 %v4897, 0.0
    %v4957 = vmax.f32 %v4899, 0.0
    %v4958 = vmax.f32 %v4901, 0.0
    %v4959 = vmax.f32 %v4905, 0.0
    %v4960 = vmax.f32 %v4907, 0.0
    %v4961 = vmax.f32 %v4909, 0.0
    %v4962 = vmax.f32 %v4911, 0.0
    %v4963 = vmax.f32 %v4915, 0.0
    %v4964 = vmax.f32 %v4917, 0.0
    %v4965 = vmax.f32 %v4919, 0.0
    %v4966 = vmax.f32 %v4921, 0.0
    %v4967 = vmax.f32 %v4925, 0.0
    %v4968 = vmax.f32 %v4927, 0.0
    %v4969 = vmax.f32 %v4929, 0.0
    %v4970 = vmax.f32 %v4931, 0.0
    %v4971 = vmax.f32 %v4935, 0.0
    %v4972 = vmax.f32 %v4937, 0.0
    %v4973 = vmax.f32 %v4939, 0.0
    %v4974 = vmax.f32 %v4941, 0.0
    %v4975 = vpack.c.bf16 %v4945, %v4943
    %v4976 = vpack.c.bf16 %v4946, %v4944
    %v4977 = vpack.c.bf16 %v4949, %v4947
    %v4978 = vpack.c.bf16 %v4950, %v4948
    %v4979 = vpack.c.bf16 %v4953, %v4951
    %v4980 = vpack.c.bf16 %v4954, %v4952
    %v4981 = vpack.c.bf16 %v4957, %v4955
    %v4982 = vpack.c.bf16 %v4958, %v4956
    %v4983 = vpack.c.bf16 %v4961, %v4959
    %v4984 = vpack.c.bf16 %v4962, %v4960
    %v4985 = vpack.c.bf16 %v4965, %v4963
    %v4986 = vpack.c.bf16 %v4966, %v4964
    %v4987 = vpack.c.bf16 %v4969, %v4967
    %v4988 = vpack.c.bf16 %v4970, %v4968
    %v4989 = vpack.c.bf16 %v4973, %v4971
    %v4990 = vpack.c.bf16 %v4974, %v4972
    %s4991 = scalar_lea.vmem %s5, 32
    %v4992 = vld [vmem:[%s4991] sm:$0xf]
    %v4993 = vld [vmem:[%s4991 + $0x4] sm:$0xf]
    %v4994 = vld [vmem:[%s4991 + $0x8] sm:$0xf]
    %v4995 = vld [vmem:[%s4991 + $0xc] sm:$0xf]
    %v4996 = vld [vmem:[%s4991 + $0x10] sm:$0xf]
    %v4997 = vld [vmem:[%s4991 + $0x14] sm:$0xf]
    %v4998 = vld [vmem:[%s4991 + $0x18] sm:$0xf]
    %v4999 = vld [vmem:[%s4991 + $0x1c] sm:$0xf]
    %v5008 = vunpack.c.l.b16 %v4992
    %v5009 = vunpack.c.l.b16 %v4993
    %v5010 = vunpack.c.l.b16 %v4994
    %v5011 = vunpack.c.l.b16 %v4995
    %v5012 = vunpack.c.l.b16 %v4996
    %v5013 = vunpack.c.l.b16 %v4997
    %v5014 = vunpack.c.l.b16 %v4998
    %v5015 = vunpack.c.l.b16 %v4999
    %v5016 = vpack.c.b16 %v5009, %v5008
    %v5017 = vpack.c.b16 %v5011, %v5010
    %v5018 = vpack.c.b16 %v5013, %v5012
    %v5019 = vpack.c.b16 %v5015, %v5014
    %5024 = vmatprep.subr.bf16.mxu0 %v4976
    %5025 = vmatpush1.bf16.msra.mxu0 %v4975
    %5026 = vmatprep.subr.bf16.mxu0 %v4978
    %5027 = vmatpush1.bf16.msra.mxu0 %v4977
    %5028 = vmatprep.subr.bf16.mxu0 %v4980
    %5029 = vmatpush1.bf16.msra.mxu0 %v4979
    %5030 = vmatprep.subr.bf16.mxu0 %v4982
    %5031 = vmatpush1.bf16.msra.mxu0 %v4981
    %5032 = vmatprep.subr.bf16.mxu0 %v4984
    %5033 = vmatpush1.bf16.msra.mxu0 %v4983
    %5034 = vmatprep.subr.bf16.mxu0 %v4986
    %5035 = vmatpush1.bf16.msra.mxu0 %v4985
    %5036 = vmatprep.subr.bf16.mxu0 %v4988
    %5037 = vmatpush1.bf16.msra.mxu0 %v4987
    %5038 = vmatprep.subr.bf16.mxu0 %v4990
    %5039 = vmatpush1.bf16.msra.mxu0 %v4989
    %5040 = vmatprep.subr.bf16.mxu0 0
    %5041 = vmatpush1.bf16.msra.mxu0 0
    %5042 = vmatprep.subr.bf16.mxu0 0
    %5043 = vmatpush1.bf16.msra.mxu0 0
    %5044 = vmatprep.subr.bf16.mxu0 0
    %5045 = vmatpush1.bf16.msra.mxu0 0
    %5046 = vmatprep.subr.bf16.mxu0 0
    %5047 = vmatpush1.bf16.msra.mxu0 0
    %5048 = vmatprep.subr.bf16.mxu0 0
    %5049 = vmatpush1.bf16.msra.mxu0 0
    %5050 = vmatprep.subr.bf16.mxu0 0
    %5051 = vmatpush1.bf16.msra.mxu0 0
    %5052 = vmatprep.subr.bf16.mxu0 0
    %5053 = vmatpush1.bf16.msra.mxu0 0
    %5054 = vmatprep.subr.bf16.mxu0 0
    %5055 = vmatpush1.bf16.msra.mxu0 0
    %5056 = vmatprep.mubr.bf16.mxu0 0
    %5057 = vmatmul.mubr.bf16.gmra.mrb[0].mxu0 %v5016
    %v5058 = vpop.f32.mrb[0].mxu0
    %v5059 = vadd.f32 0.0, %v5058
    %v5060 = vpop.f32.mrb[0].mxu0
    %v5061 = vadd.f32 0.0, %v5060
    %v5062 = vpop.f32.mrb[0].mxu0
    %v5063 = vadd.f32 0.0, %v5062
    %v5064 = vpop.f32.mrb[0].mxu0
    %v5065 = vadd.f32 0.0, %v5064
    %5066 = vmatprep.mubr.bf16.mxu0 0
    %5067 = vmatmul.mubr.bf16.gmra.mrb[0].mxu0 %v5017
    %v5068 = vpop.f32.mrb[0].mxu0
    %v5069 = vadd.f32 0.0, %v5068
    %v5070 = vpop.f32.mrb[0].mxu0
    %v5071 = vadd.f32 0.0, %v5070
    %v5072 = vpop.f32.mrb[0].mxu0
    %v5073 = vadd.f32 0.0, %v5072
    %v5074 = vpop.f32.mrb[0].mxu0
    %v5075 = vadd.f32 0.0, %v5074
    %5076 = vmatprep.mubr.bf16.mxu0 0
    %5077 = vmatmul.mubr.bf16.gmra.mrb[0].mxu0 %v5018
    %v5078 = vpop.f32.mrb[0].mxu0
    %v5079 = vadd.f32 0.0, %v5078
    %v5080 = vpop.f32.mrb[0].mxu0
    %v5081 = vadd.f32 0.0, %v5080
    %v5082 = vpop.f32.mrb[0].mxu0
    %v5083 = vadd.f32 0.0, %v5082
    %v5084 = vpop.f32.mrb[0].mxu0
    %v5085 = vadd.f32 0.0, %v5084
    %5086 = vmatprep.mubr.bf16.mxu0 0
    %5087 = vmatmul.mubr.bf16.gmra.mrb[0].mxu0 %v5019
    %v5088 = vpop.f32.mrb[0].mxu0
    %v5089 = vadd.f32 0.0, %v5088
    %v5090 = vpop.f32.mrb[0].mxu0
    %v5091 = vadd.f32 0.0, %v5090
    %v5092 = vpop.f32.mrb[0].mxu0
    %v5093 = vadd.f32 0.0, %v5092
    %v5094 = vpop.f32.mrb[0].mxu0
    %v5095 = vadd.f32 0.0, %v5094
    %5096 = vdwg.mxu0
    %v5097 = vadd.f32 %v4620, %v5059
    %v5098 = vadd.f32 %v4621, %v5061
    %v5099 = vadd.f32 %v4622, %v5063
    %v5100 = vadd.f32 %v4623, %v5065
    %v5101 = vadd.f32 %v4624, %v5069
    %v5102 = vadd.f32 %v4625, %v5071
    %v5103 = vadd.f32 %v4626, %v5073
    %v5104 = vadd.f32 %v4627, %v5075
    %v5105 = vadd.f32 %v4628, %v5079
    %v5106 = vadd.f32 %v4629, %v5081
    %v5107 = vadd.f32 %v4630, %v5083
    %v5108 = vadd.f32 %v4631, %v5085
    %v5109 = vadd.f32 %v4632, %v5089
    %v5110 = vadd.f32 %v4633, %v5091
    %v5111 = vadd.f32 %v4634, %v5093
    %v5112 = vadd.f32 %v4635, %v5095
    %s5113 = scalar_lea.vmem %s3, 256
    %v5114 = vld [vmem:[%s5113] sm:$0xff]
    %v5115 = vld [vmem:[%s5113 + $0x8] sm:$0xff]
    %v5116 = vld [vmem:[%s5113 + $0x10] sm:$0xff]
    %v5117 = vld [vmem:[%s5113 + $0x18] sm:$0xff]
    %v5118 = vld [vmem:[%s5113 + $0x20] sm:$0xff]
    %v5119 = vld [vmem:[%s5113 + $0x28] sm:$0xff]
    %v5120 = vld [vmem:[%s5113 + $0x30] sm:$0xff]
    %v5121 = vld [vmem:[%s5113 + $0x38] sm:$0xff]
    %v5122 = vld [vmem:[%s5113 + $0x40] sm:$0xff]
    %v5123 = vld [vmem:[%s5113 + $0x48] sm:$0xff]
    %v5124 = vld [vmem:[%s5113 + $0x50] sm:$0xff]
    %v5125 = vld [vmem:[%s5113 + $0x58] sm:$0xff]
    %v5126 = vld [vmem:[%s5113 + $0x60] sm:$0xff]
    %v5127 = vld [vmem:[%s5113 + $0x68] sm:$0xff]
    %v5128 = vld [vmem:[%s5113 + $0x70] sm:$0xff]
    %v5129 = vld [vmem:[%s5113 + $0x78] sm:$0xff]
    %s5130 = scalar_lea.vmem %s4, 256
    %v5131 = vld [vmem:[%s5130] sm:$0xff]
    %v5132 = vld [vmem:[%s5130 + $0x8] sm:$0xff]
    %v5133 = vld [vmem:[%s5130 + $0x10] sm:$0xff]
    %v5134 = vld [vmem:[%s5130 + $0x18] sm:$0xff]
    %v5135 = vld [vmem:[%s5130 + $0x20] sm:$0xff]
    %v5136 = vld [vmem:[%s5130 + $0x28] sm:$0xff]
    %v5137 = vld [vmem:[%s5130 + $0x30] sm:$0xff]
    %v5138 = vld [vmem:[%s5130 + $0x38] sm:$0xff]
    %v5139 = vld [vmem:[%s5130 + $0x40] sm:$0xff]
    %v5140 = vld [vmem:[%s5130 + $0x48] sm:$0xff]
    %v5141 = vld [vmem:[%s5130 + $0x50] sm:$0xff]
    %v5142 = vld [vmem:[%s5130 + $0x58] sm:$0xff]
    %v5143 = vld [vmem:[%s5130 + $0x60] sm:$0xff]
    %v5144 = vld [vmem:[%s5130 + $0x68] sm:$0xff]
    %v5145 = vld [vmem:[%s5130 + $0x70] sm:$0xff]
    %v5146 = vld [vmem:[%s5130 + $0x78] sm:$0xff]
    %5148 = vset.pattern.permute.xlu0 0
    %5149 = vperm.xlu0 %5148, %v5131
    %v5150 = vpop.permute.xlu0 %5149
    %5153 = vset.pattern.permute.xlu0 0
    %5154 = vperm.xlu0 %5153, %v5132
    %v5155 = vpop.permute.xlu0 %5154
    %5158 = vset.pattern.permute.xlu0 0
    %5159 = vperm.xlu0 %5158, %v5133
    %v5160 = vpop.permute.xlu0 %5159
    %5163 = vset.pattern.permute.xlu0 0
    %5164 = vperm.xlu0 %5163, %v5134
    %v5165 = vpop.permute.xlu0 %5164
    %5168 = vset.pattern.permute.xlu0 0
    %5169 = vperm.xlu0 %5168, %v5135
    %v5170 = vpop.permute.xlu0 %5169
    %5173 = vset.pattern.permute.xlu0 0
    %5174 = vperm.xlu0 %5173, %v5136
    %v5175 = vpop.permute.xlu0 %5174
    %5178 = vset.pattern.permute.xlu0 0
    %5179 = vperm.xlu0 %5178, %v5137
    %v5180 = vpop.permute.xlu0 %5179
    %5183 = vset.pattern.permute.xlu0 0
    %5184 = vperm.xlu0 %5183, %v5138
    %v5185 = vpop.permute.xlu0 %5184
    %5188 = vset.pattern.permute.xlu0 0
    %5189 = vperm.xlu0 %5188, %v5139
    %v5190 = vpop.permute.xlu0 %5189
    %5193 = vset.pattern.permute.xlu0 0
    %5194 = vperm.xlu0 %5193, %v5140
    %v5195 = vpop.permute.xlu0 %5194
    %5198 = vset.pattern.permute.xlu0 0
    %5199 = vperm.xlu0 %5198, %v5141
    %v5200 = vpop.permute.xlu0 %5199
    %5203 = vset.pattern.permute.xlu0 0
    %5204 = vperm.xlu0 %5203, %v5142
    %v5205 = vpop.permute.xlu0 %5204
    %5208 = vset.pattern.permute.xlu0 0
    %5209 = vperm.xlu0 %5208, %v5143
    %v5210 = vpop.permute.xlu0 %5209
    %5213 = vset.pattern.permute.xlu0 0
    %5214 = vperm.xlu0 %5213, %v5144
    %v5215 = vpop.permute.xlu0 %5214
    %5218 = vset.pattern.permute.xlu0 0
    %5219 = vperm.xlu0 %5218, %v5145
    %v5220 = vpop.permute.xlu0 %5219
    %5223 = vset.pattern.permute.xlu0 0
    %5224 = vperm.xlu0 %5223, %v5146
    %v5225 = vpop.permute.xlu0 %5224
    %v5243 = vunpack.c.l.b16 %v5114
    %v5244 = vunpack.c.h.b16 %v5114
    %v5245 = vunpack.c.l.b16 %v5115
    %v5246 = vunpack.c.h.b16 %v5115
    %v5247 = vunpack.c.l.b16 %v5116
    %v5248 = vunpack.c.h.b16 %v5116
    %v5249 = vunpack.c.l.b16 %v5117
    %v5250 = vunpack.c.h.b16 %v5117
    %v5251 = vunpack.c.l.b16 %v5118
    %v5252 = vunpack.c.h.b16 %v5118
    %v5253 = vunpack.c.l.b16 %v5119
    %v5254 = vunpack.c.h.b16 %v5119
    %v5255 = vunpack.c.l.b16 %v5120
    %v5256 = vunpack.c.h.b16 %v5120
    %v5257 = vunpack.c.l.b16 %v5121
    %v5258 = vunpack.c.h.b16 %v5121
    %v5259 = vunpack.c.l.b16 %v5122
    %v5260 = vunpack.c.h.b16 %v5122
    %v5261 = vunpack.c.l.b16 %v5123
    %v5262 = vunpack.c.h.b16 %v5123
    %v5263 = vunpack.c.l.b16 %v5124
    %v5264 = vunpack.c.h.b16 %v5124
    %v5265 = vunpack.c.l.b16 %v5125
    %v5266 = vunpack.c.h.b16 %v5125
    %v5267 = vunpack.c.l.b16 %v5126
    %v5268 = vunpack.c.h.b16 %v5126
    %v5269 = vunpack.c.l.b16 %v5127
    %v5270 = vunpack.c.h.b16 %v5127
    %v5271 = vunpack.c.l.b16 %v5128
    %v5272 = vunpack.c.h.b16 %v5128
    %v5273 = vunpack.c.l.b16 %v5129
    %v5274 = vunpack.c.h.b16 %v5129
    %v5275 = vpack.c.b16 %v5245, %v5243
    %v5276 = vpack.c.b16 %v5246, %v5244
    %v5277 = vpack.c.b16 %v5249, %v5247
    %v5278 = vpack.c.b16 %v5250, %v5248
    %v5279 = vpack.c.b16 %v5253, %v5251
    %v5280 = vpack.c.b16 %v5254, %v5252
    %v5281 = vpack.c.b16 %v5257, %v5255
    %v5282 = vpack.c.b16 %v5258, %v5256
    %v5283 = vpack.c.b16 %v5261, %v5259
    %v5284 = vpack.c.b16 %v5262, %v5260
    %v5285 = vpack.c.b16 %v5265, %v5263
    %v5286 = vpack.c.b16 %v5266, %v5264
    %v5287 = vpack.c.b16 %v5269, %v5267
    %v5288 = vpack.c.b16 %v5270, %v5268
    %v5289 = vpack.c.b16 %v5273, %v5271
    %v5290 = vpack.c.b16 %v5274, %v5272
    %5307 = vmatprep.subr.bf16.mxu0 %v4083
    %5308 = vmatpush1.bf16.msra.mxu0 %v4082
    %5309 = vmatprep.subr.bf16.mxu0 %v4085
    %5310 = vmatpush1.bf16.msra.mxu0 %v4084
    %5311 = vmatprep.subr.bf16.mxu0 %v4087
    %5312 = vmatpush1.bf16.msra.mxu0 %v4086
    %5313 = vmatprep.subr.bf16.mxu0 %v4089
    %5314 = vmatpush1.bf16.msra.mxu0 %v4088
    %5315 = vmatprep.subr.bf16.mxu0 %v4091
    %5316 = vmatpush1.bf16.msra.mxu0 %v4090
    %5317 = vmatprep.subr.bf16.mxu0 %v4093
    %5318 = vmatpush1.bf16.msra.mxu0 %v4092
    %5319 = vmatprep.subr.bf16.mxu0 %v4095
    %5320 = vmatpush1.bf16.msra.mxu0 %v4094
    %5321 = vmatprep.subr.bf16.mxu0 %v4097
    %5322 = vmatpush1.bf16.msra.mxu0 %v4096
    %5323 = vmatprep.subr.bf16.mxu0 %v4099
    %5324 = vmatpush1.bf16.msra.mxu0 %v4098
    %5325 = vmatprep.subr.bf16.mxu0 %v4101
    %5326 = vmatpush1.bf16.msra.mxu0 %v4100
    %5327 = vmatprep.subr.bf16.mxu0 %v4103
    %5328 = vmatpush1.bf16.msra.mxu0 %v4102
    %5329 = vmatprep.subr.bf16.mxu0 %v4105
    %5330 = vmatpush1.bf16.msra.mxu0 %v4104
    %5331 = vmatprep.subr.bf16.mxu0 %v4107
    %5332 = vmatpush1.bf16.msra.mxu0 %v4106
    %5333 = vmatprep.subr.bf16.mxu0 %v4109
    %5334 = vmatpush1.bf16.msra.mxu0 %v4108
    %5335 = vmatprep.subr.bf16.mxu0 %v4111
    %5336 = vmatpush1.bf16.msra.mxu0 %v4110
    %5337 = vmatprep.subr.bf16.mxu0 %v4113
    %5338 = vmatpush1.bf16.msra.mxu0 %v4112
    %5339 = vmatprep.mubr.bf16.mxu0 %v5276
    %5340 = vmatmul.mubr.bf16.gmra.mrb[0].mxu0 %v5275
    %v5341 = vpop.f32.mrb[0].mxu0
    %v5342 = vadd.f32 %v5150, %v5341
    %v5343 = vpop.f32.mrb[0].mxu0
    %v5344 = vadd.f32 %v5150, %v5343
    %v5345 = vpop.f32.mrb[0].mxu0
    %v5346 = vadd.f32 %v5155, %v5345
    %v5347 = vpop.f32.mrb[0].mxu0
    %v5348 = vadd.f32 %v5155, %v5347
    %5349 = vmatprep.mubr.bf16.mxu0 %v5278
    %5350 = vmatmul.mubr.bf16.gmra.mrb[0].mxu0 %v5277
    %v5351 = vpop.f32.mrb[0].mxu0
    %v5352 = vadd.f32 %v5160, %v5351
    %v5353 = vpop.f32.mrb[0].mxu0
    %v5354 = vadd.f32 %v5160, %v5353
    %v5355 = vpop.f32.mrb[0].mxu0
    %v5356 = vadd.f32 %v5165, %v5355
    %v5357 = vpop.f32.mrb[0].mxu0
    %v5358 = vadd.f32 %v5165, %v5357
    %5359 = vmatprep.mubr.bf16.mxu0 %v5280
    %5360 = vmatmul.mubr.bf16.gmra.mrb[0].mxu0 %v5279
    %v5361 = vpop.f32.mrb[0].mxu0
    %v5362 = vadd.f32 %v5170, %v5361
    %v5363 = vpop.f32.mrb[0].mxu0
    %v5364 = vadd.f32 %v5170, %v5363
    %v5365 = vpop.f32.mrb[0].mxu0
    %v5366 = vadd.f32 %v5175, %v5365
    %v5367 = vpop.f32.mrb[0].mxu0
    %v5368 = vadd.f32 %v5175, %v5367
    %5369 = vmatprep.mubr.bf16.mxu0 %v5282
    %5370 = vmatmul.mubr.bf16.gmra.mrb[0].mxu0 %v5281
    %v5371 = vpop.f32.mrb[0].mxu0
    %v5372 = vadd.f32 %v5180, %v5371
    %v5373 = vpop.f32.mrb[0].mxu0
    %v5374 = vadd.f32 %v5180, %v5373
    %v5375 = vpop.f32.mrb[0].mxu0
    %v5376 = vadd.f32 %v5185, %v5375
    %v5377 = vpop.f32.mrb[0].mxu0
    %v5378 = vadd.f32 %v5185, %v5377
    %5379 = vmatprep.mubr.bf16.mxu0 %v5284
    %5380 = vmatmul.mubr.bf16.gmra.mrb[0].mxu0 %v5283
    %v5381 = vpop.f32.mrb[0].mxu0
    %v5382 = vadd.f32 %v5190, %v5381
    %v5383 = vpop.f32.mrb[0].mxu0
    %v5384 = vadd.f32 %v5190, %v5383
    %v5385 = vpop.f32.mrb[0].mxu0
    %v5386 = vadd.f32 %v5195, %v5385
    %v5387 = vpop.f32.mrb[0].mxu0
    %v5388 = vadd.f32 %v5195, %v5387
    %5389 = vmatprep.mubr.bf16.mxu0 %v5286
    %5390 = vmatmul.mubr.bf16.gmra.mrb[0].mxu0 %v5285
    %v5391 = vpop.f32.mrb[0].mxu0
    %v5392 = vadd.f32 %v5200, %v5391
    %v5393 = vpop.f32.mrb[0].mxu0
    %v5394 = vadd.f32 %v5200, %v5393
    %v5395 = vpop.f32.mrb[0].mxu0
    %v5396 = vadd.f32 %v5205, %v5395
    %v5397 = vpop.f32.mrb[0].mxu0
    %v5398 = vadd.f32 %v5205, %v5397
    %5399 = vmatprep.mubr.bf16.mxu0 %v5288
    %5400 = vmatmul.mubr.bf16.gmra.mrb[0].mxu0 %v5287
    %v5401 = vpop.f32.mrb[0].mxu0
    %v5402 = vadd.f32 %v5210, %v5401
    %v5403 = vpop.f32.mrb[0].mxu0
    %v5404 = vadd.f32 %v5210, %v5403
    %v5405 = vpop.f32.mrb[0].mxu0
    %v5406 = vadd.f32 %v5215, %v5405
    %v5407 = vpop.f32.mrb[0].mxu0
    %v5408 = vadd.f32 %v5215, %v5407
    %5409 = vmatprep.mubr.bf16.mxu0 %v5290
    %5410 = vmatmul.mubr.bf16.gmra.mrb[0].mxu0 %v5289
    %v5411 = vpop.f32.mrb[0].mxu0
    %v5412 = vadd.f32 %v5220, %v5411
    %v5413 = vpop.f32.mrb[0].mxu0
    %v5414 = vadd.f32 %v5220, %v5413
    %v5415 = vpop.f32.mrb[0].mxu0
    %v5416 = vadd.f32 %v5225, %v5415
    %v5417 = vpop.f32.mrb[0].mxu0
    %v5418 = vadd.f32 %v5225, %v5417
    %5419 = vdwg.mxu0
    %v5420 = vmax.f32 %v5342, 0.0
    %v5421 = vmax.f32 %v5344, 0.0
    %v5422 = vmax.f32 %v5346, 0.0
    %v5423 = vmax.f32 %v5348, 0.0
    %v5424 = vmax.f32 %v5352, 0.0
    %v5425 = vmax.f32 %v5354, 0.0
    %v5426 = vmax.f32 %v5356, 0.0
    %v5427 = vmax.f32 %v5358, 0.0
    %v5428 = vmax.f32 %v5362, 0.0
    %v5429 = vmax.f32 %v5364, 0.0
    %v5430 = vmax.f32 %v5366, 0.0
    %v5431 = vmax.f32 %v5368, 0.0
    %v5432 = vmax.f32 %v5372, 0.0
    %v5433 = vmax.f32 %v5374, 0.0
    %v5434 = vmax.f32 %v5376, 0.0
    %v5435 = vmax.f32 %v5378, 0.0
    %v5436 = vmax.f32 %v5382, 0.0
    %v5437 = vmax.f32 %v5384, 0.0
    %v5438 = vmax.f32 %v5386, 0.0
    %v5439 = vmax.f32 %v5388, 0.0
    %v5440 = vmax.f32 %v5392, 0.0
    %v5441 = vmax.f32 %v5394, 0.0
    %v5442 = vmax.f32 %v5396, 0.0
    %v5443 = vmax.f32 %v5398, 0.0
    %v5444 = vmax.f32 %v5402, 0.0
    %v5445 = vmax.f32 %v5404, 0.0
    %v5446 = vmax.f32 %v5406, 0.0
    %v5447 = vmax.f32 %v5408, 0.0
    %v5448 = vmax.f32 %v5412, 0.0
    %v5449 = vmax.f32 %v5414, 0.0
    %v5450 = vmax.f32 %v5416, 0.0
    %v5451 = vmax.f32 %v5418, 0.0
    %v5452 = vpack.c.bf16 %v5422, %v5420
    %v5453 = vpack.c.bf16 %v5423, %v5421
    %v5454 = vpack.c.bf16 %v5426, %v5424
    %v5455 = vpack.c.bf16 %v5427, %v5425
    %v5456 = vpack.c.bf16 %v5430, %v5428
    %v5457 = vpack.c.bf16 %v5431, %v5429
    %v5458 = vpack.c.bf16 %v5434, %v5432
    %v5459 = vpack.c.bf16 %v5435, %v5433
    %v5460 = vpack.c.bf16 %v5438, %v5436
    %v5461 = vpack.c.bf16 %v5439, %v5437
    %v5462 = vpack.c.bf16 %v5442, %v5440
    %v5463 = vpack.c.bf16 %v5443, %v5441
    %v5464 = vpack.c.bf16 %v5446, %v5444
    %v5465 = vpack.c.bf16 %v5447, %v5445
    %v5466 = vpack.c.bf16 %v5450, %v5448
    %v5467 = vpack.c.bf16 %v5451, %v5449
    %s5468 = scalar_lea.vmem %s5, 64
    %v5469 = vld [vmem:[%s5468] sm:$0xf]
    %v5470 = vld [vmem:[%s5468 + $0x4] sm:$0xf]
    %v5471 = vld [vmem:[%s5468 + $0x8] sm:$0xf]
    %v5472 = vld [vmem:[%s5468 + $0xc] sm:$0xf]
    %v5473 = vld [vmem:[%s5468 + $0x10] sm:$0xf]
    %v5474 = vld [vmem:[%s5468 + $0x14] sm:$0xf]
    %v5475 = vld [vmem:[%s5468 + $0x18] sm:$0xf]
    %v5476 = vld [vmem:[%s5468 + $0x1c] sm:$0xf]
    %v5485 = vunpack.c.l.b16 %v5469
    %v5486 = vunpack.c.l.b16 %v5470
    %v5487 = vunpack.c.l.b16 %v5471
    %v5488 = vunpack.c.l.b16 %v5472
    %v5489 = vunpack.c.l.b16 %v5473
    %v5490 = vunpack.c.l.b16 %v5474
    %v5491 = vunpack.c.l.b16 %v5475
    %v5492 = vunpack.c.l.b16 %v5476
    %v5493 = vpack.c.b16 %v5486, %v5485
    %v5494 = vpack.c.b16 %v5488, %v5487
    %v5495 = vpack.c.b16 %v5490, %v5489
    %v5496 = vpack.c.b16 %v5492, %v5491
    %5501 = vmatprep.subr.bf16.mxu0 %v5453
    %5502 = vmatpush1.bf16.msra.mxu0 %v5452
    %5503 = vmatprep.subr.bf16.mxu0 %v5455
    %5504 = vmatpush1.bf16.msra.mxu0 %v5454
    %5505 = vmatprep.subr.bf16.mxu0 %v5457
    %5506 = vmatpush1.bf16.msra.mxu0 %v5456
    %5507 = vmatprep.subr.bf16.mxu0 %v5459
    %5508 = vmatpush1.bf16.msra.mxu0 %v5458
    %5509 = vmatprep.subr.bf16.mxu0 %v5461
    %5510 = vmatpush1.bf16.msra.mxu0 %v5460
    %5511 = vmatprep.subr.bf16.mxu0 %v5463
    %5512 = vmatpush1.bf16.msra.mxu0 %v5462
    %5513 = vmatprep.subr.bf16.mxu0 %v5465
    %5514 = vmatpush1.bf16.msra.mxu0 %v5464
    %5515 = vmatprep.subr.bf16.mxu0 %v5467
    %5516 = vmatpush1.bf16.msra.mxu0 %v5466
    %5517 = vmatprep.subr.bf16.mxu0 0
    %5518 = vmatpush1.bf16.msra.mxu0 0
    %5519 = vmatprep.subr.bf16.mxu0 0
    %5520 = vmatpush1.bf16.msra.mxu0 0
    %5521 = vmatprep.subr.bf16.mxu0 0
    %5522 = vmatpush1.bf16.msra.mxu0 0
    %5523 = vmatprep.subr.bf16.mxu0 0
    %5524 = vmatpush1.bf16.msra.mxu0 0
    %5525 = vmatprep.subr.bf16.mxu0 0
    %5526 = vmatpush1.bf16.msra.mxu0 0
    %5527 = vmatprep.subr.bf16.mxu0 0
    %5528 = vmatpush1.bf16.msra.mxu0 0
    %5529 = vmatprep.subr.bf16.mxu0 0
    %5530 = vmatpush1.bf16.msra.mxu0 0
    %5531 = vmatprep.subr.bf16.mxu0 0
    %5532 = vmatpush1.bf16.msra.mxu0 0
    %5533 = vmatprep.mubr.bf16.mxu0 0
    %5534 = vmatmul.mubr.bf16.gmra.mrb[0].mxu0 %v5493
    %v5535 = vpop.f32.mrb[0].mxu0
    %v5536 = vadd.f32 0.0, %v5535
    %v5537 = vpop.f32.mrb[0].mxu0
    %v5538 = vadd.f32 0.0, %v5537
    %v5539 = vpop.f32.mrb[0].mxu0
    %v5540 = vadd.f32 0.0, %v5539
    %v5541 = vpop.f32.mrb[0].mxu0
    %v5542 = vadd.f32 0.0, %v5541
    %5543 = vmatprep.mubr.bf16.mxu0 0
    %5544 = vmatmul.mubr.bf16.gmra.mrb[0].mxu0 %v5494
    %v5545 = vpop.f32.mrb[0].mxu0
    %v5546 = vadd.f32 0.0, %v5545
    %v5547 = vpop.f32.mrb[0].mxu0
    %v5548 = vadd.f32 0.0, %v5547
    %v5549 = vpop.f32.mrb[0].mxu0
    %v5550 = vadd.f32 0.0, %v5549
    %v5551 = vpop.f32.mrb[0].mxu0
    %v5552 = vadd.f32 0.0, %v5551
    %5553 = vmatprep.mubr.bf16.mxu0 0
    %5554 = vmatmul.mubr.bf16.gmra.mrb[0].mxu0 %v5495
    %v5555 = vpop.f32.mrb[0].mxu0
    %v5556 = vadd.f32 0.0, %v5555
    %v5557 = vpop.f32.mrb[0].mxu0
    %v5558 = vadd.f32 0.0, %v5557
    %v5559 = vpop.f32.mrb[0].mxu0
    %v5560 = vadd.f32 0.0, %v5559
    %v5561 = vpop.f32.mrb[0].mxu0
    %v5562 = vadd.f32 0.0, %v5561
    %5563 = vmatprep.mubr.bf16.mxu0 0
    %5564 = vmatmul.mubr.bf16.gmra.mrb[0].mxu0 %v5496
    %v5565 = vpop.f32.mrb[0].mxu0
    %v5566 = vadd.f32 0.0, %v5565
    %v5567 = vpop.f32.mrb[0].mxu0
    %v5568 = vadd.f32 0.0, %v5567
    %v5569 = vpop.f32.mrb[0].mxu0
    %v5570 = vadd.f32 0.0, %v5569
    %v5571 = vpop.f32.mrb[0].mxu0
    %v5572 = vadd.f32 0.0, %v5571
    %5573 = vdwg.mxu0
    %v5574 = vadd.f32 %v5097, %v5536
    %v5575 = vadd.f32 %v5098, %v5538
    %v5576 = vadd.f32 %v5099, %v5540
    %v5577 = vadd.f32 %v5100, %v5542
    %v5578 = vadd.f32 %v5101, %v5546
    %v5579 = vadd.f32 %v5102, %v5548
    %v5580 = vadd.f32 %v5103, %v5550
    %v5581 = vadd.f32 %v5104, %v5552
    %v5582 = vadd.f32 %v5105, %v5556
    %v5583 = vadd.f32 %v5106, %v5558
    %v5584 = vadd.f32 %v5107, %v5560
    %v5585 = vadd.f32 %v5108, %v5562
    %v5586 = vadd.f32 %v5109, %v5566
    %v5587 = vadd.f32 %v5110, %v5568
    %v5588 = vadd.f32 %v5111, %v5570
    %v5589 = vadd.f32 %v5112, %v5572
    %s5590 = scalar_lea.vmem %s3, 384
    %v5591 = vld [vmem:[%s5590] sm:$0xff]
    %v5592 = vld [vmem:[%s5590 + $0x8] sm:$0xff]
    %v5593 = vld [vmem:[%s5590 + $0x10] sm:$0xff]
    %v5594 = vld [vmem:[%s5590 + $0x18] sm:$0xff]
    %v5595 = vld [vmem:[%s5590 + $0x20] sm:$0xff]
    %v5596 = vld [vmem:[%s5590 + $0x28] sm:$0xff]
    %v5597 = vld [vmem:[%s5590 + $0x30] sm:$0xff]
    %v5598 = vld [vmem:[%s5590 + $0x38] sm:$0xff]
    %v5599 = vld [vmem:[%s5590 + $0x40] sm:$0xff]
    %v5600 = vld [vmem:[%s5590 + $0x48] sm:$0xff]
    %v5601 = vld [vmem:[%s5590 + $0x50] sm:$0xff]
    %v5602 = vld [vmem:[%s5590 + $0x58] sm:$0xff]
    %v5603 = vld [vmem:[%s5590 + $0x60] sm:$0xff]
    %v5604 = vld [vmem:[%s5590 + $0x68] sm:$0xff]
    %v5605 = vld [vmem:[%s5590 + $0x70] sm:$0xff]
    %v5606 = vld [vmem:[%s5590 + $0x78] sm:$0xff]
    %s5607 = scalar_lea.vmem %s4, 384
    %v5608 = vld [vmem:[%s5607] sm:$0xff]
    %v5609 = vld [vmem:[%s5607 + $0x8] sm:$0xff]
    %v5610 = vld [vmem:[%s5607 + $0x10] sm:$0xff]
    %v5611 = vld [vmem:[%s5607 + $0x18] sm:$0xff]
    %v5612 = vld [vmem:[%s5607 + $0x20] sm:$0xff]
    %v5613 = vld [vmem:[%s5607 + $0x28] sm:$0xff]
    %v5614 = vld [vmem:[%s5607 + $0x30] sm:$0xff]
    %v5615 = vld [vmem:[%s5607 + $0x38] sm:$0xff]
    %v5616 = vld [vmem:[%s5607 + $0x40] sm:$0xff]
    %v5617 = vld [vmem:[%s5607 + $0x48] sm:$0xff]
    %v5618 = vld [vmem:[%s5607 + $0x50] sm:$0xff]
    %v5619 = vld [vmem:[%s5607 + $0x58] sm:$0xff]
    %v5620 = vld [vmem:[%s5607 + $0x60] sm:$0xff]
    %v5621 = vld [vmem:[%s5607 + $0x68] sm:$0xff]
    %v5622 = vld [vmem:[%s5607 + $0x70] sm:$0xff]
    %v5623 = vld [vmem:[%s5607 + $0x78] sm:$0xff]
    %5625 = vset.pattern.permute.xlu0 0
    %5626 = vperm.xlu0 %5625, %v5608
    %v5627 = vpop.permute.xlu0 %5626
    %5630 = vset.pattern.permute.xlu0 0
    %5631 = vperm.xlu0 %5630, %v5609
    %v5632 = vpop.permute.xlu0 %5631
    %5635 = vset.pattern.permute.xlu0 0
    %5636 = vperm.xlu0 %5635, %v5610
    %v5637 = vpop.permute.xlu0 %5636
    %5640 = vset.pattern.permute.xlu0 0
    %5641 = vperm.xlu0 %5640, %v5611
    %v5642 = vpop.permute.xlu0 %5641
    %5645 = vset.pattern.permute.xlu0 0
    %5646 = vperm.xlu0 %5645, %v5612
    %v5647 = vpop.permute.xlu0 %5646
    %5650 = vset.pattern.permute.xlu0 0
    %5651 = vperm.xlu0 %5650, %v5613
    %v5652 = vpop.permute.xlu0 %5651
    %5655 = vset.pattern.permute.xlu0 0
    %5656 = vperm.xlu0 %5655, %v5614
    %v5657 = vpop.permute.xlu0 %5656
    %5660 = vset.pattern.permute.xlu0 0
    %5661 = vperm.xlu0 %5660, %v5615
    %v5662 = vpop.permute.xlu0 %5661
    %5665 = vset.pattern.permute.xlu0 0
    %5666 = vperm.xlu0 %5665, %v5616
    %v5667 = vpop.permute.xlu0 %5666
    %5670 = vset.pattern.permute.xlu0 0
    %5671 = vperm.xlu0 %5670, %v5617
    %v5672 = vpop.permute.xlu0 %5671
    %5675 = vset.pattern.permute.xlu0 0
    %5676 = vperm.xlu0 %5675, %v5618
    %v5677 = vpop.permute.xlu0 %5676
    %5680 = vset.pattern.permute.xlu0 0
    %5681 = vperm.xlu0 %5680, %v5619
    %v5682 = vpop.permute.xlu0 %5681
    %5685 = vset.pattern.permute.xlu0 0
    %5686 = vperm.xlu0 %5685, %v5620
    %v5687 = vpop.permute.xlu0 %5686
    %5690 = vset.pattern.permute.xlu0 0
    %5691 = vperm.xlu0 %5690, %v5621
    %v5692 = vpop.permute.xlu0 %5691
    %5695 = vset.pattern.permute.xlu0 0
    %5696 = vperm.xlu0 %5695, %v5622
    %v5697 = vpop.permute.xlu0 %5696
    %5700 = vset.pattern.permute.xlu0 0
    %5701 = vperm.xlu0 %5700, %v5623
    %v5702 = vpop.permute.xlu0 %5701
    %v5720 = vunpack.c.l.b16 %v5591
    %v5721 = vunpack.c.h.b16 %v5591
    %v5722 = vunpack.c.l.b16 %v5592
    %v5723 = vunpack.c.h.b16 %v5592
    %v5724 = vunpack.c.l.b16 %v5593
    %v5725 = vunpack.c.h.b16 %v5593
    %v5726 = vunpack.c.l.b16 %v5594
    %v5727 = vunpack.c.h.b16 %v5594
    %v5728 = vunpack.c.l.b16 %v5595
    %v5729 = vunpack.c.h.b16 %v5595
    %v5730 = vunpack.c.l.b16 %v5596
    %v5731 = vunpack.c.h.b16 %v5596
    %v5732 = vunpack.c.l.b16 %v5597
    %v5733 = vunpack.c.h.b16 %v5597
    %v5734 = vunpack.c.l.b16 %v5598
    %v5735 = vunpack.c.h.b16 %v5598
    %v5736 = vunpack.c.l.b16 %v5599
    %v5737 = vunpack.c.h.b16 %v5599
    %v5738 = vunpack.c.l.b16 %v5600
    %v5739 = vunpack.c.h.b16 %v5600
    %v5740 = vunpack.c.l.b16 %v5601
    %v5741 = vunpack.c.h.b16 %v5601
    %v5742 = vunpack.c.l.b16 %v5602
    %v5743 = vunpack.c.h.b16 %v5602
    %v5744 = vunpack.c.l.b16 %v5603
    %v5745 = vunpack.c.h.b16 %v5603
    %v5746 = vunpack.c.l.b16 %v5604
    %v5747 = vunpack.c.h.b16 %v5604
    %v5748 = vunpack.c.l.b16 %v5605
    %v5749 = vunpack.c.h.b16 %v5605
    %v5750 = vunpack.c.l.b16 %v5606
    %v5751 = vunpack.c.h.b16 %v5606
    %v5752 = vpack.c.b16 %v5722, %v5720
    %v5753 = vpack.c.b16 %v5723, %v5721
    %v5754 = vpack.c.b16 %v5726, %v5724
    %v5755 = vpack.c.b16 %v5727, %v5725
    %v5756 = vpack.c.b16 %v5730, %v5728
    %v5757 = vpack.c.b16 %v5731, %v5729
    %v5758 = vpack.c.b16 %v5734, %v5732
    %v5759 = vpack.c.b16 %v5735, %v5733
    %v5760 = vpack.c.b16 %v5738, %v5736
    %v5761 = vpack.c.b16 %v5739, %v5737
    %v5762 = vpack.c.b16 %v5742, %v5740
    %v5763 = vpack.c.b16 %v5743, %v5741
    %v5764 = vpack.c.b16 %v5746, %v5744
    %v5765 = vpack.c.b16 %v5747, %v5745
    %v5766 = vpack.c.b16 %v5750, %v5748
    %v5767 = vpack.c.b16 %v5751, %v5749
    %5784 = vmatprep.subr.bf16.mxu0 %v4115
    %5785 = vmatpush1.bf16.msra.mxu0 %v4114
    %5786 = vmatprep.subr.bf16.mxu0 %v4117
    %5787 = vmatpush1.bf16.msra.mxu0 %v4116
    %5788 = vmatprep.subr.bf16.mxu0 %v4119
    %5789 = vmatpush1.bf16.msra.mxu0 %v4118
    %5790 = vmatprep.subr.bf16.mxu0 %v4121
    %5791 = vmatpush1.bf16.msra.mxu0 %v4120
    %5792 = vmatprep.subr.bf16.mxu0 %v4123
    %5793 = vmatpush1.bf16.msra.mxu0 %v4122
    %5794 = vmatprep.subr.bf16.mxu0 %v4125
    %5795 = vmatpush1.bf16.msra.mxu0 %v4124
    %5796 = vmatprep.subr.bf16.mxu0 %v4127
    %5797 = vmatpush1.bf16.msra.mxu0 %v4126
    %5798 = vmatprep.subr.bf16.mxu0 %v4129
    %5799 = vmatpush1.bf16.msra.mxu0 %v4128
    %5800 = vmatprep.subr.bf16.mxu0 %v4131
    %5801 = vmatpush1.bf16.msra.mxu0 %v4130
    %5802 = vmatprep.subr.bf16.mxu0 %v4133
    %5803 = vmatpush1.bf16.msra.mxu0 %v4132
    %5804 = vmatprep.subr.bf16.mxu0 %v4135
    %5805 = vmatpush1.bf16.msra.mxu0 %v4134
    %5806 = vmatprep.subr.bf16.mxu0 %v4137
    %5807 = vmatpush1.bf16.msra.mxu0 %v4136
    %5808 = vmatprep.subr.bf16.mxu0 %v4139
    %5809 = vmatpush1.bf16.msra.mxu0 %v4138
    %5810 = vmatprep.subr.bf16.mxu0 %v4141
    %5811 = vmatpush1.bf16.msra.mxu0 %v4140
    %5812 = vmatprep.subr.bf16.mxu0 %v4143
    %5813 = vmatpush1.bf16.msra.mxu0 %v4142
    %5814 = vmatprep.subr.bf16.mxu0 %v4145
    %5815 = vmatpush1.bf16.msra.mxu0 %v4144
    %5816 = vmatprep.mubr.bf16.mxu0 %v5753
    %5817 = vmatmul.mubr.bf16.gmra.mrb[0].mxu0 %v5752
    %v5818 = vpop.f32.mrb[0].mxu0
    %v5819 = vadd.f32 %v5627, %v5818
    %v5820 = vpop.f32.mrb[0].mxu0
    %v5821 = vadd.f32 %v5627, %v5820
    %v5822 = vpop.f32.mrb[0].mxu0
    %v5823 = vadd.f32 %v5632, %v5822
    %v5824 = vpop.f32.mrb[0].mxu0
    %v5825 = vadd.f32 %v5632, %v5824
    %5826 = vmatprep.mubr.bf16.mxu0 %v5755
    %5827 = vmatmul.mubr.bf16.gmra.mrb[0].mxu0 %v5754
    %v5828 = vpop.f32.mrb[0].mxu0
    %v5829 = vadd.f32 %v5637, %v5828
    %v5830 = vpop.f32.mrb[0].mxu0
    %v5831 = vadd.f32 %v5637, %v5830
    %v5832 = vpop.f32.mrb[0].mxu0
    %v5833 = vadd.f32 %v5642, %v5832
    %v5834 = vpop.f32.mrb[0].mxu0
    %v5835 = vadd.f32 %v5642, %v5834
    %5836 = vmatprep.mubr.bf16.mxu0 %v5757
    %5837 = vmatmul.mubr.bf16.gmra.mrb[0].mxu0 %v5756
    %v5838 = vpop.f32.mrb[0].mxu0
    %v5839 = vadd.f32 %v5647, %v5838
    %v5840 = vpop.f32.mrb[0].mxu0
    %v5841 = vadd.f32 %v5647, %v5840
    %v5842 = vpop.f32.mrb[0].mxu0
    %v5843 = vadd.f32 %v5652, %v5842
    %v5844 = vpop.f32.mrb[0].mxu0
    %v5845 = vadd.f32 %v5652, %v5844
    %5846 = vmatprep.mubr.bf16.mxu0 %v5759
    %5847 = vmatmul.mubr.bf16.gmra.mrb[0].mxu0 %v5758
    %v5848 = vpop.f32.mrb[0].mxu0
    %v5849 = vadd.f32 %v5657, %v5848
    %v5850 = vpop.f32.mrb[0].mxu0
    %v5851 = vadd.f32 %v5657, %v5850
    %v5852 = vpop.f32.mrb[0].mxu0
    %v5853 = vadd.f32 %v5662, %v5852
    %v5854 = vpop.f32.mrb[0].mxu0
    %v5855 = vadd.f32 %v5662, %v5854
    %5856 = vmatprep.mubr.bf16.mxu0 %v5761
    %5857 = vmatmul.mubr.bf16.gmra.mrb[0].mxu0 %v5760
    %v5858 = vpop.f32.mrb[0].mxu0
    %v5859 = vadd.f32 %v5667, %v5858
    %v5860 = vpop.f32.mrb[0].mxu0
    %v5861 = vadd.f32 %v5667, %v5860
    %v5862 = vpop.f32.mrb[0].mxu0
    %v5863 = vadd.f32 %v5672, %v5862
    %v5864 = vpop.f32.mrb[0].mxu0
    %v5865 = vadd.f32 %v5672, %v5864
    %5866 = vmatprep.mubr.bf16.mxu0 %v5763
    %5867 = vmatmul.mubr.bf16.gmra.mrb[0].mxu0 %v5762
    %v5868 = vpop.f32.mrb[0].mxu0
    %v5869 = vadd.f32 %v5677, %v5868
    %v5870 = vpop.f32.mrb[0].mxu0
    %v5871 = vadd.f32 %v5677, %v5870
    %v5872 = vpop.f32.mrb[0].mxu0
    %v5873 = vadd.f32 %v5682, %v5872
    %v5874 = vpop.f32.mrb[0].mxu0
    %v5875 = vadd.f32 %v5682, %v5874
    %5876 = vmatprep.mubr.bf16.mxu0 %v5765
    %5877 = vmatmul.mubr.bf16.gmra.mrb[0].mxu0 %v5764
    %v5878 = vpop.f32.mrb[0].mxu0
    %v5879 = vadd.f32 %v5687, %v5878
    %v5880 = vpop.f32.mrb[0].mxu0
    %v5881 = vadd.f32 %v5687, %v5880
    %v5882 = vpop.f32.mrb[0].mxu0
    %v5883 = vadd.f32 %v5692, %v5882
    %v5884 = vpop.f32.mrb[0].mxu0
    %v5885 = vadd.f32 %v5692, %v5884
    %5886 = vmatprep.mubr.bf16.mxu0 %v5767
    %5887 = vmatmul.mubr.bf16.gmra.mrb[0].mxu0 %v5766
    %v5888 = vpop.f32.mrb[0].mxu0
    %v5889 = vadd.f32 %v5697, %v5888
    %v5890 = vpop.f32.mrb[0].mxu0
    %v5891 = vadd.f32 %v5697, %v5890
    %v5892 = vpop.f32.mrb[0].mxu0
    %v5893 = vadd.f32 %v5702, %v5892
    %v5894 = vpop.f32.mrb[0].mxu0
    %v5895 = vadd.f32 %v5702, %v5894
    %5896 = vdwg.mxu0
    %v5897 = vmax.f32 %v5819, 0.0
    %v5898 = vmax.f32 %v5821, 0.0
    %v5899 = vmax.f32 %v5823, 0.0
    %v5900 = vmax.f32 %v5825, 0.0
    %v5901 = vmax.f32 %v5829, 0.0
    %v5902 = vmax.f32 %v5831, 0.0
    %v5903 = vmax.f32 %v5833, 0.0
    %v5904 = vmax.f32 %v5835, 0.0
    %v5905 = vmax.f32 %v5839, 0.0
    %v5906 = vmax.f32 %v5841, 0.0
    %v5907 = vmax.f32 %v5843, 0.0
    %v5908 = vmax.f32 %v5845, 0.0
    %v5909 = vmax.f32 %v5849, 0.0
    %v5910 = vmax.f32 %v5851, 0.0
    %v5911 = vmax.f32 %v5853, 0.0
    %v5912 = vmax.f32 %v5855, 0.0
    %v5913 = vmax.f32 %v5859, 0.0
    %v5914 = vmax.f32 %v5861, 0.0
    %v5915 = vmax.f32 %v5863, 0.0
    %v5916 = vmax.f32 %v5865, 0.0
    %v5917 = vmax.f32 %v5869, 0.0
    %v5918 = vmax.f32 %v5871, 0.0
    %v5919 = vmax.f32 %v5873, 0.0
    %v5920 = vmax.f32 %v5875, 0.0
    %v5921 = vmax.f32 %v5879, 0.0
    %v5922 = vmax.f32 %v5881, 0.0
    %v5923 = vmax.f32 %v5883, 0.0
    %v5924 = vmax.f32 %v5885, 0.0
    %v5925 = vmax.f32 %v5889, 0.0
    %v5926 = vmax.f32 %v5891, 0.0
    %v5927 = vmax.f32 %v5893, 0.0
    %v5928 = vmax.f32 %v5895, 0.0
    %v5929 = vpack.c.bf16 %v5899, %v5897
    %v5930 = vpack.c.bf16 %v5900, %v5898
    %v5931 = vpack.c.bf16 %v5903, %v5901
    %v5932 = vpack.c.bf16 %v5904, %v5902
    %v5933 = vpack.c.bf16 %v5907, %v5905
    %v5934 = vpack.c.bf16 %v5908, %v5906
    %v5935 = vpack.c.bf16 %v5911, %v5909
    %v5936 = vpack.c.bf16 %v5912, %v5910
    %v5937 = vpack.c.bf16 %v5915, %v5913
    %v5938 = vpack.c.bf16 %v5916, %v5914
    %v5939 = vpack.c.bf16 %v5919, %v5917
    %v5940 = vpack.c.bf16 %v5920, %v5918
    %v5941 = vpack.c.bf16 %v5923, %v5921
    %v5942 = vpack.c.bf16 %v5924, %v5922
    %v5943 = vpack.c.bf16 %v5927, %v5925
    %v5944 = vpack.c.bf16 %v5928, %v5926
    %s5945 = scalar_lea.vmem %s5, 96
    %v5946 = vld [vmem:[%s5945] sm:$0xf]
    %v5947 = vld [vmem:[%s5945 + $0x4] sm:$0xf]
    %v5948 = vld [vmem:[%s5945 + $0x8] sm:$0xf]
    %v5949 = vld [vmem:[%s5945 + $0xc] sm:$0xf]
    %v5950 = vld [vmem:[%s5945 + $0x10] sm:$0xf]
    %v5951 = vld [vmem:[%s5945 + $0x14] sm:$0xf]
    %v5952 = vld [vmem:[%s5945 + $0x18] sm:$0xf]
    %v5953 = vld [vmem:[%s5945 + $0x1c] sm:$0xf]
    %v5962 = vunpack.c.l.b16 %v5946
    %v5963 = vunpack.c.l.b16 %v5947
    %v5964 = vunpack.c.l.b16 %v5948
    %v5965 = vunpack.c.l.b16 %v5949
    %v5966 = vunpack.c.l.b16 %v5950
    %v5967 = vunpack.c.l.b16 %v5951
    %v5968 = vunpack.c.l.b16 %v5952
    %v5969 = vunpack.c.l.b16 %v5953
    %v5970 = vpack.c.b16 %v5963, %v5962
    %v5971 = vpack.c.b16 %v5965, %v5964
    %v5972 = vpack.c.b16 %v5967, %v5966
    %v5973 = vpack.c.b16 %v5969, %v5968
    %5978 = vmatprep.subr.bf16.mxu0 %v5930
    %5979 = vmatpush1.bf16.msra.mxu0 %v5929
    %5980 = vmatprep.subr.bf16.mxu0 %v5932
    %5981 = vmatpush1.bf16.msra.mxu0 %v5931
    %5982 = vmatprep.subr.bf16.mxu0 %v5934
    %5983 = vmatpush1.bf16.msra.mxu0 %v5933
    %5984 = vmatprep.subr.bf16.mxu0 %v5936
    %5985 = vmatpush1.bf16.msra.mxu0 %v5935
    %5986 = vmatprep.subr.bf16.mxu0 %v5938
    %5987 = vmatpush1.bf16.msra.mxu0 %v5937
    %5988 = vmatprep.subr.bf16.mxu0 %v5940
    %5989 = vmatpush1.bf16.msra.mxu0 %v5939
    %5990 = vmatprep.subr.bf16.mxu0 %v5942
    %5991 = vmatpush1.bf16.msra.mxu0 %v5941
    %5992 = vmatprep.subr.bf16.mxu0 %v5944
    %5993 = vmatpush1.bf16.msra.mxu0 %v5943
    %5994 = vmatprep.subr.bf16.mxu0 0
    %5995 = vmatpush1.bf16.msra.mxu0 0
    %5996 = vmatprep.subr.bf16.mxu0 0
    %5997 = vmatpush1.bf16.msra.mxu0 0
    %5998 = vmatprep.subr.bf16.mxu0 0
    %5999 = vmatpush1.bf16.msra.mxu0 0
    %6000 = vmatprep.subr.bf16.mxu0 0
    %6001 = vmatpush1.bf16.msra.mxu0 0
    %6002 = vmatprep.subr.bf16.mxu0 0
    %6003 = vmatpush1.bf16.msra.mxu0 0
    %6004 = vmatprep.subr.bf16.mxu0 0
    %6005 = vmatpush1.bf16.msra.mxu0 0
    %6006 = vmatprep.subr.bf16.mxu0 0
    %6007 = vmatpush1.bf16.msra.mxu0 0
    %6008 = vmatprep.subr.bf16.mxu0 0
    %6009 = vmatpush1.bf16.msra.mxu0 0
    %6010 = vmatprep.mubr.bf16.mxu0 0
    %6011 = vmatmul.mubr.bf16.gmra.mrb[0].mxu0 %v5970
    %v6012 = vpop.f32.mrb[0].mxu0
    %v6013 = vadd.f32 0.0, %v6012
    %v6014 = vpop.f32.mrb[0].mxu0
    %v6015 = vadd.f32 0.0, %v6014
    %v6016 = vpop.f32.mrb[0].mxu0
    %v6017 = vadd.f32 0.0, %v6016
    %v6018 = vpop.f32.mrb[0].mxu0
    %v6019 = vadd.f32 0.0, %v6018
    %6020 = vmatprep.mubr.bf16.mxu0 0
    %6021 = vmatmul.mubr.bf16.gmra.mrb[0].mxu0 %v5971
    %v6022 = vpop.f32.mrb[0].mxu0
    %v6023 = vadd.f32 0.0, %v6022
    %v6024 = vpop.f32.mrb[0].mxu0
    %v6025 = vadd.f32 0.0, %v6024
    %v6026 = vpop.f32.mrb[0].mxu0
    %v6027 = vadd.f32 0.0, %v6026
    %v6028 = vpop.f32.mrb[0].mxu0
    %v6029 = vadd.f32 0.0, %v6028
    %6030 = vmatprep.mubr.bf16.mxu0 0
    %6031 = vmatmul.mubr.bf16.gmra.mrb[0].mxu0 %v5972
    %v6032 = vpop.f32.mrb[0].mxu0
    %v6033 = vadd.f32 0.0, %v6032
    %v6034 = vpop.f32.mrb[0].mxu0
    %v6035 = vadd.f32 0.0, %v6034
    %v6036 = vpop.f32.mrb[0].mxu0
    %v6037 = vadd.f32 0.0, %v6036
    %v6038 = vpop.f32.mrb[0].mxu0
    %v6039 = vadd.f32 0.0, %v6038
    %6040 = vmatprep.mubr.bf16.mxu0 0
    %6041 = vmatmul.mubr.bf16.gmra.mrb[0].mxu0 %v5973
    %v6042 = vpop.f32.mrb[0].mxu0
    %v6043 = vadd.f32 0.0, %v6042
    %v6044 = vpop.f32.mrb[0].mxu0
    %v6045 = vadd.f32 0.0, %v6044
    %v6046 = vpop.f32.mrb[0].mxu0
    %v6047 = vadd.f32 0.0, %v6046
    %v6048 = vpop.f32.mrb[0].mxu0
    %v6049 = vadd.f32 0.0, %v6048
    %6050 = vdwg.mxu0
    %v6051 = vadd.f32 %v5574, %v6013
    %v6052 = vadd.f32 %v5575, %v6015
    %v6053 = vadd.f32 %v5576, %v6017
    %v6054 = vadd.f32 %v5577, %v6019
    %v6055 = vadd.f32 %v5578, %v6023
    %v6056 = vadd.f32 %v5579, %v6025
    %v6057 = vadd.f32 %v5580, %v6027
    %v6058 = vadd.f32 %v5581, %v6029
    %v6059 = vadd.f32 %v5582, %v6033
    %v6060 = vadd.f32 %v5583, %v6035
    %v6061 = vadd.f32 %v5584, %v6037
    %v6062 = vadd.f32 %v5585, %v6039
    %v6063 = vadd.f32 %v5586, %v6043
    %v6064 = vadd.f32 %v5587, %v6045
    %v6065 = vadd.f32 %v5588, %v6047
    %v6066 = vadd.f32 %v5589, %v6049
    %v6067 = vmax.f32 %v6051, 0.0
    %v6068 = vmax.f32 %v6052, 0.0
    %v6069 = vmax.f32 %v6053, 0.0
    %v6070 = vmax.f32 %v6054, 0.0
    %v6071 = vmax.f32 %v6055, 0.0
    %v6072 = vmax.f32 %v6056, 0.0
    %v6073 = vmax.f32 %v6057, 0.0
    %v6074 = vmax.f32 %v6058, 0.0
    %v6075 = vmax.f32 %v6059, 0.0
    %v6076 = vmax.f32 %v6060, 0.0
    %v6077 = vmax.f32 %v6061, 0.0
    %v6078 = vmax.f32 %v6062, 0.0
    %v6079 = vmax.f32 %v6063, 0.0
    %v6080 = vmax.f32 %v6064, 0.0
    %v6081 = vmax.f32 %v6065, 0.0
    %v6082 = vmax.f32 %v6066, 0.0
    %v6083 = vpack.c.bf16 %v6069, %v6067
    %v6084 = vpack.c.bf16 %v6070, %v6068
    %v6085 = vpack.c.bf16 %v6073, %v6071
    %v6086 = vpack.c.bf16 %v6074, %v6072
    %v6087 = vpack.c.bf16 %v6077, %v6075
    %v6088 = vpack.c.bf16 %v6078, %v6076
    %v6089 = vpack.c.bf16 %v6081, %v6079
    %v6090 = vpack.c.bf16 %v6082, %v6080
    %v6091 = vld [vmem:[%s7] sm:$0xf]
    %v6092 = vld [vmem:[%s8] sm:$0xff]
    %6094 = vset.pattern.permute.xlu0 0
    %6095 = vperm.xlu0 %6094, %v6092
    %v6096 = vpop.permute.xlu0 %6095
    %vm6098 = vcmask 523264
    %v6100 = vsel %vm6098, %v6091, 0
    %6102 = vmatprep.subr.bf16.mxu0 %v6084
    %6103 = vmatpush1.bf16.msra.mxu0 %v6083
    %6104 = vmatprep.subr.bf16.mxu0 %v6086
    %6105 = vmatpush1.bf16.msra.mxu0 %v6085
    %6106 = vmatprep.subr.bf16.mxu0 %v6088
    %6107 = vmatpush1.bf16.msra.mxu0 %v6087
    %6108 = vmatprep.subr.bf16.mxu0 %v6090
    %6109 = vmatpush1.bf16.msra.mxu0 %v6089
    %6110 = vmatprep.subr.bf16.mxu0 0
    %6111 = vmatpush1.bf16.msra.mxu0 0
    %6112 = vmatprep.subr.bf16.mxu0 0
    %6113 = vmatpush1.bf16.msra.mxu0 0
    %6114 = vmatprep.subr.bf16.mxu0 0
    %6115 = vmatpush1.bf16.msra.mxu0 0
    %6116 = vmatprep.subr.bf16.mxu0 0
    %6117 = vmatpush1.bf16.msra.mxu0 0
    %6118 = vmatprep.subr.bf16.mxu0 0
    %6119 = vmatpush1.bf16.msra.mxu0 0
    %6120 = vmatprep.subr.bf16.mxu0 0
    %6121 = vmatpush1.bf16.msra.mxu0 0
    %6122 = vmatprep.subr.bf16.mxu0 0
    %6123 = vmatpush1.bf16.msra.mxu0 0
    %6124 = vmatprep.subr.bf16.mxu0 0
    %6125 = vmatpush1.bf16.msra.mxu0 0
    %6126 = vmatprep.subr.bf16.mxu0 0
    %6127 = vmatpush1.bf16.msra.mxu0 0
    %6128 = vmatprep.subr.bf16.mxu0 0
    %6129 = vmatpush1.bf16.msra.mxu0 0
    %6130 = vmatprep.subr.bf16.mxu0 0
    %6131 = vmatpush1.bf16.msra.mxu0 0
    %6132 = vmatprep.subr.bf16.mxu0 0
    %6133 = vmatpush1.bf16.msra.mxu0 0
    %6134 = vmatprep.mubr.bf16.mxu0 0
    %6135 = vmatmul.mubr.bf16.gmra.mrb[0].mxu0 %v6100
    %v6136 = vpop.f32.mrb[0].mxu0
    %v6137 = vadd.f32 %v6096, %v6136
    %v6138 = vpop.f32.mrb[0].mxu0
    %v6139 = vadd.f32 %v6096, %v6138
    %v6140 = vpop.f32.mrb[0].mxu0
    %v6141 = vpop.f32.mrb[0].mxu0
    %6142 = vdwg.mxu0
    %v6143 = vmax.f32 %v6137, 0.0
    %v6144 = vmax.f32 %v6139, 0.0
    %6145 = vst [vmem:[#allocation2] sm:$0xff] %v6143
    %6146 = vst [vmem:[#allocation2 + $0x8] sm:$0xff] %v6144
    // Predicated region
    $region38: #{tpu_custom_call.1} parent=1 // pred_check
      _
    $region39: #{tpu_custom_call.1} parent=1 // pred_check_branch
      %6148 = sbr.rel (0) target = $region41
    $region40: #{tpu_custom_call.1} parent=1 // pred_region
      %s6150 = ssub.s32 256, 256
      %6151 = vsyncadd [#allocation3], %s6150
      %s6153 = sshll.u32 [#allocation2], 4
      %s6154 = int_to_ptr.vmem [resolvable:$true] %s6153
      %6156 = dma.vmem_to_hbm [thread:$0]  %s6154, 256, %s9, [#allocation3]
    $region41: #{tpu_custom_call.1} parent=1 // pred_fallthru
      _
    // Predicated region
    $region42: #{tpu_custom_call.1} parent=1 // pred_check
      _
    $region43: #{tpu_custom_call.1} parent=1 // pred_check_branch
      %6158 = sbr.rel (0) target = $region45
    $region44: #{tpu_custom_call.1} parent=1 // pred_region
      %6159 = dma.done [#allocation3], 256
    $region45: #{tpu_custom_call.1} parent=1 // pred_fallthru
      _
    %6160 = vsyncpa [#allocation3], 1

</llo_original>
